<compile_context>
chip_gen: v6e
topology: v6e:2x2x1
jax: 0.10.0
libtpu: 0.0.40
codegen_flags: <defaults>
</compile_context>

<pallas_src>
import functools

import jax
import jax.numpy as jnp
from jax.experimental import pallas as pl
from jax.experimental.pallas import tpu as pltpu


_LANE = 128


def _round_up(x, m):
    return ((x + m - 1) // m) * m


def _default_bf16_elementwise():
    """bf16 elementwise is a win on v6e/v7x (bf16 VALUs); keep f32 on v5e."""
    try:
        kind = jax.devices()[0].device_kind.lower()
    except Exception:  # pragma: no cover - defensive
        return False
    return ("v6" in kind) or ("v7" in kind)


def _actor_kernel(max_action, bf16_elementwise,
                  state_ref, w1_ref, w2_ref, w3_ref, b_ref,
                  out_ref):
    hidden = w1_ref.shape[1]
    out_pad = out_ref.shape[-1]
    ew_dtype = jnp.bfloat16 if bf16_elementwise else jnp.float32

    # Biases packed as rows of one f32 array: [b1; b2; b3(padded)].
    b1 = b_ref[0:1, :hidden].astype(ew_dtype)
    b2 = b_ref[1:2, :hidden].astype(ew_dtype)
    b3 = b_ref[2:3, :out_pad]                      # final layer stays f32

    # Layer 1: Linear + ReLU (bf16 MXU inputs, f32 accumulate).
    x = state_ref[...].astype(jnp.bfloat16)
    h1 = jnp.dot(x, w1_ref[...], preferred_element_type=jnp.float32)
    h1 = jnp.maximum(h1.astype(ew_dtype) + b1, 0.0)

    # Layer 2: Linear + ReLU.
    h2 = jnp.dot(h1.astype(jnp.bfloat16), w2_ref[...],
                 preferred_element_type=jnp.float32)
    h2 = jnp.maximum(h2.astype(ew_dtype) + b2, 0.0)

    # Layer 3: Linear + tanh scaled by max_action (128-lane padded output, f32).
    y = jnp.dot(h2.astype(jnp.bfloat16), w3_ref[...],
                preferred_element_type=jnp.float32)
    y = jnp.tanh(y + b3)

    out_ref[...] = (max_action * y).astype(out_ref.dtype)


def prepare_actor_params(params):
    """Pre-pack torch-style params for the kernel.

    Input params hold weights already transposed to (in, out):
      w1 (state_dim, 512), b1 (512,), w2 (512, 512), b2 (512,),
      w3 (512, action_dim), b3 (action_dim,)

    Returns bf16 weights with:
      * w1 zero-padded along the input axis to a 128-multiple (lane-dense K),
      * w3/b3 zero-padded to a lane-dense 128-multiple output width,
      * all three biases packed into a single f32 (3, max(512, out_pad)) array.
    """
    state_dim, hidden = params["w1"].shape
    action_dim = params["w3"].shape[1]
    k_pad = _round_up(max(state_dim, _LANE), _LANE)
    out_pad = _round_up(max(action_dim, _LANE), _LANE)
    bias_w = max(hidden, out_pad)

    w1 = jnp.zeros((k_pad, hidden), jnp.bfloat16)
    w1 = w1.at[:state_dim, :].set(params["w1"].astype(jnp.bfloat16))
    w2 = params["w2"].astype(jnp.bfloat16)
    w3 = jnp.zeros((hidden, out_pad), jnp.bfloat16)
    w3 = w3.at[:, :action_dim].set(params["w3"].astype(jnp.bfloat16))

    b = jnp.zeros((3, bias_w), jnp.float32)
    b = b.at[0, :hidden].set(params["b1"].astype(jnp.float32))
    b = b.at[1, :hidden].set(params["b2"].astype(jnp.float32))
    b = b.at[2, :action_dim].set(params["b3"].astype(jnp.float32))

    return {"w1": w1, "w2": w2, "w3": w3, "b": b,
            "state_dim": state_dim, "action_dim": action_dim}


def _choose_batch_tile(B, block_b):
    """Pick a batch tile (multiple of 8, <=1024) and the padded batch size.

    Prefers >=2 balanced grid steps once the batch exceeds 256 rows so the
    "parallel" batch axis can shard across v7x's two TensorCores.
    """
    b8 = _round_up(B, 8)
    n_steps = max(1, pl.cdiv(b8, max(block_b, 8)))
    if b8 > 256 and n_steps == 1:
        n_steps = 2
    tb = _round_up(pl.cdiv(b8, n_steps), 8)
    tb = max(8, min(tb, 1024))
    Bp = _round_up(B, tb)
    return tb, Bp


def actor_forward(state, prepped, max_action, block_b=512, bf16_elementwise=None):
    """Pallas-backed Actor.forward.

    state   : (B, state_dim) float32
    prepped : output of prepare_actor_params
    """
    if bf16_elementwise is None:
        bf16_elementwise = _default_bf16_elementwise()

    B, state_dim = state.shape
    assert state_dim == prepped["state_dim"]
    k_pad, hidden = prepped["w1"].shape
    out_pad = prepped["w3"].shape[1]
    bias_w = prepped["b"].shape[1]
    action_dim = prepped["action_dim"]

    tb, Bp = _choose_batch_tile(B, block_b)
    # Pad batch rows to a tile multiple and state columns to the lane-dense K.
    if Bp != B or k_pad != state_dim:
        state = jnp.pad(state, ((0, Bp - B), (0, k_pad - state_dim)))

    grid = (Bp // tb,)

    # VMEM budget (bytes): double-buffered state/output tiles, double-buffered
    # bf16 weights + f32 biases, plus headroom for f32/bf16 intermediates.
    vmem_est = (2 * tb * (k_pad + out_pad) * 4
                + 2 * 2 * (k_pad * hidden + hidden * hidden + hidden * out_pad)
                + 2 * 3 * bias_w * 4
                + 6 * tb * hidden * 4)
    vmem_limit = int(min(max(vmem_est * 5 // 4, 16 * 1024 * 1024),
                         32 * 1024 * 1024))

    weight_bytes = 2 * (k_pad * hidden + hidden * hidden + hidden * out_pad)
    cost = pl.CostEstimate(
        flops=2 * Bp * (k_pad * hidden + hidden * hidden + hidden * out_pad),
        transcendentals=Bp * out_pad,
        bytes_accessed=(Bp * k_pad * 4 + weight_bytes + 3 * bias_w * 4
                        + Bp * out_pad * 4),
    )

    kernel = functools.partial(_actor_kernel, float(max_action),
                               bool(bf16_elementwise))
    out = pl.pallas_call(
        kernel,
        out_shape=jax.ShapeDtypeStruct((Bp, out_pad), jnp.float32),
        grid=grid,
        in_specs=[
            # State: tiled over the batch axis, pipelined/double-buffered.
            pl.BlockSpec((tb, k_pad), lambda i: (i, 0)),
            # Weights / packed biases: constant index_map -> VMEM-resident,
            # DMA'd once per call and reused across all grid steps.
            pl.BlockSpec((k_pad, hidden), lambda i: (0, 0)),
            pl.BlockSpec((hidden, hidden), lambda i: (0, 0)),
            pl.BlockSpec((hidden, out_pad), lambda i: (0, 0)),
            pl.BlockSpec((3, bias_w), lambda i: (0, 0)),
        ],
        out_specs=pl.BlockSpec((tb, out_pad), lambda i: (i, 0)),
        compiler_params=pltpu.CompilerParams(
            dimension_semantics=("parallel",),
            vmem_limit_bytes=vmem_limit),
        cost_estimate=cost,
    )(state, prepped["w1"], prepped["w2"], prepped["w3"], prepped["b"])

    return out[:B, :action_dim]


def actor_reference(state, params, max_action, bf16_elementwise=False):
    """Plain-JAX reference using the same bf16-weight / f32-accumulate recipe."""
    ew = jnp.bfloat16 if bf16_elementwise else jnp.float32

    def dot_bf16(x, w):
        return jnp.dot(x.astype(jnp.bfloat16), w.astype(jnp.bfloat16),
                       preferred_element_type=jnp.float32)

    h1 = jnp.maximum(dot_bf16(state, params["w1"]).astype(ew)
                     + params["b1"].astype(ew), 0.0)
    h2 = jnp.maximum(dot_bf16(h1, params["w2"]).astype(ew)
                     + params["b2"].astype(ew), 0.0)
    y = jnp.tanh(dot_bf16(h2, params["w3"]) + params["b3"].astype(jnp.float32))
    return (max_action * y).astype(jnp.float32)


def init_params(key, state_dim, hidden, action_dim):
    """Deterministic synthetic init (PyTorch-Linear-style uniform fan-in bound).

    Weights are stored transposed relative to torch, i.e. (in, out).
    """
    ks = jax.random.split(key, 6)

    def lin(kw, kb, fan_in, fan_out):
        bound = 1.0 / jnp.sqrt(float(fan_in))
        w = jax.random.uniform(kw, (fan_in, fan_out), jnp.float32, -bound, bound)
        b = jax.random.uniform(kb, (fan_out,), jnp.float32, -bound, bound)
        return w, b

    w1, b1 = lin(ks[0], ks[1], state_dim, hidden)
    w2, b2 = lin(ks[2], ks[3], hidden, hidden)
    w3, b3 = lin(ks[4], ks[5], hidden, action_dim)
    return {"w1": w1, "b1": b1, "w2": w2, "b2": b2, "w3": w3, "b3": b3}


if __name__ == "__main__":
    state_dim = 16
    action_dim = 8
    hidden = 512         # fixed by the module definition (nn.Linear(_, 512))
    max_action = 2.0
    batch = 256

    key = jax.random.PRNGKey(0)
    k_params, k_state, k_big = jax.random.split(key, 3)
    params = init_params(k_params, state_dim, hidden, action_dim)
    state = jax.random.normal(k_state, (batch, state_dim), jnp.float32)

    prepped = prepare_actor_params(params)
    bf16_ew = _default_bf16_elementwise()

    # Single-tile path.
    out = jax.block_until_ready(
        actor_forward(state, prepped, max_action, bf16_elementwise=bf16_ew))
    ref = actor_reference(state, params, max_action, bf16_elementwise=bf16_ew)
    assert out.shape == (batch, action_dim)
    assert jnp.allclose(out, ref, atol=2e-3, rtol=2e-3), "mismatch vs reference"

    # Non-tile-multiple batch to exercise the row-padding path.
    small = state[:9]
    out_small = jax.block_until_ready(
        actor_forward(small, prepped, max_action, bf16_elementwise=bf16_ew))
    assert out_small.shape == (9, action_dim)
    assert jnp.allclose(out_small, ref[:9], atol=2e-3, rtol=2e-3)

    # Multi-step grid path (balanced >=2 tiles; v7x megacore + overhead amortization).
    big = jax.random.normal(k_big, (600, state_dim), jnp.float32)
    out_big = jax.block_until_ready(
        actor_forward(big, prepped, max_action, bf16_elementwise=bf16_ew))
    ref_big = actor_reference(big, params, max_action, bf16_elementwise=bf16_ew)
    assert out_big.shape == (600, action_dim)
    assert jnp.allclose(out_big, ref_big, atol=2e-3, rtol=2e-3)

    print("KERNEL_OK")
</pallas_src>

<mosaic_0001>
module attributes {stable_mosaic.version = 11 : i64} {
  func.func @_actor_kernel(%arg0: i32, %arg1: memref<256x128xf32, #tpu.memory_space<vmem>>, %arg2: memref<128x512xbf16, #tpu.memory_space<vmem>>, %arg3: memref<512x512xbf16, #tpu.memory_space<vmem>>, %arg4: memref<512x128xbf16, #tpu.memory_space<vmem>>, %arg5: memref<3x512xf32, #tpu.memory_space<vmem>>, %arg6: memref<256x128xf32, #tpu.memory_space<vmem>>) attributes {dimension_semantics = [#tpu.dimension_semantics<parallel>], iteration_bounds = array<i64: 1>, scalar_prefetch = 0 : i64, scratch_operands = 0 : i64, tpu.core_type = #tpu.core_type<tc>, window_params = [{transform_indices = @transform_0, window_bounds = array<i64: 256, 128>}, {pipeline_mode = #tpu.pipeline_mode<synchronous>, transform_indices = @transform_1, window_bounds = array<i64: 128, 512>}, {pipeline_mode = #tpu.pipeline_mode<synchronous>, transform_indices = @transform_2, window_bounds = array<i64: 512, 512>}, {pipeline_mode = #tpu.pipeline_mode<synchronous>, transform_indices = @transform_3, window_bounds = array<i64: 512, 128>}, {pipeline_mode = #tpu.pipeline_mode<synchronous>, transform_indices = @transform_4, window_bounds = array<i64: 3, 512>}, {transform_indices = @transform_5, window_bounds = array<i64: 256, 128>}]} {
    %c0 = arith.constant 0 : index
    %c0_0 = arith.constant 0 : index
    %0 = vector.load %arg5[%c0, %c0_0] : memref<3x512xf32, #tpu.memory_space<vmem>>, vector<1x512xf32>
    %c1 = arith.constant 1 : index
    %c0_1 = arith.constant 0 : index
    %1 = vector.load %arg5[%c1, %c0_1] : memref<3x512xf32, #tpu.memory_space<vmem>>, vector<1x512xf32>
    %c2 = arith.constant 2 : index
    %c0_2 = arith.constant 0 : index
    %2 = vector.load %arg5[%c2, %c0_2] : memref<3x512xf32, #tpu.memory_space<vmem>>, vector<1x128xf32>
    %c0_3 = arith.constant 0 : index
    %c0_4 = arith.constant 0 : index
    %3 = vector.load %arg1[%c0_3, %c0_4] : memref<256x128xf32, #tpu.memory_space<vmem>>, vector<256x128xf32>
    %4 = arith.truncf %3 : vector<256x128xf32> to vector<256x128xbf16>
    %c0_5 = arith.constant 0 : index
    %c0_6 = arith.constant 0 : index
    %5 = vector.load %arg2[%c0_5, %c0_6] : memref<128x512xbf16, #tpu.memory_space<vmem>>, vector<128x512xbf16>
    %cst = arith.constant dense<0.000000e+00> : vector<256x512xf32>
    %6 = tpu.matmul %4, %5, %cst {dimension_numbers = #tpu.dot_dimension_numbers<[1], [0], [0], [1], [0, 0, 1, 1], [], []>} : vector<256x128xbf16>, vector<128x512xbf16>, vector<256x512xf32> -> vector<256x512xf32>
    %7 = vector.broadcast %0 : vector<1x512xf32> to vector<256x512xf32>
    %8 = arith.addf %6, %7 : vector<256x512xf32>
    %cst_7 = arith.constant 0.000000e+00 : f32
    %9 = vector.broadcast %cst_7 : f32 to vector<256x512xf32>
    %10 = arith.maximumf %8, %9 : vector<256x512xf32>
    %11 = arith.truncf %10 : vector<256x512xf32> to vector<256x512xbf16>
    %c0_8 = arith.constant 0 : index
    %c0_9 = arith.constant 0 : index
    %12 = vector.load %arg3[%c0_8, %c0_9] : memref<512x512xbf16, #tpu.memory_space<vmem>>, vector<512x512xbf16>
    %cst_10 = arith.constant dense<0.000000e+00> : vector<256x512xf32>
    %13 = tpu.matmul %11, %12, %cst_10 {dimension_numbers = #tpu.dot_dimension_numbers<[1], [0], [0], [1], [0, 0, 1, 1], [], []>} : vector<256x512xbf16>, vector<512x512xbf16>, vector<256x512xf32> -> vector<256x512xf32>
    %14 = vector.broadcast %1 : vector<1x512xf32> to vector<256x512xf32>
    %15 = arith.addf %13, %14 : vector<256x512xf32>
    %cst_11 = arith.constant 0.000000e+00 : f32
    %16 = vector.broadcast %cst_11 : f32 to vector<256x512xf32>
    %17 = arith.maximumf %15, %16 : vector<256x512xf32>
    %18 = arith.truncf %17 : vector<256x512xf32> to vector<256x512xbf16>
    %c0_12 = arith.constant 0 : index
    %c0_13 = arith.constant 0 : index
    %19 = vector.load %arg4[%c0_12, %c0_13] : memref<512x128xbf16, #tpu.memory_space<vmem>>, vector<512x128xbf16>
    %cst_14 = arith.constant dense<0.000000e+00> : vector<256x128xf32>
    %20 = tpu.matmul %18, %19, %cst_14 {dimension_numbers = #tpu.dot_dimension_numbers<[1], [0], [0], [1], [0, 0, 1, 1], [], []>} : vector<256x512xbf16>, vector<512x128xbf16>, vector<256x128xf32> -> vector<256x128xf32>
    %21 = vector.broadcast %2 : vector<1x128xf32> to vector<256x128xf32>
    %22 = arith.addf %20, %21 : vector<256x128xf32>
    %23 = math.tanh %22 : vector<256x128xf32>
    %cst_15 = arith.constant 2.000000e+00 : f32
    %24 = vector.broadcast %cst_15 : f32 to vector<256x128xf32>
    %25 = arith.mulf %24, %23 : vector<256x128xf32>
    %c0_16 = arith.constant 0 : index
    %c0_17 = arith.constant 0 : index
    %26 = vector.load %arg6[%c0_16, %c0_17] : memref<256x128xf32, #tpu.memory_space<vmem>>, vector<256x128xf32>
    tpu.vector_store %arg6[%c0_16, %c0_17], %25 {strides = array<i32>} : memref<256x128xf32, #tpu.memory_space<vmem>>, vector<256x128xf32>,
    return
  }
  func.func @transform_0(%arg0: i32) -> (i32, i32) {
    %c0_i32 = arith.constant 0 : i32
    %c0_i32_0 = arith.constant 0 : i32
    return %arg0, %c0_i32 : i32, i32
  }
  func.func @transform_1(%arg0: i32) -> (i32, i32) {
    %c0_i32 = arith.constant 0 : i32
    %c0_i32_0 = arith.constant 0 : i32
    %c0_i32_1 = arith.constant 0 : i32
    return %c0_i32, %c0_i32_0 : i32, i32
  }
  func.func @transform_2(%arg0: i32) -> (i32, i32) {
    %c0_i32 = arith.constant 0 : i32
    %c0_i32_0 = arith.constant 0 : i32
    %c0_i32_1 = arith.constant 0 : i32
    return %c0_i32, %c0_i32_0 : i32, i32
  }
  func.func @transform_3(%arg0: i32) -> (i32, i32) {
    %c0_i32 = arith.constant 0 : i32
    %c0_i32_0 = arith.constant 0 : i32
    %c0_i32_1 = arith.constant 0 : i32
    return %c0_i32, %c0_i32_0 : i32, i32
  }
  func.func @transform_4(%arg0: i32) -> (i32, i32) {
    %c0_i32 = arith.constant 0 : i32
    %c0_i32_0 = arith.constant 0 : i32
    %c0_i32_1 = arith.constant 0 : i32
    return %c0_i32, %c0_i32_0 : i32, i32
  }
  func.func @transform_5(%arg0: i32) -> (i32, i32) {
    %c0_i32 = arith.constant 0 : i32
    %c0_i32_0 = arith.constant 0 : i32
    return %arg0, %c0_i32 : i32, i32
  }
}

</mosaic_0001>

<llo_original>
// kernel: tpu_custom_call.1
$region0: #{tpu_custom_call.1}
  #allocation0 [shape = 'u32[]', space=smem, size = 0x4, offset = 0x4, fixed_abs, tag = 'smem constant byte address 0x4 - core index']
  #allocation1 [shape = 'u32[144,128]{1,0:T(1,128)}', space=vmem, size = 0x12000, scoped, tag = 'internal scratch']
  %s0 = inlined_call_operand.hbm [shape: f32[256,128], index: 0, kind: input, shape index: {}]
  %s1 = inlined_call_operand.hbm [shape: bf16[128,512], index: 1, kind: input, shape index: {}]
  %s2 = inlined_call_operand.hbm [shape: bf16[512,512], index: 2, kind: input, shape index: {}]
  %s3 = inlined_call_operand.hbm [shape: bf16[512,128], index: 3, kind: input, shape index: {}]
  %s4 = inlined_call_operand.hbm [shape: f32[3,512], index: 4, kind: input, shape index: {}]
  %s5 = inlined_call_operand.hbm [shape: f32[256,128], index: 5, kind: output, shape index: {}]
  %s6 = sld [smem:[#allocation0]]
  $region50: #{tpu_custom_call.1} parent=0
    _
  %s8 = ssub.s32 1, %s6
  %s9 = scalar_select 0, %s8, %s6
  $region1: #{tpu_custom_call.1} parent=0
    #allocation2 [shape = 'u8[131072]{0}', space=vmem, size = 0x20000, scoped, tag = 'input window, operand 0, single buffered']
    #allocation3 [shape = 's32[1]{0}', space=sflag, size = 0x4, scoped, tag = 'scoped memory for tpu_custom_call.1']
    #allocation4 [shape = 's32[1]{0}', space=sflag, size = 0x4, scoped, tag = 'scoped memory for tpu_custom_call.1']
    #allocation5 [shape = 'u8[131072]{0}', space=vmem, size = 0x20000, scoped, tag = 'input window, operand 1, single buffered']
    #allocation6 [shape = 's32[1]{0}', space=sflag, size = 0x4, scoped, tag = 'scoped memory for tpu_custom_call.1']
    #allocation7 [shape = 'u8[524288]{0}', space=vmem, size = 0x80000, scoped, tag = 'input window, operand 2, single buffered']
    #allocation8 [shape = 'u8[131072]{0}', space=vmem, size = 0x20000, scoped, tag = 'input window, operand 3, single buffered']
    #allocation9 [shape = 's32[1]{0}', space=sflag, size = 0x4, scoped, tag = 'scoped memory for tpu_custom_call.1']
    #allocation10 [shape = 'u8[8192]{0}', space=vmem, size = 0x2000, scoped, tag = 'input window, operand 4, single buffered']
    #allocation11 [shape = 'u8[131072]{0}', space=vmem, size = 0x20000, scoped, tag = 'output window, operand 0, single buffered']
    %10 = vsyncpa [#allocation3], 0
    %11 = vsyncpa [#allocation6], 0
    %12 = vsyncpa [#allocation9], 0
    %13 = vsyncpa [#allocation4], 0
    // Predicated region
    $region2: #{tpu_custom_call.1} parent=1 // pred_check
      _
    $region3: #{tpu_custom_call.1} parent=1 // pred_check_branch
      %15 = sbr.rel (0) target = $region5
    $region4: #{tpu_custom_call.1} parent=1 // pred_region
      %s17 = ssub.s32 4096, 4096
      %18 = vsyncadd [#allocation3], %s17
      %s19 = sshll.u32 [#allocation2], 4
      %s20 = int_to_ptr.vmem [resolvable:$true] %s19
      %25 = dma.hbm_to_vmem [thread:$0]  %s0, 4096, %s20, [#allocation3], 128, 128, 8
    $region5: #{tpu_custom_call.1} parent=1 // pred_fallthru
      _
    // Predicated region
    $region6: #{tpu_custom_call.1} parent=1 // pred_check
      _
    $region7: #{tpu_custom_call.1} parent=1 // pred_check_branch
      %27 = sbr.rel (0) target = $region9
    $region8: #{tpu_custom_call.1} parent=1 // pred_region
      %s29 = ssub.s32 4096, 4096
      %30 = vsyncadd [#allocation6], %s29
      %s31 = sshll.u32 [#allocation5], 4
      %s32 = int_to_ptr.vmem [resolvable:$true] %s31
      %37 = dma.hbm_to_vmem [thread:$0]  %s1, 4096, %s32, [#allocation6], 256, 256, 16
    $region9: #{tpu_custom_call.1} parent=1 // pred_fallthru
      _
    // Predicated region
    $region10: #{tpu_custom_call.1} parent=1 // pred_check
      _
    $region11: #{tpu_custom_call.1} parent=1 // pred_check_branch
      %39 = sbr.rel (0) target = $region13
    $region12: #{tpu_custom_call.1} parent=1 // pred_region
      %s41 = ssub.s32 16384, 16384
      %42 = vsyncadd [#allocation6], %s41
      %s43 = sshll.u32 [#allocation7], 4
      %s44 = int_to_ptr.vmem [resolvable:$true] %s43
      %49 = dma.hbm_to_vmem [thread:$0]  %s2, 16384, %s44, [#allocation6], 256, 256, 16
    $region13: #{tpu_custom_call.1} parent=1 // pred_fallthru
      _
    // Predicated region
    $region14: #{tpu_custom_call.1} parent=1 // pred_check
      _
    $region15: #{tpu_custom_call.1} parent=1 // pred_check_branch
      %51 = sbr.rel (0) target = $region17
    $region16: #{tpu_custom_call.1} parent=1 // pred_region
      %s53 = ssub.s32 4096, 4096
      %54 = vsyncadd [#allocation9], %s53
      %s55 = sshll.u32 [#allocation8], 4
      %s56 = int_to_ptr.vmem [resolvable:$true] %s55
      %61 = dma.hbm_to_vmem [thread:$0]  %s3, 4096, %s56, [#allocation9], 64, 64, 4
    $region17: #{tpu_custom_call.1} parent=1 // pred_fallthru
      _
    // Predicated region
    $region18: #{tpu_custom_call.1} parent=1 // pred_check
      _
    $region19: #{tpu_custom_call.1} parent=1 // pred_check_branch
      %63 = sbr.rel (0) target = $region21
    $region20: #{tpu_custom_call.1} parent=1 // pred_region
      %s65 = ssub.s32 256, 256
      %66 = vsyncadd [#allocation9], %s65
      %s68 = sshll.u32 [#allocation10], 4
      %s69 = int_to_ptr.vmem [resolvable:$true] %s68
      %71 = dma.hbm_to_vmem [thread:$0]  %s4, 256, %s69, [#allocation9]
    $region21: #{tpu_custom_call.1} parent=1 // pred_fallthru
      _
    // Predicated region
    $region22: #{tpu_custom_call.1} parent=1 // pred_check
      _
    $region23: #{tpu_custom_call.1} parent=1 // pred_check_branch
      %73 = sbr.rel (0) target = $region25
    $region24: #{tpu_custom_call.1} parent=1 // pred_region
      %74 = dma.done [#allocation3], 4096
    $region25: #{tpu_custom_call.1} parent=1 // pred_fallthru
      _
    // Predicated region
    $region26: #{tpu_custom_call.1} parent=1 // pred_check
      _
    $region27: #{tpu_custom_call.1} parent=1 // pred_check_branch
      %76 = sbr.rel (0) target = $region29
    $region28: #{tpu_custom_call.1} parent=1 // pred_region
      %77 = dma.done [#allocation6], 4096
    $region29: #{tpu_custom_call.1} parent=1 // pred_fallthru
      _
    // Predicated region
    $region30: #{tpu_custom_call.1} parent=1 // pred_check
      _
    $region31: #{tpu_custom_call.1} parent=1 // pred_check_branch
      %79 = sbr.rel (0) target = $region33
    $region32: #{tpu_custom_call.1} parent=1 // pred_region
      %80 = dma.done [#allocation6], 16384
    $region33: #{tpu_custom_call.1} parent=1 // pred_fallthru
      _
    // Predicated region
    $region34: #{tpu_custom_call.1} parent=1 // pred_check
      _
    $region35: #{tpu_custom_call.1} parent=1 // pred_check_branch
      %82 = sbr.rel (0) target = $region37
    $region36: #{tpu_custom_call.1} parent=1 // pred_region
      %83 = dma.done [#allocation9], 4096
    $region37: #{tpu_custom_call.1} parent=1 // pred_fallthru
      _
    // Predicated region
    $region38: #{tpu_custom_call.1} parent=1 // pred_check
      _
    $region39: #{tpu_custom_call.1} parent=1 // pred_check_branch
      %85 = sbr.rel (0) target = $region41
    $region40: #{tpu_custom_call.1} parent=1 // pred_region
      %86 = dma.done [#allocation9], 256
    $region41: #{tpu_custom_call.1} parent=1 // pred_fallthru
      _
    %v88 = vld [vmem:[#allocation10] ss:$4 sm:$0xf]
    %s89 = scalar_lea.vmem [#allocation10], 1
    %v90 = vld [vmem:[%s89] ss:$4 sm:$0xf]
    %v91 = vld [vmem:[#allocation10 + $0x2] sm:$0x1]
    %v92 = vld [vmem:[#allocation2] sm:$0xff]
    %v93 = vld [vmem:[#allocation2 + $0x8] sm:$0xff]
    %v94 = vld [vmem:[#allocation2 + $0x10] sm:$0xff]
    %v95 = vld [vmem:[#allocation2 + $0x18] sm:$0xff]
    %v96 = vld [vmem:[#allocation2 + $0x20] sm:$0xff]
    %v97 = vld [vmem:[#allocation2 + $0x28] sm:$0xff]
    %v98 = vld [vmem:[#allocation2 + $0x30] sm:$0xff]
    %v99 = vld [vmem:[#allocation2 + $0x38] sm:$0xff]
    %v100 = vld [vmem:[#allocation2 + $0x40] sm:$0xff]
    %v101 = vld [vmem:[#allocation2 + $0x48] sm:$0xff]
    %v102 = vld [vmem:[#allocation2 + $0x50] sm:$0xff]
    %v103 = vld [vmem:[#allocation2 + $0x58] sm:$0xff]
    %v104 = vld [vmem:[#allocation2 + $0x60] sm:$0xff]
    %v105 = vld [vmem:[#allocation2 + $0x68] sm:$0xff]
    %v106 = vld [vmem:[#allocation2 + $0x70] sm:$0xff]
    %v107 = vld [vmem:[#allocation2 + $0x78] sm:$0xff]
    %v108 = vld [vmem:[#allocation2 + $0x80] sm:$0xff]
    %v109 = vld [vmem:[#allocation2 + $0x88] sm:$0xff]
    %v110 = vld [vmem:[#allocation2 + $0x90] sm:$0xff]
    %v111 = vld [vmem:[#allocation2 + $0x98] sm:$0xff]
    %v112 = vld [vmem:[#allocation2 + $0xa0] sm:$0xff]
    %v113 = vld [vmem:[#allocation2 + $0xa8] sm:$0xff]
    %v114 = vld [vmem:[#allocation2 + $0xb0] sm:$0xff]
    %v115 = vld [vmem:[#allocation2 + $0xb8] sm:$0xff]
    %v116 = vld [vmem:[#allocation2 + $0xc0] sm:$0xff]
    %v117 = vld [vmem:[#allocation2 + $0xc8] sm:$0xff]
    %v118 = vld [vmem:[#allocation2 + $0xd0] sm:$0xff]
    %v119 = vld [vmem:[#allocation2 + $0xd8] sm:$0xff]
    %v120 = vld [vmem:[#allocation2 + $0xe0] sm:$0xff]
    %v121 = vld [vmem:[#allocation2 + $0xe8] sm:$0xff]
    %v122 = vld [vmem:[#allocation2 + $0xf0] sm:$0xff]
    %v123 = vld [vmem:[#allocation2 + $0xf8] sm:$0xff]
    %v124 = vpack.c.bf16 %v93, %v92
    %v125 = vpack.c.bf16 %v95, %v94
    %v126 = vpack.c.bf16 %v97, %v96
    %v127 = vpack.c.bf16 %v99, %v98
    %v128 = vpack.c.bf16 %v101, %v100
    %v129 = vpack.c.bf16 %v103, %v102
    %v130 = vpack.c.bf16 %v105, %v104
    %v131 = vpack.c.bf16 %v107, %v106
    %v132 = vpack.c.bf16 %v109, %v108
    %v133 = vpack.c.bf16 %v111, %v110
    %v134 = vpack.c.bf16 %v113, %v112
    %v135 = vpack.c.bf16 %v115, %v114
    %v136 = vpack.c.bf16 %v117, %v116
    %v137 = vpack.c.bf16 %v119, %v118
    %v138 = vpack.c.bf16 %v121, %v120
    %v139 = vpack.c.bf16 %v123, %v122
    %v140 = vld [vmem:[#allocation5] sm:$0xff]
    %v141 = vld [vmem:[#allocation5 + $0x8] sm:$0xff]
    %v142 = vld [vmem:[#allocation5 + $0x10] sm:$0xff]
    %v143 = vld [vmem:[#allocation5 + $0x18] sm:$0xff]
    %v144 = vld [vmem:[#allocation5 + $0x20] sm:$0xff]
    %v145 = vld [vmem:[#allocation5 + $0x28] sm:$0xff]
    %v146 = vld [vmem:[#allocation5 + $0x30] sm:$0xff]
    %v147 = vld [vmem:[#allocation5 + $0x38] sm:$0xff]
    %v148 = vld [vmem:[#allocation5 + $0x40] sm:$0xff]
    %v149 = vld [vmem:[#allocation5 + $0x48] sm:$0xff]
    %v150 = vld [vmem:[#allocation5 + $0x50] sm:$0xff]
    %v151 = vld [vmem:[#allocation5 + $0x58] sm:$0xff]
    %v152 = vld [vmem:[#allocation5 + $0x60] sm:$0xff]
    %v153 = vld [vmem:[#allocation5 + $0x68] sm:$0xff]
    %v154 = vld [vmem:[#allocation5 + $0x70] sm:$0xff]
    %v155 = vld [vmem:[#allocation5 + $0x78] sm:$0xff]
    %v156 = vld [vmem:[#allocation5 + $0x80] sm:$0xff]
    %v157 = vld [vmem:[#allocation5 + $0x88] sm:$0xff]
    %v158 = vld [vmem:[#allocation5 + $0x90] sm:$0xff]
    %v159 = vld [vmem:[#allocation5 + $0x98] sm:$0xff]
    %v160 = vld [vmem:[#allocation5 + $0xa0] sm:$0xff]
    %v161 = vld [vmem:[#allocation5 + $0xa8] sm:$0xff]
    %v162 = vld [vmem:[#allocation5 + $0xb0] sm:$0xff]
    %v163 = vld [vmem:[#allocation5 + $0xb8] sm:$0xff]
    %v164 = vld [vmem:[#allocation5 + $0xc0] sm:$0xff]
    %v165 = vld [vmem:[#allocation5 + $0xc8] sm:$0xff]
    %v166 = vld [vmem:[#allocation5 + $0xd0] sm:$0xff]
    %v167 = vld [vmem:[#allocation5 + $0xd8] sm:$0xff]
    %v168 = vld [vmem:[#allocation5 + $0xe0] sm:$0xff]
    %v169 = vld [vmem:[#allocation5 + $0xe8] sm:$0xff]
    %v170 = vld [vmem:[#allocation5 + $0xf0] sm:$0xff]
    %v171 = vld [vmem:[#allocation5 + $0xf8] sm:$0xff]
    %v173 = vlaneseq
    %v174 = vshrl.u32 %v173, 7
    %v175 = vsub.s32 0, %v174
    %v176 = vrot.slane %v88, %v175
    %v177 = vlaneseq
    %v178 = vshrl.u32 %v177, 7
    %v179 = vsub.s32 1, %v178
    %v180 = vrot.slane %v88, %v179
    %v181 = vlaneseq
    %v182 = vshrl.u32 %v181, 7
    %v183 = vsub.s32 2, %v182
    %v184 = vrot.slane %v88, %v183
    %v185 = vlaneseq
    %v186 = vshrl.u32 %v185, 7
    %v187 = vsub.s32 3, %v186
    %v188 = vrot.slane %v88, %v187
    %v225 = vunpack.c.l.b16 %v140
    %v226 = vunpack.c.h.b16 %v140
    %v227 = vunpack.c.l.b16 %v141
    %v228 = vunpack.c.h.b16 %v141
    %v229 = vunpack.c.l.b16 %v142
    %v230 = vunpack.c.h.b16 %v142
    %v231 = vunpack.c.l.b16 %v143
    %v232 = vunpack.c.h.b16 %v143
    %v233 = vunpack.c.l.b16 %v144
    %v234 = vunpack.c.h.b16 %v144
    %v235 = vunpack.c.l.b16 %v145
    %v236 = vunpack.c.h.b16 %v145
    %v237 = vunpack.c.l.b16 %v146
    %v238 = vunpack.c.h.b16 %v146
    %v239 = vunpack.c.l.b16 %v147
    %v240 = vunpack.c.h.b16 %v147
    %v241 = vunpack.c.l.b16 %v148
    %v242 = vunpack.c.h.b16 %v148
    %v243 = vunpack.c.l.b16 %v149
    %v244 = vunpack.c.h.b16 %v149
    %v245 = vunpack.c.l.b16 %v150
    %v246 = vunpack.c.h.b16 %v150
    %v247 = vunpack.c.l.b16 %v151
    %v248 = vunpack.c.h.b16 %v151
    %v249 = vunpack.c.l.b16 %v152
    %v250 = vunpack.c.h.b16 %v152
    %v251 = vunpack.c.l.b16 %v153
    %v252 = vunpack.c.h.b16 %v153
    %v253 = vunpack.c.l.b16 %v154
    %v254 = vunpack.c.h.b16 %v154
    %v255 = vunpack.c.l.b16 %v155
    %v256 = vunpack.c.h.b16 %v155
    %v257 = vunpack.c.l.b16 %v156
    %v258 = vunpack.c.h.b16 %v156
    %v259 = vunpack.c.l.b16 %v157
    %v260 = vunpack.c.h.b16 %v157
    %v261 = vunpack.c.l.b16 %v158
    %v262 = vunpack.c.h.b16 %v158
    %v263 = vunpack.c.l.b16 %v159
    %v264 = vunpack.c.h.b16 %v159
    %v265 = vunpack.c.l.b16 %v160
    %v266 = vunpack.c.h.b16 %v160
    %v267 = vunpack.c.l.b16 %v161
    %v268 = vunpack.c.h.b16 %v161
    %v269 = vunpack.c.l.b16 %v162
    %v270 = vunpack.c.h.b16 %v162
    %v271 = vunpack.c.l.b16 %v163
    %v272 = vunpack.c.h.b16 %v163
    %v273 = vunpack.c.l.b16 %v164
    %v274 = vunpack.c.h.b16 %v164
    %v275 = vunpack.c.l.b16 %v165
    %v276 = vunpack.c.h.b16 %v165
    %v277 = vunpack.c.l.b16 %v166
    %v278 = vunpack.c.h.b16 %v166
    %v279 = vunpack.c.l.b16 %v167
    %v280 = vunpack.c.h.b16 %v167
    %v281 = vunpack.c.l.b16 %v168
    %v282 = vunpack.c.h.b16 %v168
    %v283 = vunpack.c.l.b16 %v169
    %v284 = vunpack.c.h.b16 %v169
    %v285 = vunpack.c.l.b16 %v170
    %v286 = vunpack.c.h.b16 %v170
    %v287 = vunpack.c.l.b16 %v171
    %v288 = vunpack.c.h.b16 %v171
    %v289 = vpack.c.b16 %v229, %v225
    %v290 = vpack.c.b16 %v230, %v226
    %v291 = vpack.c.b16 %v231, %v227
    %v292 = vpack.c.b16 %v232, %v228
    %v293 = vpack.c.b16 %v237, %v233
    %v294 = vpack.c.b16 %v238, %v234
    %v295 = vpack.c.b16 %v239, %v235
    %v296 = vpack.c.b16 %v240, %v236
    %v297 = vpack.c.b16 %v245, %v241
    %v298 = vpack.c.b16 %v246, %v242
    %v299 = vpack.c.b16 %v247, %v243
    %v300 = vpack.c.b16 %v248, %v244
    %v301 = vpack.c.b16 %v253, %v249
    %v302 = vpack.c.b16 %v254, %v250
    %v303 = vpack.c.b16 %v255, %v251
    %v304 = vpack.c.b16 %v256, %v252
    %v305 = vpack.c.b16 %v261, %v257
    %v306 = vpack.c.b16 %v262, %v258
    %v307 = vpack.c.b16 %v263, %v259
    %v308 = vpack.c.b16 %v264, %v260
    %v309 = vpack.c.b16 %v269, %v265
    %v310 = vpack.c.b16 %v270, %v266
    %v311 = vpack.c.b16 %v271, %v267
    %v312 = vpack.c.b16 %v272, %v268
    %v313 = vpack.c.b16 %v277, %v273
    %v314 = vpack.c.b16 %v278, %v274
    %v315 = vpack.c.b16 %v279, %v275
    %v316 = vpack.c.b16 %v280, %v276
    %v317 = vpack.c.b16 %v285, %v281
    %v318 = vpack.c.b16 %v286, %v282
    %v319 = vpack.c.b16 %v287, %v283
    %v320 = vpack.c.b16 %v288, %v284
    %353 = vmatprep.subr.bf16.mxu0 %v318
    %354 = vmatpush1.bf16.msra.mxu0 %v317
    %355 = vmatprep.subr.bf16.mxu0 %v314
    %356 = vmatpush1.bf16.msra.mxu0 %v313
    %357 = vmatprep.subr.bf16.mxu0 %v310
    %358 = vmatpush1.bf16.msra.mxu0 %v309
    %359 = vmatprep.subr.bf16.mxu0 %v306
    %360 = vmatpush1.bf16.msra.mxu0 %v305
    %361 = vmatprep.subr.bf16.mxu0 %v302
    %362 = vmatpush1.bf16.msra.mxu0 %v301
    %363 = vmatprep.subr.bf16.mxu0 %v298
    %364 = vmatpush1.bf16.msra.mxu0 %v297
    %365 = vmatprep.subr.bf16.mxu0 %v294
    %366 = vmatpush1.bf16.msra.mxu0 %v293
    %367 = vmatprep.subr.bf16.mxu0 %v290
    %368 = vmatpush1.bf16.msra.mxu0 %v289
    %369 = vmatprep.subr.bf16.mxu0 0
    %370 = vmatpush2.bf16.msra.mxu0 0
    %371 = vmatprep.subr.bf16.mxu0 0
    %372 = vmatpush2.bf16.msra.mxu0 0
    %373 = vmatprep.subr.bf16.mxu0 0
    %374 = vmatpush2.bf16.msra.mxu0 0
    %375 = vmatprep.subr.bf16.mxu0 0
    %376 = vmatpush2.bf16.msra.mxu0 0
    %377 = vmatprep.subr.bf16.mxu0 0
    %378 = vmatpush2.bf16.msra.mxu0 0
    %379 = vmatprep.subr.bf16.mxu0 0
    %380 = vmatpush2.bf16.msra.mxu0 0
    %381 = vmatprep.subr.bf16.mxu0 0
    %382 = vmatpush2.bf16.msra.mxu0 0
    %383 = vmatprep.subr.bf16.mxu0 0
    %384 = vmatpush2.bf16.msra.mxu0 0
    %385 = vmatprep.mubr.bf16.mxu0 0
    %386 = vmatmul.mubr.bf16.gmra.mxu0 %v124
    %v387 = vpop.f32.mrf.mxu0
    %v388 = vadd.f32 %v176, %v387
    %v389 = vpop.f32.mrf.mxu0
    %v390 = vadd.f32 %v180, %v389
    %v391 = vpop.f32.mrf.mxu0
    %v392 = vadd.f32 %v176, %v391
    %v393 = vpop.f32.mrf.mxu0
    %v394 = vadd.f32 %v180, %v393
    %395 = vmatprep.mubr.bf16.mxu0 0
    %396 = vmatmul.mubr.bf16.gmra.mxu0 %v125
    %v397 = vpop.f32.mrf.mxu0
    %v398 = vadd.f32 %v176, %v397
    %v399 = vpop.f32.mrf.mxu0
    %v400 = vadd.f32 %v180, %v399
    %v401 = vpop.f32.mrf.mxu0
    %v402 = vadd.f32 %v176, %v401
    %v403 = vpop.f32.mrf.mxu0
    %v404 = vadd.f32 %v180, %v403
    %405 = vmatprep.mubr.bf16.mxu0 0
    %406 = vmatmul.mubr.bf16.gmra.mxu0 %v126
    %v407 = vpop.f32.mrf.mxu0
    %v408 = vadd.f32 %v176, %v407
    %v409 = vpop.f32.mrf.mxu0
    %v410 = vadd.f32 %v180, %v409
    %v411 = vpop.f32.mrf.mxu0
    %v412 = vadd.f32 %v176, %v411
    %v413 = vpop.f32.mrf.mxu0
    %v414 = vadd.f32 %v180, %v413
    %415 = vmatprep.mubr.bf16.mxu0 0
    %416 = vmatmul.mubr.bf16.gmra.mxu0 %v127
    %v417 = vpop.f32.mrf.mxu0
    %v418 = vadd.f32 %v176, %v417
    %v419 = vpop.f32.mrf.mxu0
    %v420 = vadd.f32 %v180, %v419
    %v421 = vpop.f32.mrf.mxu0
    %v422 = vadd.f32 %v176, %v421
    %v423 = vpop.f32.mrf.mxu0
    %v424 = vadd.f32 %v180, %v423
    %425 = vmatprep.mubr.bf16.mxu0 0
    %426 = vmatmul.mubr.bf16.gmra.mxu0 %v128
    %v427 = vpop.f32.mrf.mxu0
    %v428 = vadd.f32 %v176, %v427
    %v429 = vpop.f32.mrf.mxu0
    %v430 = vadd.f32 %v180, %v429
    %v431 = vpop.f32.mrf.mxu0
    %v432 = vadd.f32 %v176, %v431
    %v433 = vpop.f32.mrf.mxu0
    %v434 = vadd.f32 %v180, %v433
    %435 = vmatprep.mubr.bf16.mxu0 0
    %436 = vmatmul.mubr.bf16.gmra.mxu0 %v129
    %v437 = vpop.f32.mrf.mxu0
    %v438 = vadd.f32 %v176, %v437
    %v439 = vpop.f32.mrf.mxu0
    %v440 = vadd.f32 %v180, %v439
    %v441 = vpop.f32.mrf.mxu0
    %v442 = vadd.f32 %v176, %v441
    %v443 = vpop.f32.mrf.mxu0
    %v444 = vadd.f32 %v180, %v443
    %445 = vmatprep.mubr.bf16.mxu0 0
    %446 = vmatmul.mubr.bf16.gmra.mxu0 %v130
    %v447 = vpop.f32.mrf.mxu0
    %v448 = vadd.f32 %v176, %v447
    %v449 = vpop.f32.mrf.mxu0
    %v450 = vadd.f32 %v180, %v449
    %v451 = vpop.f32.mrf.mxu0
    %v452 = vadd.f32 %v176, %v451
    %v453 = vpop.f32.mrf.mxu0
    %v454 = vadd.f32 %v180, %v453
    %455 = vmatprep.mubr.bf16.mxu0 0
    %456 = vmatmul.mubr.bf16.gmra.mxu0 %v131
    %v457 = vpop.f32.mrf.mxu0
    %v458 = vadd.f32 %v176, %v457
    %v459 = vpop.f32.mrf.mxu0
    %v460 = vadd.f32 %v180, %v459
    %v461 = vpop.f32.mrf.mxu0
    %v462 = vadd.f32 %v176, %v461
    %v463 = vpop.f32.mrf.mxu0
    %v464 = vadd.f32 %v180, %v463
    %465 = vmatprep.mubr.bf16.mxu0 0
    %466 = vmatmul.mubr.bf16.gmra.mxu0 %v132
    %v467 = vpop.f32.mrf.mxu0
    %v468 = vadd.f32 %v176, %v467
    %v469 = vpop.f32.mrf.mxu0
    %v470 = vadd.f32 %v180, %v469
    %v471 = vpop.f32.mrf.mxu0
    %v472 = vadd.f32 %v176, %v471
    %v473 = vpop.f32.mrf.mxu0
    %v474 = vadd.f32 %v180, %v473
    %475 = vmatprep.mubr.bf16.mxu0 0
    %476 = vmatmul.mubr.bf16.gmra.mxu0 %v133
    %v477 = vpop.f32.mrf.mxu0
    %v478 = vadd.f32 %v176, %v477
    %v479 = vpop.f32.mrf.mxu0
    %v480 = vadd.f32 %v180, %v479
    %v481 = vpop.f32.mrf.mxu0
    %v482 = vadd.f32 %v176, %v481
    %v483 = vpop.f32.mrf.mxu0
    %v484 = vadd.f32 %v180, %v483
    %485 = vmatprep.mubr.bf16.mxu0 0
    %486 = vmatmul.mubr.bf16.gmra.mxu0 %v134
    %v487 = vpop.f32.mrf.mxu0
    %v488 = vadd.f32 %v176, %v487
    %v489 = vpop.f32.mrf.mxu0
    %v490 = vadd.f32 %v180, %v489
    %v491 = vpop.f32.mrf.mxu0
    %v492 = vadd.f32 %v176, %v491
    %v493 = vpop.f32.mrf.mxu0
    %v494 = vadd.f32 %v180, %v493
    %495 = vmatprep.mubr.bf16.mxu0 0
    %496 = vmatmul.mubr.bf16.gmra.mxu0 %v135
    %v497 = vpop.f32.mrf.mxu0
    %v498 = vadd.f32 %v176, %v497
    %v499 = vpop.f32.mrf.mxu0
    %v500 = vadd.f32 %v180, %v499
    %v501 = vpop.f32.mrf.mxu0
    %v502 = vadd.f32 %v176, %v501
    %v503 = vpop.f32.mrf.mxu0
    %v504 = vadd.f32 %v180, %v503
    %505 = vmatprep.mubr.bf16.mxu0 0
    %506 = vmatmul.mubr.bf16.gmra.mxu0 %v136
    %v507 = vpop.f32.mrf.mxu0
    %v508 = vadd.f32 %v176, %v507
    %v509 = vpop.f32.mrf.mxu0
    %v510 = vadd.f32 %v180, %v509
    %v511 = vpop.f32.mrf.mxu0
    %v512 = vadd.f32 %v176, %v511
    %v513 = vpop.f32.mrf.mxu0
    %v514 = vadd.f32 %v180, %v513
    %515 = vmatprep.mubr.bf16.mxu0 0
    %516 = vmatmul.mubr.bf16.gmra.mxu0 %v137
    %v517 = vpop.f32.mrf.mxu0
    %v518 = vadd.f32 %v176, %v517
    %v519 = vpop.f32.mrf.mxu0
    %v520 = vadd.f32 %v180, %v519
    %v521 = vpop.f32.mrf.mxu0
    %v522 = vadd.f32 %v176, %v521
    %v523 = vpop.f32.mrf.mxu0
    %v524 = vadd.f32 %v180, %v523
    %525 = vmatprep.mubr.bf16.mxu0 0
    %526 = vmatmul.mubr.bf16.gmra.mxu0 %v138
    %v527 = vpop.f32.mrf.mxu0
    %v528 = vadd.f32 %v176, %v527
    %v529 = vpop.f32.mrf.mxu0
    %v530 = vadd.f32 %v180, %v529
    %v531 = vpop.f32.mrf.mxu0
    %v532 = vadd.f32 %v176, %v531
    %v533 = vpop.f32.mrf.mxu0
    %v534 = vadd.f32 %v180, %v533
    %535 = vmatprep.mubr.bf16.mxu0 0
    %536 = vmatmul.mubr.bf16.gmra.mxu0 %v139
    %v537 = vpop.f32.mrf.mxu0
    %v538 = vadd.f32 %v176, %v537
    %v539 = vpop.f32.mrf.mxu0
    %v540 = vadd.f32 %v180, %v539
    %v541 = vpop.f32.mrf.mxu0
    %v542 = vadd.f32 %v176, %v541
    %v543 = vpop.f32.mrf.mxu0
    %v544 = vadd.f32 %v180, %v543
    %545 = vdwg.mxu0
    %546 = vmatprep.subr.bf16.mxu0 %v320
    %547 = vmatpush1.bf16.msra.mxu0 %v319
    %548 = vmatprep.subr.bf16.mxu0 %v316
    %549 = vmatpush1.bf16.msra.mxu0 %v315
    %550 = vmatprep.subr.bf16.mxu0 %v312
    %551 = vmatpush1.bf16.msra.mxu0 %v311
    %552 = vmatprep.subr.bf16.mxu0 %v308
    %553 = vmatpush1.bf16.msra.mxu0 %v307
    %554 = vmatprep.subr.bf16.mxu0 %v304
    %555 = vmatpush1.bf16.msra.mxu0 %v303
    %556 = vmatprep.subr.bf16.mxu0 %v300
    %557 = vmatpush1.bf16.msra.mxu0 %v299
    %558 = vmatprep.subr.bf16.mxu0 %v296
    %559 = vmatpush1.bf16.msra.mxu0 %v295
    %560 = vmatprep.subr.bf16.mxu0 %v292
    %561 = vmatpush1.bf16.msra.mxu0 %v291
    %562 = vmatprep.subr.bf16.mxu0 0
    %563 = vmatpush2.bf16.msra.mxu0 0
    %564 = vmatprep.subr.bf16.mxu0 0
    %565 = vmatpush2.bf16.msra.mxu0 0
    %566 = vmatprep.subr.bf16.mxu0 0
    %567 = vmatpush2.bf16.msra.mxu0 0
    %568 = vmatprep.subr.bf16.mxu0 0
    %569 = vmatpush2.bf16.msra.mxu0 0
    %570 = vmatprep.subr.bf16.mxu0 0
    %571 = vmatpush2.bf16.msra.mxu0 0
    %572 = vmatprep.subr.bf16.mxu0 0
    %573 = vmatpush2.bf16.msra.mxu0 0
    %574 = vmatprep.subr.bf16.mxu0 0
    %575 = vmatpush2.bf16.msra.mxu0 0
    %576 = vmatprep.subr.bf16.mxu0 0
    %577 = vmatpush2.bf16.msra.mxu0 0
    %578 = vmatprep.mubr.bf16.mxu0 0
    %579 = vmatmul.mubr.bf16.gmra.mxu0 %v124
    %v580 = vpop.f32.mrf.mxu0
    %v581 = vadd.f32 %v184, %v580
    %v582 = vpop.f32.mrf.mxu0
    %v583 = vadd.f32 %v188, %v582
    %v584 = vpop.f32.mrf.mxu0
    %v585 = vadd.f32 %v184, %v584
    %v586 = vpop.f32.mrf.mxu0
    %v587 = vadd.f32 %v188, %v586
    %588 = vmatprep.mubr.bf16.mxu0 0
    %589 = vmatmul.mubr.bf16.gmra.mxu0 %v125
    %v590 = vpop.f32.mrf.mxu0
    %v591 = vadd.f32 %v184, %v590
    %v592 = vpop.f32.mrf.mxu0
    %v593 = vadd.f32 %v188, %v592
    %v594 = vpop.f32.mrf.mxu0
    %v595 = vadd.f32 %v184, %v594
    %v596 = vpop.f32.mrf.mxu0
    %v597 = vadd.f32 %v188, %v596
    %598 = vmatprep.mubr.bf16.mxu0 0
    %599 = vmatmul.mubr.bf16.gmra.mxu0 %v126
    %v600 = vpop.f32.mrf.mxu0
    %v601 = vadd.f32 %v184, %v600
    %v602 = vpop.f32.mrf.mxu0
    %v603 = vadd.f32 %v188, %v602
    %v604 = vpop.f32.mrf.mxu0
    %v605 = vadd.f32 %v184, %v604
    %v606 = vpop.f32.mrf.mxu0
    %v607 = vadd.f32 %v188, %v606
    %608 = vmatprep.mubr.bf16.mxu0 0
    %609 = vmatmul.mubr.bf16.gmra.mxu0 %v127
    %v610 = vpop.f32.mrf.mxu0
    %v611 = vadd.f32 %v184, %v610
    %v612 = vpop.f32.mrf.mxu0
    %v613 = vadd.f32 %v188, %v612
    %v614 = vpop.f32.mrf.mxu0
    %v615 = vadd.f32 %v184, %v614
    %v616 = vpop.f32.mrf.mxu0
    %v617 = vadd.f32 %v188, %v616
    %618 = vmatprep.mubr.bf16.mxu0 0
    %619 = vmatmul.mubr.bf16.gmra.mxu0 %v128
    %v620 = vpop.f32.mrf.mxu0
    %v621 = vadd.f32 %v184, %v620
    %v622 = vpop.f32.mrf.mxu0
    %v623 = vadd.f32 %v188, %v622
    %v624 = vpop.f32.mrf.mxu0
    %v625 = vadd.f32 %v184, %v624
    %v626 = vpop.f32.mrf.mxu0
    %v627 = vadd.f32 %v188, %v626
    %628 = vmatprep.mubr.bf16.mxu0 0
    %629 = vmatmul.mubr.bf16.gmra.mxu0 %v129
    %v630 = vpop.f32.mrf.mxu0
    %v631 = vadd.f32 %v184, %v630
    %v632 = vpop.f32.mrf.mxu0
    %v633 = vadd.f32 %v188, %v632
    %v634 = vpop.f32.mrf.mxu0
    %v635 = vadd.f32 %v184, %v634
    %v636 = vpop.f32.mrf.mxu0
    %v637 = vadd.f32 %v188, %v636
    %638 = vmatprep.mubr.bf16.mxu0 0
    %639 = vmatmul.mubr.bf16.gmra.mxu0 %v130
    %v640 = vpop.f32.mrf.mxu0
    %v641 = vadd.f32 %v184, %v640
    %v642 = vpop.f32.mrf.mxu0
    %v643 = vadd.f32 %v188, %v642
    %v644 = vpop.f32.mrf.mxu0
    %v645 = vadd.f32 %v184, %v644
    %v646 = vpop.f32.mrf.mxu0
    %v647 = vadd.f32 %v188, %v646
    %648 = vmatprep.mubr.bf16.mxu0 0
    %649 = vmatmul.mubr.bf16.gmra.mxu0 %v131
    %v650 = vpop.f32.mrf.mxu0
    %v651 = vadd.f32 %v184, %v650
    %v652 = vpop.f32.mrf.mxu0
    %v653 = vadd.f32 %v188, %v652
    %v654 = vpop.f32.mrf.mxu0
    %v655 = vadd.f32 %v184, %v654
    %v656 = vpop.f32.mrf.mxu0
    %v657 = vadd.f32 %v188, %v656
    %658 = vmatprep.mubr.bf16.mxu0 0
    %659 = vmatmul.mubr.bf16.gmra.mxu0 %v132
    %v660 = vpop.f32.mrf.mxu0
    %v661 = vadd.f32 %v184, %v660
    %v662 = vpop.f32.mrf.mxu0
    %v663 = vadd.f32 %v188, %v662
    %v664 = vpop.f32.mrf.mxu0
    %v665 = vadd.f32 %v184, %v664
    %v666 = vpop.f32.mrf.mxu0
    %v667 = vadd.f32 %v188, %v666
    %668 = vmatprep.mubr.bf16.mxu0 0
    %669 = vmatmul.mubr.bf16.gmra.mxu0 %v133
    %v670 = vpop.f32.mrf.mxu0
    %v671 = vadd.f32 %v184, %v670
    %v672 = vpop.f32.mrf.mxu0
    %v673 = vadd.f32 %v188, %v672
    %v674 = vpop.f32.mrf.mxu0
    %v675 = vadd.f32 %v184, %v674
    %v676 = vpop.f32.mrf.mxu0
    %v677 = vadd.f32 %v188, %v676
    %678 = vmatprep.mubr.bf16.mxu0 0
    %679 = vmatmul.mubr.bf16.gmra.mxu0 %v134
    %v680 = vpop.f32.mrf.mxu0
    %v681 = vadd.f32 %v184, %v680
    %v682 = vpop.f32.mrf.mxu0
    %v683 = vadd.f32 %v188, %v682
    %v684 = vpop.f32.mrf.mxu0
    %v685 = vadd.f32 %v184, %v684
    %v686 = vpop.f32.mrf.mxu0
    %v687 = vadd.f32 %v188, %v686
    %688 = vmatprep.mubr.bf16.mxu0 0
    %689 = vmatmul.mubr.bf16.gmra.mxu0 %v135
    %v690 = vpop.f32.mrf.mxu0
    %v691 = vadd.f32 %v184, %v690
    %v692 = vpop.f32.mrf.mxu0
    %v693 = vadd.f32 %v188, %v692
    %v694 = vpop.f32.mrf.mxu0
    %v695 = vadd.f32 %v184, %v694
    %v696 = vpop.f32.mrf.mxu0
    %v697 = vadd.f32 %v188, %v696
    %698 = vmatprep.mubr.bf16.mxu0 0
    %699 = vmatmul.mubr.bf16.gmra.mxu0 %v136
    %v700 = vpop.f32.mrf.mxu0
    %v701 = vadd.f32 %v184, %v700
    %v702 = vpop.f32.mrf.mxu0
    %v703 = vadd.f32 %v188, %v702
    %v704 = vpop.f32.mrf.mxu0
    %v705 = vadd.f32 %v184, %v704
    %v706 = vpop.f32.mrf.mxu0
    %v707 = vadd.f32 %v188, %v706
    %708 = vmatprep.mubr.bf16.mxu0 0
    %709 = vmatmul.mubr.bf16.gmra.mxu0 %v137
    %v710 = vpop.f32.mrf.mxu0
    %v711 = vadd.f32 %v184, %v710
    %v712 = vpop.f32.mrf.mxu0
    %v713 = vadd.f32 %v188, %v712
    %v714 = vpop.f32.mrf.mxu0
    %v715 = vadd.f32 %v184, %v714
    %v716 = vpop.f32.mrf.mxu0
    %v717 = vadd.f32 %v188, %v716
    %718 = vmatprep.mubr.bf16.mxu0 0
    %719 = vmatmul.mubr.bf16.gmra.mxu0 %v138
    %v720 = vpop.f32.mrf.mxu0
    %v721 = vadd.f32 %v184, %v720
    %v722 = vpop.f32.mrf.mxu0
    %v723 = vadd.f32 %v188, %v722
    %v724 = vpop.f32.mrf.mxu0
    %v725 = vadd.f32 %v184, %v724
    %v726 = vpop.f32.mrf.mxu0
    %v727 = vadd.f32 %v188, %v726
    %728 = vmatprep.mubr.bf16.mxu0 0
    %729 = vmatmul.mubr.bf16.gmra.mxu0 %v139
    %v730 = vpop.f32.mrf.mxu0
    %v731 = vadd.f32 %v184, %v730
    %v732 = vpop.f32.mrf.mxu0
    %v733 = vadd.f32 %v188, %v732
    %v734 = vpop.f32.mrf.mxu0
    %v735 = vadd.f32 %v184, %v734
    %v736 = vpop.f32.mrf.mxu0
    %v737 = vadd.f32 %v188, %v736
    %738 = vdwg.mxu0
    %v739 = vmax.f32 %v388, 0.0
    %v740 = vmax.f32 %v390, 0.0
    %v741 = vmax.f32 %v581, 0.0
    %v742 = vmax.f32 %v583, 0.0
    %v743 = vmax.f32 %v392, 0.0
    %v744 = vmax.f32 %v394, 0.0
    %v745 = vmax.f32 %v585, 0.0
    %v746 = vmax.f32 %v587, 0.0
    %v747 = vmax.f32 %v398, 0.0
    %v748 = vmax.f32 %v400, 0.0
    %v749 = vmax.f32 %v591, 0.0
    %v750 = vmax.f32 %v593, 0.0
    %v751 = vmax.f32 %v402, 0.0
    %v752 = vmax.f32 %v404, 0.0
    %v753 = vmax.f32 %v595, 0.0
    %v754 = vmax.f32 %v597, 0.0
    %v755 = vmax.f32 %v408, 0.0
    %v756 = vmax.f32 %v410, 0.0
    %v757 = vmax.f32 %v601, 0.0
    %v758 = vmax.f32 %v603, 0.0
    %v759 = vmax.f32 %v412, 0.0
    %v760 = vmax.f32 %v414, 0.0
    %v761 = vmax.f32 %v605, 0.0
    %v762 = vmax.f32 %v607, 0.0
    %v763 = vmax.f32 %v418, 0.0
    %v764 = vmax.f32 %v420, 0.0
    %v765 = vmax.f32 %v611, 0.0
    %v766 = vmax.f32 %v613, 0.0
    %v767 = vmax.f32 %v422, 0.0
    %v768 = vmax.f32 %v424, 0.0
    %v769 = vmax.f32 %v615, 0.0
    %v770 = vmax.f32 %v617, 0.0
    %v771 = vmax.f32 %v428, 0.0
    %v772 = vmax.f32 %v430, 0.0
    %v773 = vmax.f32 %v621, 0.0
    %v774 = vmax.f32 %v623, 0.0
    %v775 = vmax.f32 %v432, 0.0
    %v776 = vmax.f32 %v434, 0.0
    %v777 = vmax.f32 %v625, 0.0
    %v778 = vmax.f32 %v627, 0.0
    %v779 = vmax.f32 %v438, 0.0
    %v780 = vmax.f32 %v440, 0.0
    %v781 = vmax.f32 %v631, 0.0
    %v782 = vmax.f32 %v633, 0.0
    %v783 = vmax.f32 %v442, 0.0
    %v784 = vmax.f32 %v444, 0.0
    %v785 = vmax.f32 %v635, 0.0
    %v786 = vmax.f32 %v637, 0.0
    %v787 = vmax.f32 %v448, 0.0
    %v788 = vmax.f32 %v450, 0.0
    %v789 = vmax.f32 %v641, 0.0
    %v790 = vmax.f32 %v643, 0.0
    %v791 = vmax.f32 %v452, 0.0
    %v792 = vmax.f32 %v454, 0.0
    %v793 = vmax.f32 %v645, 0.0
    %v794 = vmax.f32 %v647, 0.0
    %v795 = vmax.f32 %v458, 0.0
    %v796 = vmax.f32 %v460, 0.0
    %v797 = vmax.f32 %v651, 0.0
    %v798 = vmax.f32 %v653, 0.0
    %v799 = vmax.f32 %v462, 0.0
    %v800 = vmax.f32 %v464, 0.0
    %v801 = vmax.f32 %v655, 0.0
    %v802 = vmax.f32 %v657, 0.0
    %v803 = vmax.f32 %v468, 0.0
    %v804 = vmax.f32 %v470, 0.0
    %v805 = vmax.f32 %v661, 0.0
    %v806 = vmax.f32 %v663, 0.0
    %v807 = vmax.f32 %v472, 0.0
    %v808 = vmax.f32 %v474, 0.0
    %v809 = vmax.f32 %v665, 0.0
    %v810 = vmax.f32 %v667, 0.0
    %v811 = vmax.f32 %v478, 0.0
    %v812 = vmax.f32 %v480, 0.0
    %v813 = vmax.f32 %v671, 0.0
    %v814 = vmax.f32 %v673, 0.0
    %v815 = vmax.f32 %v482, 0.0
    %v816 = vmax.f32 %v484, 0.0
    %v817 = vmax.f32 %v675, 0.0
    %v818 = vmax.f32 %v677, 0.0
    %v819 = vmax.f32 %v488, 0.0
    %v820 = vmax.f32 %v490, 0.0
    %v821 = vmax.f32 %v681, 0.0
    %v822 = vmax.f32 %v683, 0.0
    %v823 = vmax.f32 %v492, 0.0
    %v824 = vmax.f32 %v494, 0.0
    %v825 = vmax.f32 %v685, 0.0
    %v826 = vmax.f32 %v687, 0.0
    %v827 = vmax.f32 %v498, 0.0
    %v828 = vmax.f32 %v500, 0.0
    %v829 = vmax.f32 %v691, 0.0
    %v830 = vmax.f32 %v693, 0.0
    %v831 = vmax.f32 %v502, 0.0
    %v832 = vmax.f32 %v504, 0.0
    %v833 = vmax.f32 %v695, 0.0
    %v834 = vmax.f32 %v697, 0.0
    %v835 = vmax.f32 %v508, 0.0
    %v836 = vmax.f32 %v510, 0.0
    %v837 = vmax.f32 %v701, 0.0
    %v838 = vmax.f32 %v703, 0.0
    %v839 = vmax.f32 %v512, 0.0
    %v840 = vmax.f32 %v514, 0.0
    %v841 = vmax.f32 %v705, 0.0
    %v842 = vmax.f32 %v707, 0.0
    %v843 = vmax.f32 %v518, 0.0
    %v844 = vmax.f32 %v520, 0.0
    %v845 = vmax.f32 %v711, 0.0
    %v846 = vmax.f32 %v713, 0.0
    %v847 = vmax.f32 %v522, 0.0
    %v848 = vmax.f32 %v524, 0.0
    %v849 = vmax.f32 %v715, 0.0
    %v850 = vmax.f32 %v717, 0.0
    %v851 = vmax.f32 %v528, 0.0
    %v852 = vmax.f32 %v530, 0.0
    %v853 = vmax.f32 %v721, 0.0
    %v854 = vmax.f32 %v723, 0.0
    %v855 = vmax.f32 %v532, 0.0
    %v856 = vmax.f32 %v534, 0.0
    %v857 = vmax.f32 %v725, 0.0
    %v858 = vmax.f32 %v727, 0.0
    %v859 = vmax.f32 %v538, 0.0
    %v860 = vmax.f32 %v540, 0.0
    %v861 = vmax.f32 %v731, 0.0
    %v862 = vmax.f32 %v733, 0.0
    %v863 = vmax.f32 %v542, 0.0
    %v864 = vmax.f32 %v544, 0.0
    %v865 = vmax.f32 %v735, 0.0
    %v866 = vmax.f32 %v737, 0.0
    %v867 = vpack.c.bf16 %v743, %v739
    %v868 = vpack.c.bf16 %v744, %v740
    %v869 = vpack.c.bf16 %v745, %v741
    %v870 = vpack.c.bf16 %v746, %v742
    %v871 = vpack.c.bf16 %v751, %v747
    %v872 = vpack.c.bf16 %v752, %v748
    %v873 = vpack.c.bf16 %v753, %v749
    %v874 = vpack.c.bf16 %v754, %v750
    %v875 = vpack.c.bf16 %v759, %v755
    %v876 = vpack.c.bf16 %v760, %v756
    %v877 = vpack.c.bf16 %v761, %v757
    %v878 = vpack.c.bf16 %v762, %v758
    %v879 = vpack.c.bf16 %v767, %v763
    %v880 = vpack.c.bf16 %v768, %v764
    %v881 = vpack.c.bf16 %v769, %v765
    %v882 = vpack.c.bf16 %v770, %v766
    %v883 = vpack.c.bf16 %v775, %v771
    %v884 = vpack.c.bf16 %v776, %v772
    %v885 = vpack.c.bf16 %v777, %v773
    %v886 = vpack.c.bf16 %v778, %v774
    %v887 = vpack.c.bf16 %v783, %v779
    %v888 = vpack.c.bf16 %v784, %v780
    %v889 = vpack.c.bf16 %v785, %v781
    %v890 = vpack.c.bf16 %v786, %v782
    %v891 = vpack.c.bf16 %v791, %v787
    %v892 = vpack.c.bf16 %v792, %v788
    %v893 = vpack.c.bf16 %v793, %v789
    %v894 = vpack.c.bf16 %v794, %v790
    %v895 = vpack.c.bf16 %v799, %v795
    %v896 = vpack.c.bf16 %v800, %v796
    %v897 = vpack.c.bf16 %v801, %v797
    %v898 = vpack.c.bf16 %v802, %v798
    %v899 = vpack.c.bf16 %v807, %v803
    %v900 = vpack.c.bf16 %v808, %v804
    %v901 = vpack.c.bf16 %v809, %v805
    %v902 = vpack.c.bf16 %v810, %v806
    %v903 = vpack.c.bf16 %v815, %v811
    %v904 = vpack.c.bf16 %v816, %v812
    %v905 = vpack.c.bf16 %v817, %v813
    %v906 = vpack.c.bf16 %v818, %v814
    %v907 = vpack.c.bf16 %v823, %v819
    %v908 = vpack.c.bf16 %v824, %v820
    %v909 = vpack.c.bf16 %v825, %v821
    %v910 = vpack.c.bf16 %v826, %v822
    %v911 = vpack.c.bf16 %v831, %v827
    %v912 = vpack.c.bf16 %v832, %v828
    %v913 = vpack.c.bf16 %v833, %v829
    %v914 = vpack.c.bf16 %v834, %v830
    %v915 = vpack.c.bf16 %v839, %v835
    %v916 = vpack.c.bf16 %v840, %v836
    %v917 = vpack.c.bf16 %v841, %v837
    %v918 = vpack.c.bf16 %v842, %v838
    %v919 = vpack.c.bf16 %v847, %v843
    %v920 = vpack.c.bf16 %v848, %v844
    %v921 = vpack.c.bf16 %v849, %v845
    %v922 = vpack.c.bf16 %v850, %v846
    %v923 = vpack.c.bf16 %v855, %v851
    %v924 = vpack.c.bf16 %v856, %v852
    %v925 = vpack.c.bf16 %v857, %v853
    %v926 = vpack.c.bf16 %v858, %v854
    %v927 = vpack.c.bf16 %v863, %v859
    %v928 = vpack.c.bf16 %v864, %v860
    %v929 = vpack.c.bf16 %v865, %v861
    %v930 = vpack.c.bf16 %v866, %v862
    %v931 = vld [vmem:[#allocation7] sm:$0xff]
    %v932 = vld [vmem:[#allocation7 + $0x8] sm:$0xff]
    %v933 = vld [vmem:[#allocation7 + $0x10] sm:$0xff]
    %v934 = vld [vmem:[#allocation7 + $0x18] sm:$0xff]
    %v935 = vld [vmem:[#allocation7 + $0x20] sm:$0xff]
    %v936 = vld [vmem:[#allocation7 + $0x28] sm:$0xff]
    %v937 = vld [vmem:[#allocation7 + $0x30] sm:$0xff]
    %v938 = vld [vmem:[#allocation7 + $0x38] sm:$0xff]
    %v939 = vld [vmem:[#allocation7 + $0x40] sm:$0xff]
    %v940 = vld [vmem:[#allocation7 + $0x48] sm:$0xff]
    %v941 = vld [vmem:[#allocation7 + $0x50] sm:$0xff]
    %v942 = vld [vmem:[#allocation7 + $0x58] sm:$0xff]
    %v943 = vld [vmem:[#allocation7 + $0x60] sm:$0xff]
    %v944 = vld [vmem:[#allocation7 + $0x68] sm:$0xff]
    %v945 = vld [vmem:[#allocation7 + $0x70] sm:$0xff]
    %v946 = vld [vmem:[#allocation7 + $0x78] sm:$0xff]
    %v947 = vld [vmem:[#allocation7 + $0x80] sm:$0xff]
    %v948 = vld [vmem:[#allocation7 + $0x88] sm:$0xff]
    %v949 = vld [vmem:[#allocation7 + $0x90] sm:$0xff]
    %v950 = vld [vmem:[#allocation7 + $0x98] sm:$0xff]
    %v951 = vld [vmem:[#allocation7 + $0xa0] sm:$0xff]
    %v952 = vld [vmem:[#allocation7 + $0xa8] sm:$0xff]
    %v953 = vld [vmem:[#allocation7 + $0xb0] sm:$0xff]
    %v954 = vld [vmem:[#allocation7 + $0xb8] sm:$0xff]
    %v955 = vld [vmem:[#allocation7 + $0xc0] sm:$0xff]
    %v956 = vld [vmem:[#allocation7 + $0xc8] sm:$0xff]
    %v957 = vld [vmem:[#allocation7 + $0xd0] sm:$0xff]
    %v958 = vld [vmem:[#allocation7 + $0xd8] sm:$0xff]
    %v959 = vld [vmem:[#allocation7 + $0xe0] sm:$0xff]
    %v960 = vld [vmem:[#allocation7 + $0xe8] sm:$0xff]
    %v961 = vld [vmem:[#allocation7 + $0xf0] sm:$0xff]
    %v962 = vld [vmem:[#allocation7 + $0xf8] sm:$0xff]
    %v963 = vld [vmem:[#allocation7 + $0x100] sm:$0xff]
    %v964 = vld [vmem:[#allocation7 + $0x108] sm:$0xff]
    %v965 = vld [vmem:[#allocation7 + $0x110] sm:$0xff]
    %v966 = vld [vmem:[#allocation7 + $0x118] sm:$0xff]
    %v967 = vld [vmem:[#allocation7 + $0x120] sm:$0xff]
    %v968 = vld [vmem:[#allocation7 + $0x128] sm:$0xff]
    %v969 = vld [vmem:[#allocation7 + $0x130] sm:$0xff]
    %v970 = vld [vmem:[#allocation7 + $0x138] sm:$0xff]
    %v971 = vld [vmem:[#allocation7 + $0x140] sm:$0xff]
    %v972 = vld [vmem:[#allocation7 + $0x148] sm:$0xff]
    %v973 = vld [vmem:[#allocation7 + $0x150] sm:$0xff]
    %v974 = vld [vmem:[#allocation7 + $0x158] sm:$0xff]
    %v975 = vld [vmem:[#allocation7 + $0x160] sm:$0xff]
    %v976 = vld [vmem:[#allocation7 + $0x168] sm:$0xff]
    %v977 = vld [vmem:[#allocation7 + $0x170] sm:$0xff]
    %v978 = vld [vmem:[#allocation7 + $0x178] sm:$0xff]
    %v979 = vld [vmem:[#allocation7 + $0x180] sm:$0xff]
    %v980 = vld [vmem:[#allocation7 + $0x188] sm:$0xff]
    %v981 = vld [vmem:[#allocation7 + $0x190] sm:$0xff]
    %v982 = vld [vmem:[#allocation7 + $0x198] sm:$0xff]
    %v983 = vld [vmem:[#allocation7 + $0x1a0] sm:$0xff]
    %v984 = vld [vmem:[#allocation7 + $0x1a8] sm:$0xff]
    %v985 = vld [vmem:[#allocation7 + $0x1b0] sm:$0xff]
    %v986 = vld [vmem:[#allocation7 + $0x1b8] sm:$0xff]
    %v987 = vld [vmem:[#allocation7 + $0x1c0] sm:$0xff]
    %v988 = vld [vmem:[#allocation7 + $0x1c8] sm:$0xff]
    %v989 = vld [vmem:[#allocation7 + $0x1d0] sm:$0xff]
    %v990 = vld [vmem:[#allocation7 + $0x1d8] sm:$0xff]
    %v991 = vld [vmem:[#allocation7 + $0x1e0] sm:$0xff]
    %v992 = vld [vmem:[#allocation7 + $0x1e8] sm:$0xff]
    %v993 = vld [vmem:[#allocation7 + $0x1f0] sm:$0xff]
    %v994 = vld [vmem:[#allocation7 + $0x1f8] sm:$0xff]
    %v995 = vld [vmem:[#allocation7 + $0x200] sm:$0xff]
    %v996 = vld [vmem:[#allocation7 + $0x208] sm:$0xff]
    %v997 = vld [vmem:[#allocation7 + $0x210] sm:$0xff]
    %v998 = vld [vmem:[#allocation7 + $0x218] sm:$0xff]
    %v999 = vld [vmem:[#allocation7 + $0x220] sm:$0xff]
    %v1000 = vld [vmem:[#allocation7 + $0x228] sm:$0xff]
    %v1001 = vld [vmem:[#allocation7 + $0x230] sm:$0xff]
    %v1002 = vld [vmem:[#allocation7 + $0x238] sm:$0xff]
    %v1003 = vld [vmem:[#allocation7 + $0x240] sm:$0xff]
    %v1004 = vld [vmem:[#allocation7 + $0x248] sm:$0xff]
    %v1005 = vld [vmem:[#allocation7 + $0x250] sm:$0xff]
    %v1006 = vld [vmem:[#allocation7 + $0x258] sm:$0xff]
    %v1007 = vld [vmem:[#allocation7 + $0x260] sm:$0xff]
    %v1008 = vld [vmem:[#allocation7 + $0x268] sm:$0xff]
    %v1009 = vld [vmem:[#allocation7 + $0x270] sm:$0xff]
    %v1010 = vld [vmem:[#allocation7 + $0x278] sm:$0xff]
    %v1011 = vld [vmem:[#allocation7 + $0x280] sm:$0xff]
    %v1012 = vld [vmem:[#allocation7 + $0x288] sm:$0xff]
    %v1013 = vld [vmem:[#allocation7 + $0x290] sm:$0xff]
    %v1014 = vld [vmem:[#allocation7 + $0x298] sm:$0xff]
    %v1015 = vld [vmem:[#allocation7 + $0x2a0] sm:$0xff]
    %v1016 = vld [vmem:[#allocation7 + $0x2a8] sm:$0xff]
    %v1017 = vld [vmem:[#allocation7 + $0x2b0] sm:$0xff]
    %v1018 = vld [vmem:[#allocation7 + $0x2b8] sm:$0xff]
    %v1019 = vld [vmem:[#allocation7 + $0x2c0] sm:$0xff]
    %v1020 = vld [vmem:[#allocation7 + $0x2c8] sm:$0xff]
    %v1021 = vld [vmem:[#allocation7 + $0x2d0] sm:$0xff]
    %v1022 = vld [vmem:[#allocation7 + $0x2d8] sm:$0xff]
    %v1023 = vld [vmem:[#allocation7 + $0x2e0] sm:$0xff]
    %v1024 = vld [vmem:[#allocation7 + $0x2e8] sm:$0xff]
    %v1025 = vld [vmem:[#allocation7 + $0x2f0] sm:$0xff]
    %v1026 = vld [vmem:[#allocation7 + $0x2f8] sm:$0xff]
    %v1027 = vld [vmem:[#allocation7 + $0x300] sm:$0xff]
    %v1028 = vld [vmem:[#allocation7 + $0x308] sm:$0xff]
    %v1029 = vld [vmem:[#allocation7 + $0x310] sm:$0xff]
    %v1030 = vld [vmem:[#allocation7 + $0x318] sm:$0xff]
    %v1031 = vld [vmem:[#allocation7 + $0x320] sm:$0xff]
    %v1032 = vld [vmem:[#allocation7 + $0x328] sm:$0xff]
    %v1033 = vld [vmem:[#allocation7 + $0x330] sm:$0xff]
    %v1034 = vld [vmem:[#allocation7 + $0x338] sm:$0xff]
    %v1035 = vld [vmem:[#allocation7 + $0x340] sm:$0xff]
    %v1036 = vld [vmem:[#allocation7 + $0x348] sm:$0xff]
    %v1037 = vld [vmem:[#allocation7 + $0x350] sm:$0xff]
    %v1038 = vld [vmem:[#allocation7 + $0x358] sm:$0xff]
    %v1039 = vld [vmem:[#allocation7 + $0x360] sm:$0xff]
    %v1040 = vld [vmem:[#allocation7 + $0x368] sm:$0xff]
    %v1041 = vld [vmem:[#allocation7 + $0x370] sm:$0xff]
    %v1042 = vld [vmem:[#allocation7 + $0x378] sm:$0xff]
    %v1043 = vld [vmem:[#allocation7 + $0x380] sm:$0xff]
    %v1044 = vld [vmem:[#allocation7 + $0x388] sm:$0xff]
    %v1045 = vld [vmem:[#allocation7 + $0x390] sm:$0xff]
    %v1046 = vld [vmem:[#allocation7 + $0x398] sm:$0xff]
    %v1047 = vld [vmem:[#allocation7 + $0x3a0] sm:$0xff]
    %v1048 = vld [vmem:[#allocation7 + $0x3a8] sm:$0xff]
    %v1049 = vld [vmem:[#allocation7 + $0x3b0] sm:$0xff]
    %v1050 = vld [vmem:[#allocation7 + $0x3b8] sm:$0xff]
    %v1051 = vld [vmem:[#allocation7 + $0x3c0] sm:$0xff]
    %v1052 = vld [vmem:[#allocation7 + $0x3c8] sm:$0xff]
    %v1053 = vld [vmem:[#allocation7 + $0x3d0] sm:$0xff]
    %v1054 = vld [vmem:[#allocation7 + $0x3d8] sm:$0xff]
    %v1055 = vld [vmem:[#allocation7 + $0x3e0] sm:$0xff]
    %v1056 = vld [vmem:[#allocation7 + $0x3e8] sm:$0xff]
    %v1057 = vld [vmem:[#allocation7 + $0x3f0] sm:$0xff]
    %v1058 = vld [vmem:[#allocation7 + $0x3f8] sm:$0xff]
    %v1060 = vlaneseq
    %v1061 = vshrl.u32 %v1060, 7
    %v1062 = vsub.s32 0, %v1061
    %v1063 = vrot.slane %v90, %v1062
    %v1064 = vlaneseq
    %v1065 = vshrl.u32 %v1064, 7
    %v1066 = vsub.s32 1, %v1065
    %v1067 = vrot.slane %v90, %v1066
    %v1068 = vlaneseq
    %v1069 = vshrl.u32 %v1068, 7
    %v1070 = vsub.s32 2, %v1069
    %v1071 = vrot.slane %v90, %v1070
    %v1072 = vlaneseq
    %v1073 = vshrl.u32 %v1072, 7
    %v1074 = vsub.s32 3, %v1073
    %v1075 = vrot.slane %v90, %v1074
    %v1208 = vunpack.c.l.b16 %v931
    %v1209 = vunpack.c.h.b16 %v931
    %v1210 = vunpack.c.l.b16 %v932
    %v1211 = vunpack.c.h.b16 %v932
    %v1212 = vunpack.c.l.b16 %v933
    %v1213 = vunpack.c.h.b16 %v933
    %v1214 = vunpack.c.l.b16 %v934
    %v1215 = vunpack.c.h.b16 %v934
    %v1216 = vunpack.c.l.b16 %v935
    %v1217 = vunpack.c.h.b16 %v935
    %v1218 = vunpack.c.l.b16 %v936
    %v1219 = vunpack.c.h.b16 %v936
    %v1220 = vunpack.c.l.b16 %v937
    %v1221 = vunpack.c.h.b16 %v937
    %v1222 = vunpack.c.l.b16 %v938
    %v1223 = vunpack.c.h.b16 %v938
    %v1224 = vunpack.c.l.b16 %v939
    %v1225 = vunpack.c.h.b16 %v939
    %v1226 = vunpack.c.l.b16 %v940
    %v1227 = vunpack.c.h.b16 %v940
    %v1228 = vunpack.c.l.b16 %v941
    %v1229 = vunpack.c.h.b16 %v941
    %v1230 = vunpack.c.l.b16 %v942
    %v1231 = vunpack.c.h.b16 %v942
    %v1232 = vunpack.c.l.b16 %v943
    %v1233 = vunpack.c.h.b16 %v943
    %v1234 = vunpack.c.l.b16 %v944
    %v1235 = vunpack.c.h.b16 %v944
    %v1236 = vunpack.c.l.b16 %v945
    %v1237 = vunpack.c.h.b16 %v945
    %v1238 = vunpack.c.l.b16 %v946
    %v1239 = vunpack.c.h.b16 %v946
    %v1240 = vunpack.c.l.b16 %v947
    %v1241 = vunpack.c.h.b16 %v947
    %v1242 = vunpack.c.l.b16 %v948
    %v1243 = vunpack.c.h.b16 %v948
    %v1244 = vunpack.c.l.b16 %v949
    %v1245 = vunpack.c.h.b16 %v949
    %v1246 = vunpack.c.l.b16 %v950
    %v1247 = vunpack.c.h.b16 %v950
    %v1248 = vunpack.c.l.b16 %v951
    %v1249 = vunpack.c.h.b16 %v951
    %v1250 = vunpack.c.l.b16 %v952
    %v1251 = vunpack.c.h.b16 %v952
    %v1252 = vunpack.c.l.b16 %v953
    %v1253 = vunpack.c.h.b16 %v953
    %v1254 = vunpack.c.l.b16 %v954
    %v1255 = vunpack.c.h.b16 %v954
    %v1256 = vunpack.c.l.b16 %v955
    %v1257 = vunpack.c.h.b16 %v955
    %v1258 = vunpack.c.l.b16 %v956
    %v1259 = vunpack.c.h.b16 %v956
    %v1260 = vunpack.c.l.b16 %v957
    %v1261 = vunpack.c.h.b16 %v957
    %v1262 = vunpack.c.l.b16 %v958
    %v1263 = vunpack.c.h.b16 %v958
    %v1264 = vunpack.c.l.b16 %v959
    %v1265 = vunpack.c.h.b16 %v959
    %v1266 = vunpack.c.l.b16 %v960
    %v1267 = vunpack.c.h.b16 %v960
    %v1268 = vunpack.c.l.b16 %v961
    %v1269 = vunpack.c.h.b16 %v961
    %v1270 = vunpack.c.l.b16 %v962
    %v1271 = vunpack.c.h.b16 %v962
    %v1272 = vunpack.c.l.b16 %v963
    %v1273 = vunpack.c.h.b16 %v963
    %v1274 = vunpack.c.l.b16 %v964
    %v1275 = vunpack.c.h.b16 %v964
    %v1276 = vunpack.c.l.b16 %v965
    %v1277 = vunpack.c.h.b16 %v965
    %v1278 = vunpack.c.l.b16 %v966
    %v1279 = vunpack.c.h.b16 %v966
    %v1280 = vunpack.c.l.b16 %v967
    %v1281 = vunpack.c.h.b16 %v967
    %v1282 = vunpack.c.l.b16 %v968
    %v1283 = vunpack.c.h.b16 %v968
    %v1284 = vunpack.c.l.b16 %v969
    %v1285 = vunpack.c.h.b16 %v969
    %v1286 = vunpack.c.l.b16 %v970
    %v1287 = vunpack.c.h.b16 %v970
    %v1288 = vunpack.c.l.b16 %v971
    %v1289 = vunpack.c.h.b16 %v971
    %v1290 = vunpack.c.l.b16 %v972
    %v1291 = vunpack.c.h.b16 %v972
    %v1292 = vunpack.c.l.b16 %v973
    %v1293 = vunpack.c.h.b16 %v973
    %v1294 = vunpack.c.l.b16 %v974
    %v1295 = vunpack.c.h.b16 %v974
    %v1296 = vunpack.c.l.b16 %v975
    %v1297 = vunpack.c.h.b16 %v975
    %v1298 = vunpack.c.l.b16 %v976
    %v1299 = vunpack.c.h.b16 %v976
    %v1300 = vunpack.c.l.b16 %v977
    %v1301 = vunpack.c.h.b16 %v977
    %v1302 = vunpack.c.l.b16 %v978
    %v1303 = vunpack.c.h.b16 %v978
    %v1304 = vunpack.c.l.b16 %v979
    %v1305 = vunpack.c.h.b16 %v979
    %v1306 = vunpack.c.l.b16 %v980
    %v1307 = vunpack.c.h.b16 %v980
    %v1308 = vunpack.c.l.b16 %v981
    %v1309 = vunpack.c.h.b16 %v981
    %v1310 = vunpack.c.l.b16 %v982
    %v1311 = vunpack.c.h.b16 %v982
    %v1312 = vunpack.c.l.b16 %v983
    %v1313 = vunpack.c.h.b16 %v983
    %v1314 = vunpack.c.l.b16 %v984
    %v1315 = vunpack.c.h.b16 %v984
    %v1316 = vunpack.c.l.b16 %v985
    %v1317 = vunpack.c.h.b16 %v985
    %v1318 = vunpack.c.l.b16 %v986
    %v1319 = vunpack.c.h.b16 %v986
    %v1320 = vunpack.c.l.b16 %v987
    %v1321 = vunpack.c.h.b16 %v987
    %v1322 = vunpack.c.l.b16 %v988
    %v1323 = vunpack.c.h.b16 %v988
    %v1324 = vunpack.c.l.b16 %v989
    %v1325 = vunpack.c.h.b16 %v989
    %v1326 = vunpack.c.l.b16 %v990
    %v1327 = vunpack.c.h.b16 %v990
    %v1328 = vunpack.c.l.b16 %v991
    %v1329 = vunpack.c.h.b16 %v991
    %v1330 = vunpack.c.l.b16 %v992
    %v1331 = vunpack.c.h.b16 %v992
    %v1332 = vunpack.c.l.b16 %v993
    %v1333 = vunpack.c.h.b16 %v993
    %v1334 = vunpack.c.l.b16 %v994
    %v1335 = vunpack.c.h.b16 %v994
    %v1336 = vunpack.c.l.b16 %v995
    %v1337 = vunpack.c.h.b16 %v995
    %v1338 = vunpack.c.l.b16 %v996
    %v1339 = vunpack.c.h.b16 %v996
    %v1340 = vunpack.c.l.b16 %v997
    %v1341 = vunpack.c.h.b16 %v997
    %v1342 = vunpack.c.l.b16 %v998
    %v1343 = vunpack.c.h.b16 %v998
    %v1344 = vunpack.c.l.b16 %v999
    %v1345 = vunpack.c.h.b16 %v999
    %v1346 = vunpack.c.l.b16 %v1000
    %v1347 = vunpack.c.h.b16 %v1000
    %v1348 = vunpack.c.l.b16 %v1001
    %v1349 = vunpack.c.h.b16 %v1001
    %v1350 = vunpack.c.l.b16 %v1002
    %v1351 = vunpack.c.h.b16 %v1002
    %v1352 = vunpack.c.l.b16 %v1003
    %v1353 = vunpack.c.h.b16 %v1003
    %v1354 = vunpack.c.l.b16 %v1004
    %v1355 = vunpack.c.h.b16 %v1004
    %v1356 = vunpack.c.l.b16 %v1005
    %v1357 = vunpack.c.h.b16 %v1005
    %v1358 = vunpack.c.l.b16 %v1006
    %v1359 = vunpack.c.h.b16 %v1006
    %v1360 = vunpack.c.l.b16 %v1007
    %v1361 = vunpack.c.h.b16 %v1007
    %v1362 = vunpack.c.l.b16 %v1008
    %v1363 = vunpack.c.h.b16 %v1008
    %v1364 = vunpack.c.l.b16 %v1009
    %v1365 = vunpack.c.h.b16 %v1009
    %v1366 = vunpack.c.l.b16 %v1010
    %v1367 = vunpack.c.h.b16 %v1010
    %v1368 = vunpack.c.l.b16 %v1011
    %v1369 = vunpack.c.h.b16 %v1011
    %v1370 = vunpack.c.l.b16 %v1012
    %v1371 = vunpack.c.h.b16 %v1012
    %v1372 = vunpack.c.l.b16 %v1013
    %v1373 = vunpack.c.h.b16 %v1013
    %v1374 = vunpack.c.l.b16 %v1014
    %v1375 = vunpack.c.h.b16 %v1014
    %v1376 = vunpack.c.l.b16 %v1015
    %v1377 = vunpack.c.h.b16 %v1015
    %v1378 = vunpack.c.l.b16 %v1016
    %v1379 = vunpack.c.h.b16 %v1016
    %v1380 = vunpack.c.l.b16 %v1017
    %v1381 = vunpack.c.h.b16 %v1017
    %v1382 = vunpack.c.l.b16 %v1018
    %v1383 = vunpack.c.h.b16 %v1018
    %v1384 = vunpack.c.l.b16 %v1019
    %v1385 = vunpack.c.h.b16 %v1019
    %v1386 = vunpack.c.l.b16 %v1020
    %v1387 = vunpack.c.h.b16 %v1020
    %v1388 = vunpack.c.l.b16 %v1021
    %v1389 = vunpack.c.h.b16 %v1021
    %v1390 = vunpack.c.l.b16 %v1022
    %v1391 = vunpack.c.h.b16 %v1022
    %v1392 = vunpack.c.l.b16 %v1023
    %v1393 = vunpack.c.h.b16 %v1023
    %v1394 = vunpack.c.l.b16 %v1024
    %v1395 = vunpack.c.h.b16 %v1024
    %v1396 = vunpack.c.l.b16 %v1025
    %v1397 = vunpack.c.h.b16 %v1025
    %v1398 = vunpack.c.l.b16 %v1026
    %v1399 = vunpack.c.h.b16 %v1026
    %v1400 = vunpack.c.l.b16 %v1027
    %v1401 = vunpack.c.h.b16 %v1027
    %v1402 = vunpack.c.l.b16 %v1028
    %v1403 = vunpack.c.h.b16 %v1028
    %v1404 = vunpack.c.l.b16 %v1029
    %v1405 = vunpack.c.h.b16 %v1029
    %v1406 = vunpack.c.l.b16 %v1030
    %v1407 = vunpack.c.h.b16 %v1030
    %v1408 = vunpack.c.l.b16 %v1031
    %v1409 = vunpack.c.h.b16 %v1031
    %v1410 = vunpack.c.l.b16 %v1032
    %v1411 = vunpack.c.h.b16 %v1032
    %v1412 = vunpack.c.l.b16 %v1033
    %v1413 = vunpack.c.h.b16 %v1033
    %v1414 = vunpack.c.l.b16 %v1034
    %v1415 = vunpack.c.h.b16 %v1034
    %v1416 = vunpack.c.l.b16 %v1035
    %v1417 = vunpack.c.h.b16 %v1035
    %v1418 = vunpack.c.l.b16 %v1036
    %v1419 = vunpack.c.h.b16 %v1036
    %v1420 = vunpack.c.l.b16 %v1037
    %v1421 = vunpack.c.h.b16 %v1037
    %v1422 = vunpack.c.l.b16 %v1038
    %v1423 = vunpack.c.h.b16 %v1038
    %v1424 = vunpack.c.l.b16 %v1039
    %v1425 = vunpack.c.h.b16 %v1039
    %v1426 = vunpack.c.l.b16 %v1040
    %v1427 = vunpack.c.h.b16 %v1040
    %v1428 = vunpack.c.l.b16 %v1041
    %v1429 = vunpack.c.h.b16 %v1041
    %v1430 = vunpack.c.l.b16 %v1042
    %v1431 = vunpack.c.h.b16 %v1042
    %v1432 = vunpack.c.l.b16 %v1043
    %v1433 = vunpack.c.h.b16 %v1043
    %v1434 = vunpack.c.l.b16 %v1044
    %v1435 = vunpack.c.h.b16 %v1044
    %v1436 = vunpack.c.l.b16 %v1045
    %v1437 = vunpack.c.h.b16 %v1045
    %v1438 = vunpack.c.l.b16 %v1046
    %v1439 = vunpack.c.h.b16 %v1046
    %v1440 = vunpack.c.l.b16 %v1047
    %v1441 = vunpack.c.h.b16 %v1047
    %v1442 = vunpack.c.l.b16 %v1048
    %v1443 = vunpack.c.h.b16 %v1048
    %v1444 = vunpack.c.l.b16 %v1049
    %v1445 = vunpack.c.h.b16 %v1049
    %v1446 = vunpack.c.l.b16 %v1050
    %v1447 = vunpack.c.h.b16 %v1050
    %v1448 = vunpack.c.l.b16 %v1051
    %v1449 = vunpack.c.h.b16 %v1051
    %v1450 = vunpack.c.l.b16 %v1052
    %v1451 = vunpack.c.h.b16 %v1052
    %v1452 = vunpack.c.l.b16 %v1053
    %v1453 = vunpack.c.h.b16 %v1053
    %v1454 = vunpack.c.l.b16 %v1054
    %v1455 = vunpack.c.h.b16 %v1054
    %v1456 = vunpack.c.l.b16 %v1055
    %v1457 = vunpack.c.h.b16 %v1055
    %v1458 = vunpack.c.l.b16 %v1056
    %v1459 = vunpack.c.h.b16 %v1056
    %v1460 = vunpack.c.l.b16 %v1057
    %v1461 = vunpack.c.h.b16 %v1057
    %v1462 = vunpack.c.l.b16 %v1058
    %v1463 = vunpack.c.h.b16 %v1058
    %v1464 = vpack.c.b16 %v1212, %v1208
    %v1465 = vpack.c.b16 %v1213, %v1209
    %v1466 = vpack.c.b16 %v1214, %v1210
    %v1467 = vpack.c.b16 %v1215, %v1211
    %v1468 = vpack.c.b16 %v1220, %v1216
    %v1469 = vpack.c.b16 %v1221, %v1217
    %v1470 = vpack.c.b16 %v1222, %v1218
    %v1471 = vpack.c.b16 %v1223, %v1219
    %v1472 = vpack.c.b16 %v1228, %v1224
    %v1473 = vpack.c.b16 %v1229, %v1225
    %v1474 = vpack.c.b16 %v1230, %v1226
    %v1475 = vpack.c.b16 %v1231, %v1227
    %v1476 = vpack.c.b16 %v1236, %v1232
    %v1477 = vpack.c.b16 %v1237, %v1233
    %v1478 = vpack.c.b16 %v1238, %v1234
    %v1479 = vpack.c.b16 %v1239, %v1235
    %v1480 = vpack.c.b16 %v1244, %v1240
    %v1481 = vpack.c.b16 %v1245, %v1241
    %v1482 = vpack.c.b16 %v1246, %v1242
    %v1483 = vpack.c.b16 %v1247, %v1243
    %v1484 = vpack.c.b16 %v1252, %v1248
    %v1485 = vpack.c.b16 %v1253, %v1249
    %v1486 = vpack.c.b16 %v1254, %v1250
    %v1487 = vpack.c.b16 %v1255, %v1251
    %v1488 = vpack.c.b16 %v1260, %v1256
    %v1489 = vpack.c.b16 %v1261, %v1257
    %v1490 = vpack.c.b16 %v1262, %v1258
    %v1491 = vpack.c.b16 %v1263, %v1259
    %v1492 = vpack.c.b16 %v1268, %v1264
    %v1493 = vpack.c.b16 %v1269, %v1265
    %v1494 = vpack.c.b16 %v1270, %v1266
    %v1495 = vpack.c.b16 %v1271, %v1267
    %v1496 = vpack.c.b16 %v1276, %v1272
    %v1497 = vpack.c.b16 %v1277, %v1273
    %v1498 = vpack.c.b16 %v1278, %v1274
    %v1499 = vpack.c.b16 %v1279, %v1275
    %v1500 = vpack.c.b16 %v1284, %v1280
    %v1501 = vpack.c.b16 %v1285, %v1281
    %v1502 = vpack.c.b16 %v1286, %v1282
    %v1503 = vpack.c.b16 %v1287, %v1283
    %v1504 = vpack.c.b16 %v1292, %v1288
    %v1505 = vpack.c.b16 %v1293, %v1289
    %v1506 = vpack.c.b16 %v1294, %v1290
    %v1507 = vpack.c.b16 %v1295, %v1291
    %v1508 = vpack.c.b16 %v1300, %v1296
    %v1509 = vpack.c.b16 %v1301, %v1297
    %v1510 = vpack.c.b16 %v1302, %v1298
    %v1511 = vpack.c.b16 %v1303, %v1299
    %v1512 = vpack.c.b16 %v1308, %v1304
    %v1513 = vpack.c.b16 %v1309, %v1305
    %v1514 = vpack.c.b16 %v1310, %v1306
    %v1515 = vpack.c.b16 %v1311, %v1307
    %v1516 = vpack.c.b16 %v1316, %v1312
    %v1517 = vpack.c.b16 %v1317, %v1313
    %v1518 = vpack.c.b16 %v1318, %v1314
    %v1519 = vpack.c.b16 %v1319, %v1315
    %v1520 = vpack.c.b16 %v1324, %v1320
    %v1521 = vpack.c.b16 %v1325, %v1321
    %v1522 = vpack.c.b16 %v1326, %v1322
    %v1523 = vpack.c.b16 %v1327, %v1323
    %v1524 = vpack.c.b16 %v1332, %v1328
    %v1525 = vpack.c.b16 %v1333, %v1329
    %v1526 = vpack.c.b16 %v1334, %v1330
    %v1527 = vpack.c.b16 %v1335, %v1331
    %v1528 = vpack.c.b16 %v1340, %v1336
    %v1529 = vpack.c.b16 %v1341, %v1337
    %v1530 = vpack.c.b16 %v1342, %v1338
    %v1531 = vpack.c.b16 %v1343, %v1339
    %v1532 = vpack.c.b16 %v1348, %v1344
    %v1533 = vpack.c.b16 %v1349, %v1345
    %v1534 = vpack.c.b16 %v1350, %v1346
    %v1535 = vpack.c.b16 %v1351, %v1347
    %v1536 = vpack.c.b16 %v1356, %v1352
    %v1537 = vpack.c.b16 %v1357, %v1353
    %v1538 = vpack.c.b16 %v1358, %v1354
    %v1539 = vpack.c.b16 %v1359, %v1355
    %v1540 = vpack.c.b16 %v1364, %v1360
    %v1541 = vpack.c.b16 %v1365, %v1361
    %v1542 = vpack.c.b16 %v1366, %v1362
    %v1543 = vpack.c.b16 %v1367, %v1363
    %v1544 = vpack.c.b16 %v1372, %v1368
    %v1545 = vpack.c.b16 %v1373, %v1369
    %v1546 = vpack.c.b16 %v1374, %v1370
    %v1547 = vpack.c.b16 %v1375, %v1371
    %v1548 = vpack.c.b16 %v1380, %v1376
    %v1549 = vpack.c.b16 %v1381, %v1377
    %v1550 = vpack.c.b16 %v1382, %v1378
    %v1551 = vpack.c.b16 %v1383, %v1379
    %v1552 = vpack.c.b16 %v1388, %v1384
    %v1553 = vpack.c.b16 %v1389, %v1385
    %v1554 = vpack.c.b16 %v1390, %v1386
    %v1555 = vpack.c.b16 %v1391, %v1387
    %v1556 = vpack.c.b16 %v1396, %v1392
    %v1557 = vpack.c.b16 %v1397, %v1393
    %v1558 = vpack.c.b16 %v1398, %v1394
    %v1559 = vpack.c.b16 %v1399, %v1395
    %v1560 = vpack.c.b16 %v1404, %v1400
    %v1561 = vpack.c.b16 %v1405, %v1401
    %v1562 = vpack.c.b16 %v1406, %v1402
    %v1563 = vpack.c.b16 %v1407, %v1403
    %v1564 = vpack.c.b16 %v1412, %v1408
    %v1565 = vpack.c.b16 %v1413, %v1409
    %v1566 = vpack.c.b16 %v1414, %v1410
    %v1567 = vpack.c.b16 %v1415, %v1411
    %v1568 = vpack.c.b16 %v1420, %v1416
    %v1569 = vpack.c.b16 %v1421, %v1417
    %v1570 = vpack.c.b16 %v1422, %v1418
    %v1571 = vpack.c.b16 %v1423, %v1419
    %v1572 = vpack.c.b16 %v1428, %v1424
    %v1573 = vpack.c.b16 %v1429, %v1425
    %v1574 = vpack.c.b16 %v1430, %v1426
    %v1575 = vpack.c.b16 %v1431, %v1427
    %v1576 = vpack.c.b16 %v1436, %v1432
    %v1577 = vpack.c.b16 %v1437, %v1433
    %v1578 = vpack.c.b16 %v1438, %v1434
    %v1579 = vpack.c.b16 %v1439, %v1435
    %v1580 = vpack.c.b16 %v1444, %v1440
    %v1581 = vpack.c.b16 %v1445, %v1441
    %v1582 = vpack.c.b16 %v1446, %v1442
    %v1583 = vpack.c.b16 %v1447, %v1443
    %v1584 = vpack.c.b16 %v1452, %v1448
    %v1585 = vpack.c.b16 %v1453, %v1449
    %v1586 = vpack.c.b16 %v1454, %v1450
    %v1587 = vpack.c.b16 %v1455, %v1451
    %v1588 = vpack.c.b16 %v1460, %v1456
    %v1589 = vpack.c.b16 %v1461, %v1457
    %v1590 = vpack.c.b16 %v1462, %v1458
    %v1591 = vpack.c.b16 %v1463, %v1459
    %1720 = vmatprep.subr.bf16.mxu0 %v1493
    %1721 = vmatpush1.bf16.msra.mxu0 %v1492
    %1722 = vmatprep.subr.bf16.mxu0 %v1489
    %1723 = vmatpush1.bf16.msra.mxu0 %v1488
    %1724 = vmatprep.subr.bf16.mxu0 %v1485
    %1725 = vmatpush1.bf16.msra.mxu0 %v1484
    %1726 = vmatprep.subr.bf16.mxu0 %v1481
    %1727 = vmatpush1.bf16.msra.mxu0 %v1480
    %1728 = vmatprep.subr.bf16.mxu0 %v1477
    %1729 = vmatpush1.bf16.msra.mxu0 %v1476
    %1730 = vmatprep.subr.bf16.mxu0 %v1473
    %1731 = vmatpush1.bf16.msra.mxu0 %v1472
    %1732 = vmatprep.subr.bf16.mxu0 %v1469
    %1733 = vmatpush1.bf16.msra.mxu0 %v1468
    %1734 = vmatprep.subr.bf16.mxu0 %v1465
    %1735 = vmatpush1.bf16.msra.mxu0 %v1464
    %1736 = vmatprep.subr.bf16.mxu0 %v1525
    %1737 = vmatpush2.bf16.msra.mxu0 %v1524
    %1738 = vmatprep.subr.bf16.mxu0 %v1521
    %1739 = vmatpush2.bf16.msra.mxu0 %v1520
    %1740 = vmatprep.subr.bf16.mxu0 %v1517
    %1741 = vmatpush2.bf16.msra.mxu0 %v1516
    %1742 = vmatprep.subr.bf16.mxu0 %v1513
    %1743 = vmatpush2.bf16.msra.mxu0 %v1512
    %1744 = vmatprep.subr.bf16.mxu0 %v1509
    %1745 = vmatpush2.bf16.msra.mxu0 %v1508
    %1746 = vmatprep.subr.bf16.mxu0 %v1505
    %1747 = vmatpush2.bf16.msra.mxu0 %v1504
    %1748 = vmatprep.subr.bf16.mxu0 %v1501
    %1749 = vmatpush2.bf16.msra.mxu0 %v1500
    %1750 = vmatprep.subr.bf16.mxu0 %v1497
    %1751 = vmatpush2.bf16.msra.mxu0 %v1496
    %1752 = vmatprep.mubr.bf16.mxu0 %v868
    %1753 = vmatmul.mubr.bf16.gmra.mxu0 %v867
    %v1754 = vpop.f32.mrf.mxu0
    %v1755 = vadd.f32 %v1063, %v1754
    %v1756 = vpop.f32.mrf.mxu0
    %v1757 = vadd.f32 %v1067, %v1756
    %v1758 = vpop.f32.mrf.mxu0
    %v1759 = vadd.f32 %v1063, %v1758
    %v1760 = vpop.f32.mrf.mxu0
    %v1761 = vadd.f32 %v1067, %v1760
    %1762 = vmatprep.mubr.bf16.mxu0 %v872
    %1763 = vmatmul.mubr.bf16.gmra.mxu0 %v871
    %v1764 = vpop.f32.mrf.mxu0
    %v1765 = vadd.f32 %v1063, %v1764
    %v1766 = vpop.f32.mrf.mxu0
    %v1767 = vadd.f32 %v1067, %v1766
    %v1768 = vpop.f32.mrf.mxu0
    %v1769 = vadd.f32 %v1063, %v1768
    %v1770 = vpop.f32.mrf.mxu0
    %v1771 = vadd.f32 %v1067, %v1770
    %1772 = vmatprep.mubr.bf16.mxu0 %v876
    %1773 = vmatmul.mubr.bf16.gmra.mxu0 %v875
    %v1774 = vpop.f32.mrf.mxu0
    %v1775 = vadd.f32 %v1063, %v1774
    %v1776 = vpop.f32.mrf.mxu0
    %v1777 = vadd.f32 %v1067, %v1776
    %v1778 = vpop.f32.mrf.mxu0
    %v1779 = vadd.f32 %v1063, %v1778
    %v1780 = vpop.f32.mrf.mxu0
    %v1781 = vadd.f32 %v1067, %v1780
    %1782 = vmatprep.mubr.bf16.mxu0 %v880
    %1783 = vmatmul.mubr.bf16.gmra.mxu0 %v879
    %v1784 = vpop.f32.mrf.mxu0
    %v1785 = vadd.f32 %v1063, %v1784
    %v1786 = vpop.f32.mrf.mxu0
    %v1787 = vadd.f32 %v1067, %v1786
    %v1788 = vpop.f32.mrf.mxu0
    %v1789 = vadd.f32 %v1063, %v1788
    %v1790 = vpop.f32.mrf.mxu0
    %v1791 = vadd.f32 %v1067, %v1790
    %1792 = vmatprep.mubr.bf16.mxu0 %v884
    %1793 = vmatmul.mubr.bf16.gmra.mxu0 %v883
    %v1794 = vpop.f32.mrf.mxu0
    %v1795 = vadd.f32 %v1063, %v1794
    %v1796 = vpop.f32.mrf.mxu0
    %v1797 = vadd.f32 %v1067, %v1796
    %v1798 = vpop.f32.mrf.mxu0
    %v1799 = vadd.f32 %v1063, %v1798
    %v1800 = vpop.f32.mrf.mxu0
    %v1801 = vadd.f32 %v1067, %v1800
    %1802 = vmatprep.mubr.bf16.mxu0 %v888
    %1803 = vmatmul.mubr.bf16.gmra.mxu0 %v887
    %v1804 = vpop.f32.mrf.mxu0
    %v1805 = vadd.f32 %v1063, %v1804
    %v1806 = vpop.f32.mrf.mxu0
    %v1807 = vadd.f32 %v1067, %v1806
    %v1808 = vpop.f32.mrf.mxu0
    %v1809 = vadd.f32 %v1063, %v1808
    %v1810 = vpop.f32.mrf.mxu0
    %v1811 = vadd.f32 %v1067, %v1810
    %1812 = vmatprep.mubr.bf16.mxu0 %v892
    %1813 = vmatmul.mubr.bf16.gmra.mxu0 %v891
    %v1814 = vpop.f32.mrf.mxu0
    %v1815 = vadd.f32 %v1063, %v1814
    %v1816 = vpop.f32.mrf.mxu0
    %v1817 = vadd.f32 %v1067, %v1816
    %v1818 = vpop.f32.mrf.mxu0
    %v1819 = vadd.f32 %v1063, %v1818
    %v1820 = vpop.f32.mrf.mxu0
    %v1821 = vadd.f32 %v1067, %v1820
    %1822 = vmatprep.mubr.bf16.mxu0 %v896
    %1823 = vmatmul.mubr.bf16.gmra.mxu0 %v895
    %v1824 = vpop.f32.mrf.mxu0
    %v1825 = vadd.f32 %v1063, %v1824
    %v1826 = vpop.f32.mrf.mxu0
    %v1827 = vadd.f32 %v1067, %v1826
    %v1828 = vpop.f32.mrf.mxu0
    %v1829 = vadd.f32 %v1063, %v1828
    %v1830 = vpop.f32.mrf.mxu0
    %v1831 = vadd.f32 %v1067, %v1830
    %1832 = vmatprep.mubr.bf16.mxu0 %v900
    %1833 = vmatmul.mubr.bf16.gmra.mxu0 %v899
    %v1834 = vpop.f32.mrf.mxu0
    %v1835 = vadd.f32 %v1063, %v1834
    %v1836 = vpop.f32.mrf.mxu0
    %v1837 = vadd.f32 %v1067, %v1836
    %v1838 = vpop.f32.mrf.mxu0
    %v1839 = vadd.f32 %v1063, %v1838
    %v1840 = vpop.f32.mrf.mxu0
    %v1841 = vadd.f32 %v1067, %v1840
    %1842 = vmatprep.mubr.bf16.mxu0 %v904
    %1843 = vmatmul.mubr.bf16.gmra.mxu0 %v903
    %v1844 = vpop.f32.mrf.mxu0
    %v1845 = vadd.f32 %v1063, %v1844
    %v1846 = vpop.f32.mrf.mxu0
    %v1847 = vadd.f32 %v1067, %v1846
    %v1848 = vpop.f32.mrf.mxu0
    %v1849 = vadd.f32 %v1063, %v1848
    %v1850 = vpop.f32.mrf.mxu0
    %v1851 = vadd.f32 %v1067, %v1850
    %1852 = vmatprep.mubr.bf16.mxu0 %v908
    %1853 = vmatmul.mubr.bf16.gmra.mxu0 %v907
    %v1854 = vpop.f32.mrf.mxu0
    %v1855 = vadd.f32 %v1063, %v1854
    %v1856 = vpop.f32.mrf.mxu0
    %v1857 = vadd.f32 %v1067, %v1856
    %v1858 = vpop.f32.mrf.mxu0
    %v1859 = vadd.f32 %v1063, %v1858
    %v1860 = vpop.f32.mrf.mxu0
    %v1861 = vadd.f32 %v1067, %v1860
    %1862 = vmatprep.mubr.bf16.mxu0 %v912
    %1863 = vmatmul.mubr.bf16.gmra.mxu0 %v911
    %v1864 = vpop.f32.mrf.mxu0
    %v1865 = vadd.f32 %v1063, %v1864
    %v1866 = vpop.f32.mrf.mxu0
    %v1867 = vadd.f32 %v1067, %v1866
    %v1868 = vpop.f32.mrf.mxu0
    %v1869 = vadd.f32 %v1063, %v1868
    %v1870 = vpop.f32.mrf.mxu0
    %v1871 = vadd.f32 %v1067, %v1870
    %1872 = vmatprep.mubr.bf16.mxu0 %v916
    %1873 = vmatmul.mubr.bf16.gmra.mxu0 %v915
    %v1874 = vpop.f32.mrf.mxu0
    %v1875 = vadd.f32 %v1063, %v1874
    %v1876 = vpop.f32.mrf.mxu0
    %v1877 = vadd.f32 %v1067, %v1876
    %v1878 = vpop.f32.mrf.mxu0
    %v1879 = vadd.f32 %v1063, %v1878
    %v1880 = vpop.f32.mrf.mxu0
    %v1881 = vadd.f32 %v1067, %v1880
    %1882 = vmatprep.mubr.bf16.mxu0 %v920
    %1883 = vmatmul.mubr.bf16.gmra.mxu0 %v919
    %v1884 = vpop.f32.mrf.mxu0
    %v1885 = vadd.f32 %v1063, %v1884
    %v1886 = vpop.f32.mrf.mxu0
    %v1887 = vadd.f32 %v1067, %v1886
    %v1888 = vpop.f32.mrf.mxu0
    %v1889 = vadd.f32 %v1063, %v1888
    %v1890 = vpop.f32.mrf.mxu0
    %v1891 = vadd.f32 %v1067, %v1890
    %1892 = vmatprep.mubr.bf16.mxu0 %v924
    %1893 = vmatmul.mubr.bf16.gmra.mxu0 %v923
    %v1894 = vpop.f32.mrf.mxu0
    %v1895 = vadd.f32 %v1063, %v1894
    %v1896 = vpop.f32.mrf.mxu0
    %v1897 = vadd.f32 %v1067, %v1896
    %v1898 = vpop.f32.mrf.mxu0
    %v1899 = vadd.f32 %v1063, %v1898
    %v1900 = vpop.f32.mrf.mxu0
    %v1901 = vadd.f32 %v1067, %v1900
    %1902 = vmatprep.mubr.bf16.mxu0 %v928
    %1903 = vmatmul.mubr.bf16.gmra.mxu0 %v927
    %v1904 = vpop.f32.mrf.mxu0
    %v1905 = vadd.f32 %v1063, %v1904
    %v1906 = vpop.f32.mrf.mxu0
    %v1907 = vadd.f32 %v1067, %v1906
    %v1908 = vpop.f32.mrf.mxu0
    %v1909 = vadd.f32 %v1063, %v1908
    %v1910 = vpop.f32.mrf.mxu0
    %v1911 = vadd.f32 %v1067, %v1910
    %1912 = vdwg.mxu0
    %1913 = vmatprep.subr.bf16.mxu0 %v1557
    %1914 = vmatpush1.bf16.msra.mxu0 %v1556
    %1915 = vmatprep.subr.bf16.mxu0 %v1553
    %1916 = vmatpush1.bf16.msra.mxu0 %v1552
    %1917 = vmatprep.subr.bf16.mxu0 %v1549
    %1918 = vmatpush1.bf16.msra.mxu0 %v1548
    %1919 = vmatprep.subr.bf16.mxu0 %v1545
    %1920 = vmatpush1.bf16.msra.mxu0 %v1544
    %1921 = vmatprep.subr.bf16.mxu0 %v1541
    %1922 = vmatpush1.bf16.msra.mxu0 %v1540
    %1923 = vmatprep.subr.bf16.mxu0 %v1537
    %1924 = vmatpush1.bf16.msra.mxu0 %v1536
    %1925 = vmatprep.subr.bf16.mxu0 %v1533
    %1926 = vmatpush1.bf16.msra.mxu0 %v1532
    %1927 = vmatprep.subr.bf16.mxu0 %v1529
    %1928 = vmatpush1.bf16.msra.mxu0 %v1528
    %1929 = vmatprep.subr.bf16.mxu0 %v1589
    %1930 = vmatpush2.bf16.msra.mxu0 %v1588
    %1931 = vmatprep.subr.bf16.mxu0 %v1585
    %1932 = vmatpush2.bf16.msra.mxu0 %v1584
    %1933 = vmatprep.subr.bf16.mxu0 %v1581
    %1934 = vmatpush2.bf16.msra.mxu0 %v1580
    %1935 = vmatprep.subr.bf16.mxu0 %v1577
    %1936 = vmatpush2.bf16.msra.mxu0 %v1576
    %1937 = vmatprep.subr.bf16.mxu0 %v1573
    %1938 = vmatpush2.bf16.msra.mxu0 %v1572
    %1939 = vmatprep.subr.bf16.mxu0 %v1569
    %1940 = vmatpush2.bf16.msra.mxu0 %v1568
    %1941 = vmatprep.subr.bf16.mxu0 %v1565
    %1942 = vmatpush2.bf16.msra.mxu0 %v1564
    %1943 = vmatprep.subr.bf16.mxu0 %v1561
    %1944 = vmatpush2.bf16.msra.mxu0 %v1560
    %1945 = vmatprep.mubr.bf16.mxu0 %v870
    %1946 = vmatmul.mubr.bf16.gmra.mxu0 %v869
    %v1947 = vpop.f32.mrf.mxu0
    %v1948 = vadd.f32 %v1755, %v1947
    %v1949 = vpop.f32.mrf.mxu0
    %v1950 = vadd.f32 %v1757, %v1949
    %v1951 = vpop.f32.mrf.mxu0
    %v1952 = vadd.f32 %v1759, %v1951
    %v1953 = vpop.f32.mrf.mxu0
    %v1954 = vadd.f32 %v1761, %v1953
    %1955 = vmatprep.mubr.bf16.mxu0 %v874
    %1956 = vmatmul.mubr.bf16.gmra.mxu0 %v873
    %v1957 = vpop.f32.mrf.mxu0
    %v1958 = vadd.f32 %v1765, %v1957
    %v1959 = vpop.f32.mrf.mxu0
    %v1960 = vadd.f32 %v1767, %v1959
    %v1961 = vpop.f32.mrf.mxu0
    %v1962 = vadd.f32 %v1769, %v1961
    %v1963 = vpop.f32.mrf.mxu0
    %v1964 = vadd.f32 %v1771, %v1963
    %1965 = vmatprep.mubr.bf16.mxu0 %v878
    %1966 = vmatmul.mubr.bf16.gmra.mxu0 %v877
    %v1967 = vpop.f32.mrf.mxu0
    %v1968 = vadd.f32 %v1775, %v1967
    %v1969 = vpop.f32.mrf.mxu0
    %v1970 = vadd.f32 %v1777, %v1969
    %v1971 = vpop.f32.mrf.mxu0
    %v1972 = vadd.f32 %v1779, %v1971
    %v1973 = vpop.f32.mrf.mxu0
    %v1974 = vadd.f32 %v1781, %v1973
    %1975 = vmatprep.mubr.bf16.mxu0 %v882
    %1976 = vmatmul.mubr.bf16.gmra.mxu0 %v881
    %v1977 = vpop.f32.mrf.mxu0
    %v1978 = vadd.f32 %v1785, %v1977
    %v1979 = vpop.f32.mrf.mxu0
    %v1980 = vadd.f32 %v1787, %v1979
    %v1981 = vpop.f32.mrf.mxu0
    %v1982 = vadd.f32 %v1789, %v1981
    %v1983 = vpop.f32.mrf.mxu0
    %v1984 = vadd.f32 %v1791, %v1983
    %1985 = vmatprep.mubr.bf16.mxu0 %v886
    %1986 = vmatmul.mubr.bf16.gmra.mxu0 %v885
    %v1987 = vpop.f32.mrf.mxu0
    %v1988 = vadd.f32 %v1795, %v1987
    %v1989 = vpop.f32.mrf.mxu0
    %v1990 = vadd.f32 %v1797, %v1989
    %v1991 = vpop.f32.mrf.mxu0
    %v1992 = vadd.f32 %v1799, %v1991
    %v1993 = vpop.f32.mrf.mxu0
    %v1994 = vadd.f32 %v1801, %v1993
    %1995 = vmatprep.mubr.bf16.mxu0 %v890
    %1996 = vmatmul.mubr.bf16.gmra.mxu0 %v889
    %v1997 = vpop.f32.mrf.mxu0
    %v1998 = vadd.f32 %v1805, %v1997
    %v1999 = vpop.f32.mrf.mxu0
    %v2000 = vadd.f32 %v1807, %v1999
    %v2001 = vpop.f32.mrf.mxu0
    %v2002 = vadd.f32 %v1809, %v2001
    %v2003 = vpop.f32.mrf.mxu0
    %v2004 = vadd.f32 %v1811, %v2003
    %2005 = vmatprep.mubr.bf16.mxu0 %v894
    %2006 = vmatmul.mubr.bf16.gmra.mxu0 %v893
    %v2007 = vpop.f32.mrf.mxu0
    %v2008 = vadd.f32 %v1815, %v2007
    %v2009 = vpop.f32.mrf.mxu0
    %v2010 = vadd.f32 %v1817, %v2009
    %v2011 = vpop.f32.mrf.mxu0
    %v2012 = vadd.f32 %v1819, %v2011
    %v2013 = vpop.f32.mrf.mxu0
    %v2014 = vadd.f32 %v1821, %v2013
    %2015 = vmatprep.mubr.bf16.mxu0 %v898
    %2016 = vmatmul.mubr.bf16.gmra.mxu0 %v897
    %v2017 = vpop.f32.mrf.mxu0
    %v2018 = vadd.f32 %v1825, %v2017
    %v2019 = vpop.f32.mrf.mxu0
    %v2020 = vadd.f32 %v1827, %v2019
    %v2021 = vpop.f32.mrf.mxu0
    %v2022 = vadd.f32 %v1829, %v2021
    %v2023 = vpop.f32.mrf.mxu0
    %v2024 = vadd.f32 %v1831, %v2023
    %2025 = vmatprep.mubr.bf16.mxu0 %v902
    %2026 = vmatmul.mubr.bf16.gmra.mxu0 %v901
    %v2027 = vpop.f32.mrf.mxu0
    %v2028 = vadd.f32 %v1835, %v2027
    %v2029 = vpop.f32.mrf.mxu0
    %v2030 = vadd.f32 %v1837, %v2029
    %v2031 = vpop.f32.mrf.mxu0
    %v2032 = vadd.f32 %v1839, %v2031
    %v2033 = vpop.f32.mrf.mxu0
    %v2034 = vadd.f32 %v1841, %v2033
    %2035 = vmatprep.mubr.bf16.mxu0 %v906
    %2036 = vmatmul.mubr.bf16.gmra.mxu0 %v905
    %v2037 = vpop.f32.mrf.mxu0
    %v2038 = vadd.f32 %v1845, %v2037
    %v2039 = vpop.f32.mrf.mxu0
    %v2040 = vadd.f32 %v1847, %v2039
    %v2041 = vpop.f32.mrf.mxu0
    %v2042 = vadd.f32 %v1849, %v2041
    %v2043 = vpop.f32.mrf.mxu0
    %v2044 = vadd.f32 %v1851, %v2043
    %2045 = vmatprep.mubr.bf16.mxu0 %v910
    %2046 = vmatmul.mubr.bf16.gmra.mxu0 %v909
    %v2047 = vpop.f32.mrf.mxu0
    %v2048 = vadd.f32 %v1855, %v2047
    %v2049 = vpop.f32.mrf.mxu0
    %v2050 = vadd.f32 %v1857, %v2049
    %v2051 = vpop.f32.mrf.mxu0
    %v2052 = vadd.f32 %v1859, %v2051
    %v2053 = vpop.f32.mrf.mxu0
    %v2054 = vadd.f32 %v1861, %v2053
    %2055 = vmatprep.mubr.bf16.mxu0 %v914
    %2056 = vmatmul.mubr.bf16.gmra.mxu0 %v913
    %v2057 = vpop.f32.mrf.mxu0
    %v2058 = vadd.f32 %v1865, %v2057
    %v2059 = vpop.f32.mrf.mxu0
    %v2060 = vadd.f32 %v1867, %v2059
    %v2061 = vpop.f32.mrf.mxu0
    %v2062 = vadd.f32 %v1869, %v2061
    %v2063 = vpop.f32.mrf.mxu0
    %v2064 = vadd.f32 %v1871, %v2063
    %2065 = vmatprep.mubr.bf16.mxu0 %v918
    %2066 = vmatmul.mubr.bf16.gmra.mxu0 %v917
    %v2067 = vpop.f32.mrf.mxu0
    %v2068 = vadd.f32 %v1875, %v2067
    %v2069 = vpop.f32.mrf.mxu0
    %v2070 = vadd.f32 %v1877, %v2069
    %v2071 = vpop.f32.mrf.mxu0
    %v2072 = vadd.f32 %v1879, %v2071
    %v2073 = vpop.f32.mrf.mxu0
    %v2074 = vadd.f32 %v1881, %v2073
    %2075 = vmatprep.mubr.bf16.mxu0 %v922
    %2076 = vmatmul.mubr.bf16.gmra.mxu0 %v921
    %v2077 = vpop.f32.mrf.mxu0
    %v2078 = vadd.f32 %v1885, %v2077
    %v2079 = vpop.f32.mrf.mxu0
    %v2080 = vadd.f32 %v1887, %v2079
    %v2081 = vpop.f32.mrf.mxu0
    %v2082 = vadd.f32 %v1889, %v2081
    %v2083 = vpop.f32.mrf.mxu0
    %v2084 = vadd.f32 %v1891, %v2083
    %2085 = vmatprep.mubr.bf16.mxu0 %v926
    %2086 = vmatmul.mubr.bf16.gmra.mxu0 %v925
    %v2087 = vpop.f32.mrf.mxu0
    %v2088 = vadd.f32 %v1895, %v2087
    %v2089 = vpop.f32.mrf.mxu0
    %v2090 = vadd.f32 %v1897, %v2089
    %v2091 = vpop.f32.mrf.mxu0
    %v2092 = vadd.f32 %v1899, %v2091
    %v2093 = vpop.f32.mrf.mxu0
    %v2094 = vadd.f32 %v1901, %v2093
    %2095 = vmatprep.mubr.bf16.mxu0 %v930
    %2096 = vmatmul.mubr.bf16.gmra.mxu0 %v929
    %v2097 = vpop.f32.mrf.mxu0
    %v2098 = vadd.f32 %v1905, %v2097
    %v2099 = vpop.f32.mrf.mxu0
    %v2100 = vadd.f32 %v1907, %v2099
    %v2101 = vpop.f32.mrf.mxu0
    %v2102 = vadd.f32 %v1909, %v2101
    %v2103 = vpop.f32.mrf.mxu0
    %v2104 = vadd.f32 %v1911, %v2103
    %2105 = vdwg.mxu0
    %2106 = vmatprep.subr.bf16.mxu0 %v1495
    %2107 = vmatpush1.bf16.msra.mxu0 %v1494
    %2108 = vmatprep.subr.bf16.mxu0 %v1491
    %2109 = vmatpush1.bf16.msra.mxu0 %v1490
    %2110 = vmatprep.subr.bf16.mxu0 %v1487
    %2111 = vmatpush1.bf16.msra.mxu0 %v1486
    %2112 = vmatprep.subr.bf16.mxu0 %v1483
    %2113 = vmatpush1.bf16.msra.mxu0 %v1482
    %2114 = vmatprep.subr.bf16.mxu0 %v1479
    %2115 = vmatpush1.bf16.msra.mxu0 %v1478
    %2116 = vmatprep.subr.bf16.mxu0 %v1475
    %2117 = vmatpush1.bf16.msra.mxu0 %v1474
    %2118 = vmatprep.subr.bf16.mxu0 %v1471
    %2119 = vmatpush1.bf16.msra.mxu0 %v1470
    %2120 = vmatprep.subr.bf16.mxu0 %v1467
    %2121 = vmatpush1.bf16.msra.mxu0 %v1466
    %2122 = vmatprep.subr.bf16.mxu0 %v1527
    %2123 = vmatpush2.bf16.msra.mxu0 %v1526
    %2124 = vmatprep.subr.bf16.mxu0 %v1523
    %2125 = vmatpush2.bf16.msra.mxu0 %v1522
    %2126 = vmatprep.subr.bf16.mxu0 %v1519
    %2127 = vmatpush2.bf16.msra.mxu0 %v1518
    %2128 = vmatprep.subr.bf16.mxu0 %v1515
    %2129 = vmatpush2.bf16.msra.mxu0 %v1514
    %2130 = vmatprep.subr.bf16.mxu0 %v1511
    %2131 = vmatpush2.bf16.msra.mxu0 %v1510
    %2132 = vmatprep.subr.bf16.mxu0 %v1507
    %2133 = vmatpush2.bf16.msra.mxu0 %v1506
    %2134 = vmatprep.subr.bf16.mxu0 %v1503
    %2135 = vmatpush2.bf16.msra.mxu0 %v1502
    %2136 = vmatprep.subr.bf16.mxu0 %v1499
    %2137 = vmatpush2.bf16.msra.mxu0 %v1498
    %2138 = vmatprep.mubr.bf16.mxu0 %v868
    %2139 = vmatmul.mubr.bf16.gmra.mxu0 %v867
    %v2140 = vpop.f32.mrf.mxu0
    %v2141 = vadd.f32 %v1071, %v2140
    %v2142 = vpop.f32.mrf.mxu0
    %v2143 = vadd.f32 %v1075, %v2142
    %v2144 = vpop.f32.mrf.mxu0
    %v2145 = vadd.f32 %v1071, %v2144
    %v2146 = vpop.f32.mrf.mxu0
    %v2147 = vadd.f32 %v1075, %v2146
    %2148 = vmatprep.mubr.bf16.mxu0 %v872
    %2149 = vmatmul.mubr.bf16.gmra.mxu0 %v871
    %v2150 = vpop.f32.mrf.mxu0
    %v2151 = vadd.f32 %v1071, %v2150
    %v2152 = vpop.f32.mrf.mxu0
    %v2153 = vadd.f32 %v1075, %v2152
    %v2154 = vpop.f32.mrf.mxu0
    %v2155 = vadd.f32 %v1071, %v2154
    %v2156 = vpop.f32.mrf.mxu0
    %v2157 = vadd.f32 %v1075, %v2156
    %2158 = vmatprep.mubr.bf16.mxu0 %v876
    %2159 = vmatmul.mubr.bf16.gmra.mxu0 %v875
    %v2160 = vpop.f32.mrf.mxu0
    %v2161 = vadd.f32 %v1071, %v2160
    %v2162 = vpop.f32.mrf.mxu0
    %v2163 = vadd.f32 %v1075, %v2162
    %v2164 = vpop.f32.mrf.mxu0
    %v2165 = vadd.f32 %v1071, %v2164
    %v2166 = vpop.f32.mrf.mxu0
    %v2167 = vadd.f32 %v1075, %v2166
    %2168 = vmatprep.mubr.bf16.mxu0 %v880
    %2169 = vmatmul.mubr.bf16.gmra.mxu0 %v879
    %v2170 = vpop.f32.mrf.mxu0
    %v2171 = vadd.f32 %v1071, %v2170
    %v2172 = vpop.f32.mrf.mxu0
    %v2173 = vadd.f32 %v1075, %v2172
    %v2174 = vpop.f32.mrf.mxu0
    %v2175 = vadd.f32 %v1071, %v2174
    %v2176 = vpop.f32.mrf.mxu0
    %v2177 = vadd.f32 %v1075, %v2176
    %2178 = vmatprep.mubr.bf16.mxu0 %v884
    %2179 = vmatmul.mubr.bf16.gmra.mxu0 %v883
    %v2180 = vpop.f32.mrf.mxu0
    %v2181 = vadd.f32 %v1071, %v2180
    %v2182 = vpop.f32.mrf.mxu0
    %v2183 = vadd.f32 %v1075, %v2182
    %v2184 = vpop.f32.mrf.mxu0
    %v2185 = vadd.f32 %v1071, %v2184
    %v2186 = vpop.f32.mrf.mxu0
    %v2187 = vadd.f32 %v1075, %v2186
    %2188 = vmatprep.mubr.bf16.mxu0 %v888
    %2189 = vmatmul.mubr.bf16.gmra.mxu0 %v887
    %v2190 = vpop.f32.mrf.mxu0
    %v2191 = vadd.f32 %v1071, %v2190
    %v2192 = vpop.f32.mrf.mxu0
    %v2193 = vadd.f32 %v1075, %v2192
    %v2194 = vpop.f32.mrf.mxu0
    %v2195 = vadd.f32 %v1071, %v2194
    %v2196 = vpop.f32.mrf.mxu0
    %v2197 = vadd.f32 %v1075, %v2196
    %2198 = vmatprep.mubr.bf16.mxu0 %v892
    %2199 = vmatmul.mubr.bf16.gmra.mxu0 %v891
    %v2200 = vpop.f32.mrf.mxu0
    %v2201 = vadd.f32 %v1071, %v2200
    %v2202 = vpop.f32.mrf.mxu0
    %v2203 = vadd.f32 %v1075, %v2202
    %v2204 = vpop.f32.mrf.mxu0
    %v2205 = vadd.f32 %v1071, %v2204
    %v2206 = vpop.f32.mrf.mxu0
    %v2207 = vadd.f32 %v1075, %v2206
    %2208 = vmatprep.mubr.bf16.mxu0 %v896
    %2209 = vmatmul.mubr.bf16.gmra.mxu0 %v895
    %v2210 = vpop.f32.mrf.mxu0
    %v2211 = vadd.f32 %v1071, %v2210
    %v2212 = vpop.f32.mrf.mxu0
    %v2213 = vadd.f32 %v1075, %v2212
    %v2214 = vpop.f32.mrf.mxu0
    %v2215 = vadd.f32 %v1071, %v2214
    %v2216 = vpop.f32.mrf.mxu0
    %v2217 = vadd.f32 %v1075, %v2216
    %2218 = vmatprep.mubr.bf16.mxu0 %v900
    %2219 = vmatmul.mubr.bf16.gmra.mxu0 %v899
    %v2220 = vpop.f32.mrf.mxu0
    %v2221 = vadd.f32 %v1071, %v2220
    %v2222 = vpop.f32.mrf.mxu0
    %v2223 = vadd.f32 %v1075, %v2222
    %v2224 = vpop.f32.mrf.mxu0
    %v2225 = vadd.f32 %v1071, %v2224
    %v2226 = vpop.f32.mrf.mxu0
    %v2227 = vadd.f32 %v1075, %v2226
    %2228 = vmatprep.mubr.bf16.mxu0 %v904
    %2229 = vmatmul.mubr.bf16.gmra.mxu0 %v903
    %v2230 = vpop.f32.mrf.mxu0
    %v2231 = vadd.f32 %v1071, %v2230
    %v2232 = vpop.f32.mrf.mxu0
    %v2233 = vadd.f32 %v1075, %v2232
    %v2234 = vpop.f32.mrf.mxu0
    %v2235 = vadd.f32 %v1071, %v2234
    %v2236 = vpop.f32.mrf.mxu0
    %v2237 = vadd.f32 %v1075, %v2236
    %2238 = vmatprep.mubr.bf16.mxu0 %v908
    %2239 = vmatmul.mubr.bf16.gmra.mxu0 %v907
    %v2240 = vpop.f32.mrf.mxu0
    %v2241 = vadd.f32 %v1071, %v2240
    %v2242 = vpop.f32.mrf.mxu0
    %v2243 = vadd.f32 %v1075, %v2242
    %v2244 = vpop.f32.mrf.mxu0
    %v2245 = vadd.f32 %v1071, %v2244
    %v2246 = vpop.f32.mrf.mxu0
    %v2247 = vadd.f32 %v1075, %v2246
    %2248 = vmatprep.mubr.bf16.mxu0 %v912
    %2249 = vmatmul.mubr.bf16.gmra.mxu0 %v911
    %v2250 = vpop.f32.mrf.mxu0
    %v2251 = vadd.f32 %v1071, %v2250
    %v2252 = vpop.f32.mrf.mxu0
    %v2253 = vadd.f32 %v1075, %v2252
    %v2254 = vpop.f32.mrf.mxu0
    %v2255 = vadd.f32 %v1071, %v2254
    %v2256 = vpop.f32.mrf.mxu0
    %v2257 = vadd.f32 %v1075, %v2256
    %2258 = vmatprep.mubr.bf16.mxu0 %v916
    %2259 = vmatmul.mubr.bf16.gmra.mxu0 %v915
    %v2260 = vpop.f32.mrf.mxu0
    %v2261 = vadd.f32 %v1071, %v2260
    %v2262 = vpop.f32.mrf.mxu0
    %v2263 = vadd.f32 %v1075, %v2262
    %v2264 = vpop.f32.mrf.mxu0
    %v2265 = vadd.f32 %v1071, %v2264
    %v2266 = vpop.f32.mrf.mxu0
    %v2267 = vadd.f32 %v1075, %v2266
    %2268 = vmatprep.mubr.bf16.mxu0 %v920
    %2269 = vmatmul.mubr.bf16.gmra.mxu0 %v919
    %v2270 = vpop.f32.mrf.mxu0
    %v2271 = vadd.f32 %v1071, %v2270
    %v2272 = vpop.f32.mrf.mxu0
    %v2273 = vadd.f32 %v1075, %v2272
    %v2274 = vpop.f32.mrf.mxu0
    %v2275 = vadd.f32 %v1071, %v2274
    %v2276 = vpop.f32.mrf.mxu0
    %v2277 = vadd.f32 %v1075, %v2276
    %2278 = vmatprep.mubr.bf16.mxu0 %v924
    %2279 = vmatmul.mubr.bf16.gmra.mxu0 %v923
    %v2280 = vpop.f32.mrf.mxu0
    %v2281 = vadd.f32 %v1071, %v2280
    %v2282 = vpop.f32.mrf.mxu0
    %v2283 = vadd.f32 %v1075, %v2282
    %v2284 = vpop.f32.mrf.mxu0
    %v2285 = vadd.f32 %v1071, %v2284
    %v2286 = vpop.f32.mrf.mxu0
    %v2287 = vadd.f32 %v1075, %v2286
    %2288 = vmatprep.mubr.bf16.mxu0 %v928
    %2289 = vmatmul.mubr.bf16.gmra.mxu0 %v927
    %v2290 = vpop.f32.mrf.mxu0
    %v2291 = vadd.f32 %v1071, %v2290
    %v2292 = vpop.f32.mrf.mxu0
    %v2293 = vadd.f32 %v1075, %v2292
    %v2294 = vpop.f32.mrf.mxu0
    %v2295 = vadd.f32 %v1071, %v2294
    %v2296 = vpop.f32.mrf.mxu0
    %v2297 = vadd.f32 %v1075, %v2296
    %2298 = vdwg.mxu0
    %2299 = vmatprep.subr.bf16.mxu0 %v1559
    %2300 = vmatpush1.bf16.msra.mxu0 %v1558
    %2301 = vmatprep.subr.bf16.mxu0 %v1555
    %2302 = vmatpush1.bf16.msra.mxu0 %v1554
    %2303 = vmatprep.subr.bf16.mxu0 %v1551
    %2304 = vmatpush1.bf16.msra.mxu0 %v1550
    %2305 = vmatprep.subr.bf16.mxu0 %v1547
    %2306 = vmatpush1.bf16.msra.mxu0 %v1546
    %2307 = vmatprep.subr.bf16.mxu0 %v1543
    %2308 = vmatpush1.bf16.msra.mxu0 %v1542
    %2309 = vmatprep.subr.bf16.mxu0 %v1539
    %2310 = vmatpush1.bf16.msra.mxu0 %v1538
    %2311 = vmatprep.subr.bf16.mxu0 %v1535
    %2312 = vmatpush1.bf16.msra.mxu0 %v1534
    %2313 = vmatprep.subr.bf16.mxu0 %v1531
    %2314 = vmatpush1.bf16.msra.mxu0 %v1530
    %2315 = vmatprep.subr.bf16.mxu0 %v1591
    %2316 = vmatpush2.bf16.msra.mxu0 %v1590
    %2317 = vmatprep.subr.bf16.mxu0 %v1587
    %2318 = vmatpush2.bf16.msra.mxu0 %v1586
    %2319 = vmatprep.subr.bf16.mxu0 %v1583
    %2320 = vmatpush2.bf16.msra.mxu0 %v1582
    %2321 = vmatprep.subr.bf16.mxu0 %v1579
    %2322 = vmatpush2.bf16.msra.mxu0 %v1578
    %2323 = vmatprep.subr.bf16.mxu0 %v1575
    %2324 = vmatpush2.bf16.msra.mxu0 %v1574
    %2325 = vmatprep.subr.bf16.mxu0 %v1571
    %2326 = vmatpush2.bf16.msra.mxu0 %v1570
    %2327 = vmatprep.subr.bf16.mxu0 %v1567
    %2328 = vmatpush2.bf16.msra.mxu0 %v1566
    %2329 = vmatprep.subr.bf16.mxu0 %v1563
    %2330 = vmatpush2.bf16.msra.mxu0 %v1562
    %2331 = vmatprep.mubr.bf16.mxu0 %v870
    %2332 = vmatmul.mubr.bf16.gmra.mxu0 %v869
    %v2333 = vpop.f32.mrf.mxu0
    %v2334 = vadd.f32 %v2141, %v2333
    %v2335 = vpop.f32.mrf.mxu0
    %v2336 = vadd.f32 %v2143, %v2335
    %v2337 = vpop.f32.mrf.mxu0
    %v2338 = vadd.f32 %v2145, %v2337
    %v2339 = vpop.f32.mrf.mxu0
    %v2340 = vadd.f32 %v2147, %v2339
    %2341 = vmatprep.mubr.bf16.mxu0 %v874
    %2342 = vmatmul.mubr.bf16.gmra.mxu0 %v873
    %v2343 = vpop.f32.mrf.mxu0
    %v2344 = vadd.f32 %v2151, %v2343
    %v2345 = vpop.f32.mrf.mxu0
    %v2346 = vadd.f32 %v2153, %v2345
    %v2347 = vpop.f32.mrf.mxu0
    %v2348 = vadd.f32 %v2155, %v2347
    %v2349 = vpop.f32.mrf.mxu0
    %v2350 = vadd.f32 %v2157, %v2349
    %2351 = vmatprep.mubr.bf16.mxu0 %v878
    %2352 = vmatmul.mubr.bf16.gmra.mxu0 %v877
    %v2353 = vpop.f32.mrf.mxu0
    %v2354 = vadd.f32 %v2161, %v2353
    %v2355 = vpop.f32.mrf.mxu0
    %v2356 = vadd.f32 %v2163, %v2355
    %v2357 = vpop.f32.mrf.mxu0
    %v2358 = vadd.f32 %v2165, %v2357
    %v2359 = vpop.f32.mrf.mxu0
    %v2360 = vadd.f32 %v2167, %v2359
    %2361 = vmatprep.mubr.bf16.mxu0 %v882
    %2362 = vmatmul.mubr.bf16.gmra.mxu0 %v881
    %v2363 = vpop.f32.mrf.mxu0
    %v2364 = vadd.f32 %v2171, %v2363
    %v2365 = vpop.f32.mrf.mxu0
    %v2366 = vadd.f32 %v2173, %v2365
    %v2367 = vpop.f32.mrf.mxu0
    %v2368 = vadd.f32 %v2175, %v2367
    %v2369 = vpop.f32.mrf.mxu0
    %v2370 = vadd.f32 %v2177, %v2369
    %2371 = vmatprep.mubr.bf16.mxu0 %v886
    %2372 = vmatmul.mubr.bf16.gmra.mxu0 %v885
    %v2373 = vpop.f32.mrf.mxu0
    %v2374 = vadd.f32 %v2181, %v2373
    %v2375 = vpop.f32.mrf.mxu0
    %v2376 = vadd.f32 %v2183, %v2375
    %v2377 = vpop.f32.mrf.mxu0
    %v2378 = vadd.f32 %v2185, %v2377
    %v2379 = vpop.f32.mrf.mxu0
    %v2380 = vadd.f32 %v2187, %v2379
    %2381 = vmatprep.mubr.bf16.mxu0 %v890
    %2382 = vmatmul.mubr.bf16.gmra.mxu0 %v889
    %v2383 = vpop.f32.mrf.mxu0
    %v2384 = vadd.f32 %v2191, %v2383
    %v2385 = vpop.f32.mrf.mxu0
    %v2386 = vadd.f32 %v2193, %v2385
    %v2387 = vpop.f32.mrf.mxu0
    %v2388 = vadd.f32 %v2195, %v2387
    %v2389 = vpop.f32.mrf.mxu0
    %v2390 = vadd.f32 %v2197, %v2389
    %2391 = vmatprep.mubr.bf16.mxu0 %v894
    %2392 = vmatmul.mubr.bf16.gmra.mxu0 %v893
    %v2393 = vpop.f32.mrf.mxu0
    %v2394 = vadd.f32 %v2201, %v2393
    %v2395 = vpop.f32.mrf.mxu0
    %v2396 = vadd.f32 %v2203, %v2395
    %v2397 = vpop.f32.mrf.mxu0
    %v2398 = vadd.f32 %v2205, %v2397
    %v2399 = vpop.f32.mrf.mxu0
    %v2400 = vadd.f32 %v2207, %v2399
    %2401 = vmatprep.mubr.bf16.mxu0 %v898
    %2402 = vmatmul.mubr.bf16.gmra.mxu0 %v897
    %v2403 = vpop.f32.mrf.mxu0
    %v2404 = vadd.f32 %v2211, %v2403
    %v2405 = vpop.f32.mrf.mxu0
    %v2406 = vadd.f32 %v2213, %v2405
    %v2407 = vpop.f32.mrf.mxu0
    %v2408 = vadd.f32 %v2215, %v2407
    %v2409 = vpop.f32.mrf.mxu0
    %v2410 = vadd.f32 %v2217, %v2409
    %2411 = vmatprep.mubr.bf16.mxu0 %v902
    %2412 = vmatmul.mubr.bf16.gmra.mxu0 %v901
    %v2413 = vpop.f32.mrf.mxu0
    %v2414 = vadd.f32 %v2221, %v2413
    %v2415 = vpop.f32.mrf.mxu0
    %v2416 = vadd.f32 %v2223, %v2415
    %v2417 = vpop.f32.mrf.mxu0
    %v2418 = vadd.f32 %v2225, %v2417
    %v2419 = vpop.f32.mrf.mxu0
    %v2420 = vadd.f32 %v2227, %v2419
    %2421 = vmatprep.mubr.bf16.mxu0 %v906
    %2422 = vmatmul.mubr.bf16.gmra.mxu0 %v905
    %v2423 = vpop.f32.mrf.mxu0
    %v2424 = vadd.f32 %v2231, %v2423
    %v2425 = vpop.f32.mrf.mxu0
    %v2426 = vadd.f32 %v2233, %v2425
    %v2427 = vpop.f32.mrf.mxu0
    %v2428 = vadd.f32 %v2235, %v2427
    %v2429 = vpop.f32.mrf.mxu0
    %v2430 = vadd.f32 %v2237, %v2429
    %2431 = vmatprep.mubr.bf16.mxu0 %v910
    %2432 = vmatmul.mubr.bf16.gmra.mxu0 %v909
    %v2433 = vpop.f32.mrf.mxu0
    %v2434 = vadd.f32 %v2241, %v2433
    %v2435 = vpop.f32.mrf.mxu0
    %v2436 = vadd.f32 %v2243, %v2435
    %v2437 = vpop.f32.mrf.mxu0
    %v2438 = vadd.f32 %v2245, %v2437
    %v2439 = vpop.f32.mrf.mxu0
    %v2440 = vadd.f32 %v2247, %v2439
    %2441 = vmatprep.mubr.bf16.mxu0 %v914
    %2442 = vmatmul.mubr.bf16.gmra.mxu0 %v913
    %v2443 = vpop.f32.mrf.mxu0
    %v2444 = vadd.f32 %v2251, %v2443
    %v2445 = vpop.f32.mrf.mxu0
    %v2446 = vadd.f32 %v2253, %v2445
    %v2447 = vpop.f32.mrf.mxu0
    %v2448 = vadd.f32 %v2255, %v2447
    %v2449 = vpop.f32.mrf.mxu0
    %v2450 = vadd.f32 %v2257, %v2449
    %2451 = vmatprep.mubr.bf16.mxu0 %v918
    %2452 = vmatmul.mubr.bf16.gmra.mxu0 %v917
    %v2453 = vpop.f32.mrf.mxu0
    %v2454 = vadd.f32 %v2261, %v2453
    %v2455 = vpop.f32.mrf.mxu0
    %v2456 = vadd.f32 %v2263, %v2455
    %v2457 = vpop.f32.mrf.mxu0
    %v2458 = vadd.f32 %v2265, %v2457
    %v2459 = vpop.f32.mrf.mxu0
    %v2460 = vadd.f32 %v2267, %v2459
    %2461 = vmatprep.mubr.bf16.mxu0 %v922
    %2462 = vmatmul.mubr.bf16.gmra.mxu0 %v921
    %v2463 = vpop.f32.mrf.mxu0
    %v2464 = vadd.f32 %v2271, %v2463
    %v2465 = vpop.f32.mrf.mxu0
    %v2466 = vadd.f32 %v2273, %v2465
    %v2467 = vpop.f32.mrf.mxu0
    %v2468 = vadd.f32 %v2275, %v2467
    %v2469 = vpop.f32.mrf.mxu0
    %v2470 = vadd.f32 %v2277, %v2469
    %2471 = vmatprep.mubr.bf16.mxu0 %v926
    %2472 = vmatmul.mubr.bf16.gmra.mxu0 %v925
    %v2473 = vpop.f32.mrf.mxu0
    %v2474 = vadd.f32 %v2281, %v2473
    %v2475 = vpop.f32.mrf.mxu0
    %v2476 = vadd.f32 %v2283, %v2475
    %v2477 = vpop.f32.mrf.mxu0
    %v2478 = vadd.f32 %v2285, %v2477
    %v2479 = vpop.f32.mrf.mxu0
    %v2480 = vadd.f32 %v2287, %v2479
    %2481 = vmatprep.mubr.bf16.mxu0 %v930
    %2482 = vmatmul.mubr.bf16.gmra.mxu0 %v929
    %v2483 = vpop.f32.mrf.mxu0
    %v2484 = vadd.f32 %v2291, %v2483
    %v2485 = vpop.f32.mrf.mxu0
    %v2486 = vadd.f32 %v2293, %v2485
    %v2487 = vpop.f32.mrf.mxu0
    %v2488 = vadd.f32 %v2295, %v2487
    %v2489 = vpop.f32.mrf.mxu0
    %v2490 = vadd.f32 %v2297, %v2489
    %2491 = vdwg.mxu0
    %v2492 = vmax.f32 %v1948, 0.0
    %v2493 = vmax.f32 %v1950, 0.0
    %v2494 = vmax.f32 %v2334, 0.0
    %v2495 = vmax.f32 %v2336, 0.0
    %v2496 = vmax.f32 %v1952, 0.0
    %v2497 = vmax.f32 %v1954, 0.0
    %v2498 = vmax.f32 %v2338, 0.0
    %v2499 = vmax.f32 %v2340, 0.0
    %v2500 = vmax.f32 %v1958, 0.0
    %v2501 = vmax.f32 %v1960, 0.0
    %v2502 = vmax.f32 %v2344, 0.0
    %v2503 = vmax.f32 %v2346, 0.0
    %v2504 = vmax.f32 %v1962, 0.0
    %v2505 = vmax.f32 %v1964, 0.0
    %v2506 = vmax.f32 %v2348, 0.0
    %v2507 = vmax.f32 %v2350, 0.0
    %v2508 = vmax.f32 %v1968, 0.0
    %v2509 = vmax.f32 %v1970, 0.0
    %v2510 = vmax.f32 %v2354, 0.0
    %v2511 = vmax.f32 %v2356, 0.0
    %v2512 = vmax.f32 %v1972, 0.0
    %v2513 = vmax.f32 %v1974, 0.0
    %v2514 = vmax.f32 %v2358, 0.0
    %v2515 = vmax.f32 %v2360, 0.0
    %v2516 = vmax.f32 %v1978, 0.0
    %v2517 = vmax.f32 %v1980, 0.0
    %v2518 = vmax.f32 %v2364, 0.0
    %v2519 = vmax.f32 %v2366, 0.0
    %v2520 = vmax.f32 %v1982, 0.0
    %v2521 = vmax.f32 %v1984, 0.0
    %v2522 = vmax.f32 %v2368, 0.0
    %v2523 = vmax.f32 %v2370, 0.0
    %v2524 = vmax.f32 %v1988, 0.0
    %v2525 = vmax.f32 %v1990, 0.0
    %v2526 = vmax.f32 %v2374, 0.0
    %v2527 = vmax.f32 %v2376, 0.0
    %v2528 = vmax.f32 %v1992, 0.0
    %v2529 = vmax.f32 %v1994, 0.0
    %v2530 = vmax.f32 %v2378, 0.0
    %v2531 = vmax.f32 %v2380, 0.0
    %v2532 = vmax.f32 %v1998, 0.0
    %v2533 = vmax.f32 %v2000, 0.0
    %v2534 = vmax.f32 %v2384, 0.0
    %v2535 = vmax.f32 %v2386, 0.0
    %v2536 = vmax.f32 %v2002, 0.0
    %v2537 = vmax.f32 %v2004, 0.0
    %v2538 = vmax.f32 %v2388, 0.0
    %v2539 = vmax.f32 %v2390, 0.0
    %v2540 = vmax.f32 %v2008, 0.0
    %v2541 = vmax.f32 %v2010, 0.0
    %v2542 = vmax.f32 %v2394, 0.0
    %v2543 = vmax.f32 %v2396, 0.0
    %v2544 = vmax.f32 %v2012, 0.0
    %v2545 = vmax.f32 %v2014, 0.0
    %v2546 = vmax.f32 %v2398, 0.0
    %v2547 = vmax.f32 %v2400, 0.0
    %v2548 = vmax.f32 %v2018, 0.0
    %v2549 = vmax.f32 %v2020, 0.0
    %v2550 = vmax.f32 %v2404, 0.0
    %v2551 = vmax.f32 %v2406, 0.0
    %v2552 = vmax.f32 %v2022, 0.0
    %v2553 = vmax.f32 %v2024, 0.0
    %v2554 = vmax.f32 %v2408, 0.0
    %v2555 = vmax.f32 %v2410, 0.0
    %v2556 = vmax.f32 %v2028, 0.0
    %v2557 = vmax.f32 %v2030, 0.0
    %v2558 = vmax.f32 %v2414, 0.0
    %v2559 = vmax.f32 %v2416, 0.0
    %v2560 = vmax.f32 %v2032, 0.0
    %v2561 = vmax.f32 %v2034, 0.0
    %v2562 = vmax.f32 %v2418, 0.0
    %v2563 = vmax.f32 %v2420, 0.0
    %v2564 = vmax.f32 %v2038, 0.0
    %v2565 = vmax.f32 %v2040, 0.0
    %v2566 = vmax.f32 %v2424, 0.0
    %v2567 = vmax.f32 %v2426, 0.0
    %v2568 = vmax.f32 %v2042, 0.0
    %v2569 = vmax.f32 %v2044, 0.0
    %v2570 = vmax.f32 %v2428, 0.0
    %v2571 = vmax.f32 %v2430, 0.0
    %v2572 = vmax.f32 %v2048, 0.0
    %v2573 = vmax.f32 %v2050, 0.0
    %v2574 = vmax.f32 %v2434, 0.0
    %v2575 = vmax.f32 %v2436, 0.0
    %v2576 = vmax.f32 %v2052, 0.0
    %v2577 = vmax.f32 %v2054, 0.0
    %v2578 = vmax.f32 %v2438, 0.0
    %v2579 = vmax.f32 %v2440, 0.0
    %v2580 = vmax.f32 %v2058, 0.0
    %v2581 = vmax.f32 %v2060, 0.0
    %v2582 = vmax.f32 %v2444, 0.0
    %v2583 = vmax.f32 %v2446, 0.0
    %v2584 = vmax.f32 %v2062, 0.0
    %v2585 = vmax.f32 %v2064, 0.0
    %v2586 = vmax.f32 %v2448, 0.0
    %v2587 = vmax.f32 %v2450, 0.0
    %v2588 = vmax.f32 %v2068, 0.0
    %v2589 = vmax.f32 %v2070, 0.0
    %v2590 = vmax.f32 %v2454, 0.0
    %v2591 = vmax.f32 %v2456, 0.0
    %v2592 = vmax.f32 %v2072, 0.0
    %v2593 = vmax.f32 %v2074, 0.0
    %v2594 = vmax.f32 %v2458, 0.0
    %v2595 = vmax.f32 %v2460, 0.0
    %v2596 = vmax.f32 %v2078, 0.0
    %v2597 = vmax.f32 %v2080, 0.0
    %v2598 = vmax.f32 %v2464, 0.0
    %v2599 = vmax.f32 %v2466, 0.0
    %v2600 = vmax.f32 %v2082, 0.0
    %v2601 = vmax.f32 %v2084, 0.0
    %v2602 = vmax.f32 %v2468, 0.0
    %v2603 = vmax.f32 %v2470, 0.0
    %v2604 = vmax.f32 %v2088, 0.0
    %v2605 = vmax.f32 %v2090, 0.0
    %v2606 = vmax.f32 %v2474, 0.0
    %v2607 = vmax.f32 %v2476, 0.0
    %v2608 = vmax.f32 %v2092, 0.0
    %v2609 = vmax.f32 %v2094, 0.0
    %v2610 = vmax.f32 %v2478, 0.0
    %v2611 = vmax.f32 %v2480, 0.0
    %v2612 = vmax.f32 %v2098, 0.0
    %v2613 = vmax.f32 %v2100, 0.0
    %v2614 = vmax.f32 %v2484, 0.0
    %v2615 = vmax.f32 %v2486, 0.0
    %v2616 = vmax.f32 %v2102, 0.0
    %v2617 = vmax.f32 %v2104, 0.0
    %v2618 = vmax.f32 %v2488, 0.0
    %v2619 = vmax.f32 %v2490, 0.0
    %v2620 = vpack.c.bf16 %v2496, %v2492
    %v2621 = vpack.c.bf16 %v2497, %v2493
    %v2622 = vpack.c.bf16 %v2498, %v2494
    %v2623 = vpack.c.bf16 %v2499, %v2495
    %v2624 = vpack.c.bf16 %v2504, %v2500
    %v2625 = vpack.c.bf16 %v2505, %v2501
    %v2626 = vpack.c.bf16 %v2506, %v2502
    %v2627 = vpack.c.bf16 %v2507, %v2503
    %v2628 = vpack.c.bf16 %v2512, %v2508
    %v2629 = vpack.c.bf16 %v2513, %v2509
    %v2630 = vpack.c.bf16 %v2514, %v2510
    %v2631 = vpack.c.bf16 %v2515, %v2511
    %v2632 = vpack.c.bf16 %v2520, %v2516
    %v2633 = vpack.c.bf16 %v2521, %v2517
    %v2634 = vpack.c.bf16 %v2522, %v2518
    %v2635 = vpack.c.bf16 %v2523, %v2519
    %v2636 = vpack.c.bf16 %v2528, %v2524
    %v2637 = vpack.c.bf16 %v2529, %v2525
    %v2638 = vpack.c.bf16 %v2530, %v2526
    %v2639 = vpack.c.bf16 %v2531, %v2527
    %v2640 = vpack.c.bf16 %v2536, %v2532
    %v2641 = vpack.c.bf16 %v2537, %v2533
    %v2642 = vpack.c.bf16 %v2538, %v2534
    %v2643 = vpack.c.bf16 %v2539, %v2535
    %v2644 = vpack.c.bf16 %v2544, %v2540
    %v2645 = vpack.c.bf16 %v2545, %v2541
    %v2646 = vpack.c.bf16 %v2546, %v2542
    %v2647 = vpack.c.bf16 %v2547, %v2543
    %v2648 = vpack.c.bf16 %v2552, %v2548
    %v2649 = vpack.c.bf16 %v2553, %v2549
    %v2650 = vpack.c.bf16 %v2554, %v2550
    %v2651 = vpack.c.bf16 %v2555, %v2551
    %v2652 = vpack.c.bf16 %v2560, %v2556
    %v2653 = vpack.c.bf16 %v2561, %v2557
    %v2654 = vpack.c.bf16 %v2562, %v2558
    %v2655 = vpack.c.bf16 %v2563, %v2559
    %v2656 = vpack.c.bf16 %v2568, %v2564
    %v2657 = vpack.c.bf16 %v2569, %v2565
    %v2658 = vpack.c.bf16 %v2570, %v2566
    %v2659 = vpack.c.bf16 %v2571, %v2567
    %v2660 = vpack.c.bf16 %v2576, %v2572
    %v2661 = vpack.c.bf16 %v2577, %v2573
    %v2662 = vpack.c.bf16 %v2578, %v2574
    %v2663 = vpack.c.bf16 %v2579, %v2575
    %v2664 = vpack.c.bf16 %v2584, %v2580
    %v2665 = vpack.c.bf16 %v2585, %v2581
    %v2666 = vpack.c.bf16 %v2586, %v2582
    %v2667 = vpack.c.bf16 %v2587, %v2583
    %v2668 = vpack.c.bf16 %v2592, %v2588
    %v2669 = vpack.c.bf16 %v2593, %v2589
    %v2670 = vpack.c.bf16 %v2594, %v2590
    %v2671 = vpack.c.bf16 %v2595, %v2591
    %v2672 = vpack.c.bf16 %v2600, %v2596
    %v2673 = vpack.c.bf16 %v2601, %v2597
    %v2674 = vpack.c.bf16 %v2602, %v2598
    %v2675 = vpack.c.bf16 %v2603, %v2599
    %v2676 = vpack.c.bf16 %v2608, %v2604
    %v2677 = vpack.c.bf16 %v2609, %v2605
    %v2678 = vpack.c.bf16 %v2610, %v2606
    %v2679 = vpack.c.bf16 %v2611, %v2607
    %v2680 = vpack.c.bf16 %v2616, %v2612
    %v2681 = vpack.c.bf16 %v2617, %v2613
    %v2682 = vpack.c.bf16 %v2618, %v2614
    %v2683 = vpack.c.bf16 %v2619, %v2615
    %v2684 = vld [vmem:[#allocation8] sm:$0xf]
    %v2685 = vld [vmem:[#allocation8 + $0x4] sm:$0xf]
    %v2686 = vld [vmem:[#allocation8 + $0x8] sm:$0xf]
    %v2687 = vld [vmem:[#allocation8 + $0xc] sm:$0xf]
    %v2688 = vld [vmem:[#allocation8 + $0x10] sm:$0xf]
    %v2689 = vld [vmem:[#allocation8 + $0x14] sm:$0xf]
    %v2690 = vld [vmem:[#allocation8 + $0x18] sm:$0xf]
    %v2691 = vld [vmem:[#allocation8 + $0x1c] sm:$0xf]
    %v2692 = vld [vmem:[#allocation8 + $0x20] sm:$0xf]
    %v2693 = vld [vmem:[#allocation8 + $0x24] sm:$0xf]
    %v2694 = vld [vmem:[#allocation8 + $0x28] sm:$0xf]
    %v2695 = vld [vmem:[#allocation8 + $0x2c] sm:$0xf]
    %v2696 = vld [vmem:[#allocation8 + $0x30] sm:$0xf]
    %v2697 = vld [vmem:[#allocation8 + $0x34] sm:$0xf]
    %v2698 = vld [vmem:[#allocation8 + $0x38] sm:$0xf]
    %v2699 = vld [vmem:[#allocation8 + $0x3c] sm:$0xf]
    %v2700 = vld [vmem:[#allocation8 + $0x40] sm:$0xf]
    %v2701 = vld [vmem:[#allocation8 + $0x44] sm:$0xf]
    %v2702 = vld [vmem:[#allocation8 + $0x48] sm:$0xf]
    %v2703 = vld [vmem:[#allocation8 + $0x4c] sm:$0xf]
    %v2704 = vld [vmem:[#allocation8 + $0x50] sm:$0xf]
    %v2705 = vld [vmem:[#allocation8 + $0x54] sm:$0xf]
    %v2706 = vld [vmem:[#allocation8 + $0x58] sm:$0xf]
    %v2707 = vld [vmem:[#allocation8 + $0x5c] sm:$0xf]
    %v2708 = vld [vmem:[#allocation8 + $0x60] sm:$0xf]
    %v2709 = vld [vmem:[#allocation8 + $0x64] sm:$0xf]
    %v2710 = vld [vmem:[#allocation8 + $0x68] sm:$0xf]
    %v2711 = vld [vmem:[#allocation8 + $0x6c] sm:$0xf]
    %v2712 = vld [vmem:[#allocation8 + $0x70] sm:$0xf]
    %v2713 = vld [vmem:[#allocation8 + $0x74] sm:$0xf]
    %v2714 = vld [vmem:[#allocation8 + $0x78] sm:$0xf]
    %v2715 = vld [vmem:[#allocation8 + $0x7c] sm:$0xf]
    %v2716 = vld [vmem:[#allocation8 + $0x80] sm:$0xf]
    %v2717 = vld [vmem:[#allocation8 + $0x84] sm:$0xf]
    %v2718 = vld [vmem:[#allocation8 + $0x88] sm:$0xf]
    %v2719 = vld [vmem:[#allocation8 + $0x8c] sm:$0xf]
    %v2720 = vld [vmem:[#allocation8 + $0x90] sm:$0xf]
    %v2721 = vld [vmem:[#allocation8 + $0x94] sm:$0xf]
    %v2722 = vld [vmem:[#allocation8 + $0x98] sm:$0xf]
    %v2723 = vld [vmem:[#allocation8 + $0x9c] sm:$0xf]
    %v2724 = vld [vmem:[#allocation8 + $0xa0] sm:$0xf]
    %v2725 = vld [vmem:[#allocation8 + $0xa4] sm:$0xf]
    %v2726 = vld [vmem:[#allocation8 + $0xa8] sm:$0xf]
    %v2727 = vld [vmem:[#allocation8 + $0xac] sm:$0xf]
    %v2728 = vld [vmem:[#allocation8 + $0xb0] sm:$0xf]
    %v2729 = vld [vmem:[#allocation8 + $0xb4] sm:$0xf]
    %v2730 = vld [vmem:[#allocation8 + $0xb8] sm:$0xf]
    %v2731 = vld [vmem:[#allocation8 + $0xbc] sm:$0xf]
    %v2732 = vld [vmem:[#allocation8 + $0xc0] sm:$0xf]
    %v2733 = vld [vmem:[#allocation8 + $0xc4] sm:$0xf]
    %v2734 = vld [vmem:[#allocation8 + $0xc8] sm:$0xf]
    %v2735 = vld [vmem:[#allocation8 + $0xcc] sm:$0xf]
    %v2736 = vld [vmem:[#allocation8 + $0xd0] sm:$0xf]
    %v2737 = vld [vmem:[#allocation8 + $0xd4] sm:$0xf]
    %v2738 = vld [vmem:[#allocation8 + $0xd8] sm:$0xf]
    %v2739 = vld [vmem:[#allocation8 + $0xdc] sm:$0xf]
    %v2740 = vld [vmem:[#allocation8 + $0xe0] sm:$0xf]
    %v2741 = vld [vmem:[#allocation8 + $0xe4] sm:$0xf]
    %v2742 = vld [vmem:[#allocation8 + $0xe8] sm:$0xf]
    %v2743 = vld [vmem:[#allocation8 + $0xec] sm:$0xf]
    %v2744 = vld [vmem:[#allocation8 + $0xf0] sm:$0xf]
    %v2745 = vld [vmem:[#allocation8 + $0xf4] sm:$0xf]
    %v2746 = vld [vmem:[#allocation8 + $0xf8] sm:$0xf]
    %v2747 = vld [vmem:[#allocation8 + $0xfc] sm:$0xf]
    %v2748 = vlaneseq
    %v2749 = vshrl.u32 %v2748, 7
    %v2750 = vsub.s32 0, %v2749
    %v2751 = vrot.slane %v91, %v2750
    %v2816 = vunpack.c.l.b16 %v2684
    %v2817 = vunpack.c.l.b16 %v2685
    %v2818 = vunpack.c.l.b16 %v2686
    %v2819 = vunpack.c.l.b16 %v2687
    %v2820 = vunpack.c.l.b16 %v2688
    %v2821 = vunpack.c.l.b16 %v2689
    %v2822 = vunpack.c.l.b16 %v2690
    %v2823 = vunpack.c.l.b16 %v2691
    %v2824 = vunpack.c.l.b16 %v2692
    %v2825 = vunpack.c.l.b16 %v2693
    %v2826 = vunpack.c.l.b16 %v2694
    %v2827 = vunpack.c.l.b16 %v2695
    %v2828 = vunpack.c.l.b16 %v2696
    %v2829 = vunpack.c.l.b16 %v2697
    %v2830 = vunpack.c.l.b16 %v2698
    %v2831 = vunpack.c.l.b16 %v2699
    %v2832 = vunpack.c.l.b16 %v2700
    %v2833 = vunpack.c.l.b16 %v2701
    %v2834 = vunpack.c.l.b16 %v2702
    %v2835 = vunpack.c.l.b16 %v2703
    %v2836 = vunpack.c.l.b16 %v2704
    %v2837 = vunpack.c.l.b16 %v2705
    %v2838 = vunpack.c.l.b16 %v2706
    %v2839 = vunpack.c.l.b16 %v2707
    %v2840 = vunpack.c.l.b16 %v2708
    %v2841 = vunpack.c.l.b16 %v2709
    %v2842 = vunpack.c.l.b16 %v2710
    %v2843 = vunpack.c.l.b16 %v2711
    %v2844 = vunpack.c.l.b16 %v2712
    %v2845 = vunpack.c.l.b16 %v2713
    %v2846 = vunpack.c.l.b16 %v2714
    %v2847 = vunpack.c.l.b16 %v2715
    %v2848 = vunpack.c.l.b16 %v2716
    %v2849 = vunpack.c.l.b16 %v2717
    %v2850 = vunpack.c.l.b16 %v2718
    %v2851 = vunpack.c.l.b16 %v2719
    %v2852 = vunpack.c.l.b16 %v2720
    %v2853 = vunpack.c.l.b16 %v2721
    %v2854 = vunpack.c.l.b16 %v2722
    %v2855 = vunpack.c.l.b16 %v2723
    %v2856 = vunpack.c.l.b16 %v2724
    %v2857 = vunpack.c.l.b16 %v2725
    %v2858 = vunpack.c.l.b16 %v2726
    %v2859 = vunpack.c.l.b16 %v2727
    %v2860 = vunpack.c.l.b16 %v2728
    %v2861 = vunpack.c.l.b16 %v2729
    %v2862 = vunpack.c.l.b16 %v2730
    %v2863 = vunpack.c.l.b16 %v2731
    %v2864 = vunpack.c.l.b16 %v2732
    %v2865 = vunpack.c.l.b16 %v2733
    %v2866 = vunpack.c.l.b16 %v2734
    %v2867 = vunpack.c.l.b16 %v2735
    %v2868 = vunpack.c.l.b16 %v2736
    %v2869 = vunpack.c.l.b16 %v2737
    %v2870 = vunpack.c.l.b16 %v2738
    %v2871 = vunpack.c.l.b16 %v2739
    %v2872 = vunpack.c.l.b16 %v2740
    %v2873 = vunpack.c.l.b16 %v2741
    %v2874 = vunpack.c.l.b16 %v2742
    %v2875 = vunpack.c.l.b16 %v2743
    %v2876 = vunpack.c.l.b16 %v2744
    %v2877 = vunpack.c.l.b16 %v2745
    %v2878 = vunpack.c.l.b16 %v2746
    %v2879 = vunpack.c.l.b16 %v2747
    %v2880 = vpack.c.b16 %v2817, %v2816
    %v2881 = vpack.c.b16 %v2819, %v2818
    %v2882 = vpack.c.b16 %v2821, %v2820
    %v2883 = vpack.c.b16 %v2823, %v2822
    %v2884 = vpack.c.b16 %v2825, %v2824
    %v2885 = vpack.c.b16 %v2827, %v2826
    %v2886 = vpack.c.b16 %v2829, %v2828
    %v2887 = vpack.c.b16 %v2831, %v2830
    %v2888 = vpack.c.b16 %v2833, %v2832
    %v2889 = vpack.c.b16 %v2835, %v2834
    %v2890 = vpack.c.b16 %v2837, %v2836
    %v2891 = vpack.c.b16 %v2839, %v2838
    %v2892 = vpack.c.b16 %v2841, %v2840
    %v2893 = vpack.c.b16 %v2843, %v2842
    %v2894 = vpack.c.b16 %v2845, %v2844
    %v2895 = vpack.c.b16 %v2847, %v2846
    %v2896 = vpack.c.b16 %v2849, %v2848
    %v2897 = vpack.c.b16 %v2851, %v2850
    %v2898 = vpack.c.b16 %v2853, %v2852
    %v2899 = vpack.c.b16 %v2855, %v2854
    %v2900 = vpack.c.b16 %v2857, %v2856
    %v2901 = vpack.c.b16 %v2859, %v2858
    %v2902 = vpack.c.b16 %v2861, %v2860
    %v2903 = vpack.c.b16 %v2863, %v2862
    %v2904 = vpack.c.b16 %v2865, %v2864
    %v2905 = vpack.c.b16 %v2867, %v2866
    %v2906 = vpack.c.b16 %v2869, %v2868
    %v2907 = vpack.c.b16 %v2871, %v2870
    %v2908 = vpack.c.b16 %v2873, %v2872
    %v2909 = vpack.c.b16 %v2875, %v2874
    %v2910 = vpack.c.b16 %v2877, %v2876
    %v2911 = vpack.c.b16 %v2879, %v2878
    %2944 = vmatprep.subr.bf16.mxu0 0
    %2945 = vmatpush1.bf16.msra.mxu0 %v2887
    %2946 = vmatprep.subr.bf16.mxu0 0
    %2947 = vmatpush1.bf16.msra.mxu0 %v2886
    %2948 = vmatprep.subr.bf16.mxu0 0
    %2949 = vmatpush1.bf16.msra.mxu0 %v2885
    %2950 = vmatprep.subr.bf16.mxu0 0
    %2951 = vmatpush1.bf16.msra.mxu0 %v2884
    %2952 = vmatprep.subr.bf16.mxu0 0
    %2953 = vmatpush1.bf16.msra.mxu0 %v2883
    %2954 = vmatprep.subr.bf16.mxu0 0
    %2955 = vmatpush1.bf16.msra.mxu0 %v2882
    %2956 = vmatprep.subr.bf16.mxu0 0
    %2957 = vmatpush1.bf16.msra.mxu0 %v2881
    %2958 = vmatprep.subr.bf16.mxu0 0
    %2959 = vmatpush1.bf16.msra.mxu0 %v2880
    %2960 = vmatprep.subr.bf16.mxu0 0
    %2961 = vmatpush2.bf16.msra.mxu0 %v2895
    %2962 = vmatprep.subr.bf16.mxu0 0
    %2963 = vmatpush2.bf16.msra.mxu0 %v2894
    %2964 = vmatprep.subr.bf16.mxu0 0
    %2965 = vmatpush2.bf16.msra.mxu0 %v2893
    %2966 = vmatprep.subr.bf16.mxu0 0
    %2967 = vmatpush2.bf16.msra.mxu0 %v2892
    %2968 = vmatprep.subr.bf16.mxu0 0
    %2969 = vmatpush2.bf16.msra.mxu0 %v2891
    %2970 = vmatprep.subr.bf16.mxu0 0
    %2971 = vmatpush2.bf16.msra.mxu0 %v2890
    %2972 = vmatprep.subr.bf16.mxu0 0
    %2973 = vmatpush2.bf16.msra.mxu0 %v2889
    %2974 = vmatprep.subr.bf16.mxu0 0
    %2975 = vmatpush2.bf16.msra.mxu0 %v2888
    %2976 = vmatprep.mubr.bf16.mxu0 %v2621
    %2977 = vmatmul.mubr.bf16.gmra.mxu0 %v2620
    %v2978 = vpop.f32.mrf.mxu0
    %v2979 = vadd.f32 %v2751, %v2978
    %v2980 = vpop.f32.mrf.mxu0
    %v2981 = vpop.f32.mrf.mxu0
    %v2982 = vadd.f32 %v2751, %v2981
    %v2983 = vpop.f32.mrf.mxu0
    %2984 = vmatprep.mubr.bf16.mxu0 %v2625
    %2985 = vmatmul.mubr.bf16.gmra.mxu0 %v2624
    %v2986 = vpop.f32.mrf.mxu0
    %v2987 = vadd.f32 %v2751, %v2986
    %v2988 = vpop.f32.mrf.mxu0
    %v2989 = vpop.f32.mrf.mxu0
    %v2990 = vadd.f32 %v2751, %v2989
    %v2991 = vpop.f32.mrf.mxu0
    %2992 = vmatprep.mubr.bf16.mxu0 %v2629
    %2993 = vmatmul.mubr.bf16.gmra.mxu0 %v2628
    %v2994 = vpop.f32.mrf.mxu0
    %v2995 = vadd.f32 %v2751, %v2994
    %v2996 = vpop.f32.mrf.mxu0
    %v2997 = vpop.f32.mrf.mxu0
    %v2998 = vadd.f32 %v2751, %v2997
    %v2999 = vpop.f32.mrf.mxu0
    %3000 = vmatprep.mubr.bf16.mxu0 %v2633
    %3001 = vmatmul.mubr.bf16.gmra.mxu0 %v2632
    %v3002 = vpop.f32.mrf.mxu0
    %v3003 = vadd.f32 %v2751, %v3002
    %v3004 = vpop.f32.mrf.mxu0
    %v3005 = vpop.f32.mrf.mxu0
    %v3006 = vadd.f32 %v2751, %v3005
    %v3007 = vpop.f32.mrf.mxu0
    %3008 = vmatprep.mubr.bf16.mxu0 %v2637
    %3009 = vmatmul.mubr.bf16.gmra.mxu0 %v2636
    %v3010 = vpop.f32.mrf.mxu0
    %v3011 = vadd.f32 %v2751, %v3010
    %v3012 = vpop.f32.mrf.mxu0
    %v3013 = vpop.f32.mrf.mxu0
    %v3014 = vadd.f32 %v2751, %v3013
    %v3015 = vpop.f32.mrf.mxu0
    %3016 = vmatprep.mubr.bf16.mxu0 %v2641
    %3017 = vmatmul.mubr.bf16.gmra.mxu0 %v2640
    %v3018 = vpop.f32.mrf.mxu0
    %v3019 = vadd.f32 %v2751, %v3018
    %v3020 = vpop.f32.mrf.mxu0
    %v3021 = vpop.f32.mrf.mxu0
    %v3022 = vadd.f32 %v2751, %v3021
    %v3023 = vpop.f32.mrf.mxu0
    %3024 = vmatprep.mubr.bf16.mxu0 %v2645
    %3025 = vmatmul.mubr.bf16.gmra.mxu0 %v2644
    %v3026 = vpop.f32.mrf.mxu0
    %v3027 = vadd.f32 %v2751, %v3026
    %v3028 = vpop.f32.mrf.mxu0
    %v3029 = vpop.f32.mrf.mxu0
    %v3030 = vadd.f32 %v2751, %v3029
    %v3031 = vpop.f32.mrf.mxu0
    %3032 = vmatprep.mubr.bf16.mxu0 %v2649
    %3033 = vmatmul.mubr.bf16.gmra.mxu0 %v2648
    %v3034 = vpop.f32.mrf.mxu0
    %v3035 = vadd.f32 %v2751, %v3034
    %v3036 = vpop.f32.mrf.mxu0
    %v3037 = vpop.f32.mrf.mxu0
    %v3038 = vadd.f32 %v2751, %v3037
    %v3039 = vpop.f32.mrf.mxu0
    %3040 = vmatprep.mubr.bf16.mxu0 %v2653
    %3041 = vmatmul.mubr.bf16.gmra.mxu0 %v2652
    %v3042 = vpop.f32.mrf.mxu0
    %v3043 = vadd.f32 %v2751, %v3042
    %v3044 = vpop.f32.mrf.mxu0
    %v3045 = vpop.f32.mrf.mxu0
    %v3046 = vadd.f32 %v2751, %v3045
    %v3047 = vpop.f32.mrf.mxu0
    %3048 = vmatprep.mubr.bf16.mxu0 %v2657
    %3049 = vmatmul.mubr.bf16.gmra.mxu0 %v2656
    %v3050 = vpop.f32.mrf.mxu0
    %v3051 = vadd.f32 %v2751, %v3050
    %v3052 = vpop.f32.mrf.mxu0
    %v3053 = vpop.f32.mrf.mxu0
    %v3054 = vadd.f32 %v2751, %v3053
    %v3055 = vpop.f32.mrf.mxu0
    %3056 = vmatprep.mubr.bf16.mxu0 %v2661
    %3057 = vmatmul.mubr.bf16.gmra.mxu0 %v2660
    %v3058 = vpop.f32.mrf.mxu0
    %v3059 = vadd.f32 %v2751, %v3058
    %v3060 = vpop.f32.mrf.mxu0
    %v3061 = vpop.f32.mrf.mxu0
    %v3062 = vadd.f32 %v2751, %v3061
    %v3063 = vpop.f32.mrf.mxu0
    %3064 = vmatprep.mubr.bf16.mxu0 %v2665
    %3065 = vmatmul.mubr.bf16.gmra.mxu0 %v2664
    %v3066 = vpop.f32.mrf.mxu0
    %v3067 = vadd.f32 %v2751, %v3066
    %v3068 = vpop.f32.mrf.mxu0
    %v3069 = vpop.f32.mrf.mxu0
    %v3070 = vadd.f32 %v2751, %v3069
    %v3071 = vpop.f32.mrf.mxu0
    %3072 = vmatprep.mubr.bf16.mxu0 %v2669
    %3073 = vmatmul.mubr.bf16.gmra.mxu0 %v2668
    %v3074 = vpop.f32.mrf.mxu0
    %v3075 = vadd.f32 %v2751, %v3074
    %v3076 = vpop.f32.mrf.mxu0
    %v3077 = vpop.f32.mrf.mxu0
    %v3078 = vadd.f32 %v2751, %v3077
    %v3079 = vpop.f32.mrf.mxu0
    %3080 = vmatprep.mubr.bf16.mxu0 %v2673
    %3081 = vmatmul.mubr.bf16.gmra.mxu0 %v2672
    %v3082 = vpop.f32.mrf.mxu0
    %v3083 = vadd.f32 %v2751, %v3082
    %v3084 = vpop.f32.mrf.mxu0
    %v3085 = vpop.f32.mrf.mxu0
    %v3086 = vadd.f32 %v2751, %v3085
    %v3087 = vpop.f32.mrf.mxu0
    %3088 = vmatprep.mubr.bf16.mxu0 %v2677
    %3089 = vmatmul.mubr.bf16.gmra.mxu0 %v2676
    %v3090 = vpop.f32.mrf.mxu0
    %v3091 = vadd.f32 %v2751, %v3090
    %v3092 = vpop.f32.mrf.mxu0
    %v3093 = vpop.f32.mrf.mxu0
    %v3094 = vadd.f32 %v2751, %v3093
    %v3095 = vpop.f32.mrf.mxu0
    %3096 = vmatprep.mubr.bf16.mxu0 %v2681
    %3097 = vmatmul.mubr.bf16.gmra.mxu0 %v2680
    %v3098 = vpop.f32.mrf.mxu0
    %v3099 = vadd.f32 %v2751, %v3098
    %v3100 = vpop.f32.mrf.mxu0
    %v3101 = vpop.f32.mrf.mxu0
    %v3102 = vadd.f32 %v2751, %v3101
    %v3103 = vpop.f32.mrf.mxu0
    %3104 = vdwg.mxu0
    %3105 = vmatprep.subr.bf16.mxu0 0
    %3106 = vmatpush1.bf16.msra.mxu0 %v2903
    %3107 = vmatprep.subr.bf16.mxu0 0
    %3108 = vmatpush1.bf16.msra.mxu0 %v2902
    %3109 = vmatprep.subr.bf16.mxu0 0
    %3110 = vmatpush1.bf16.msra.mxu0 %v2901
    %3111 = vmatprep.subr.bf16.mxu0 0
    %3112 = vmatpush1.bf16.msra.mxu0 %v2900
    %3113 = vmatprep.subr.bf16.mxu0 0
    %3114 = vmatpush1.bf16.msra.mxu0 %v2899
    %3115 = vmatprep.subr.bf16.mxu0 0
    %3116 = vmatpush1.bf16.msra.mxu0 %v2898
    %3117 = vmatprep.subr.bf16.mxu0 0
    %3118 = vmatpush1.bf16.msra.mxu0 %v2897
    %3119 = vmatprep.subr.bf16.mxu0 0
    %3120 = vmatpush1.bf16.msra.mxu0 %v2896
    %3121 = vmatprep.subr.bf16.mxu0 0
    %3122 = vmatpush2.bf16.msra.mxu0 %v2911
    %3123 = vmatprep.subr.bf16.mxu0 0
    %3124 = vmatpush2.bf16.msra.mxu0 %v2910
    %3125 = vmatprep.subr.bf16.mxu0 0
    %3126 = vmatpush2.bf16.msra.mxu0 %v2909
    %3127 = vmatprep.subr.bf16.mxu0 0
    %3128 = vmatpush2.bf16.msra.mxu0 %v2908
    %3129 = vmatprep.subr.bf16.mxu0 0
    %3130 = vmatpush2.bf16.msra.mxu0 %v2907
    %3131 = vmatprep.subr.bf16.mxu0 0
    %3132 = vmatpush2.bf16.msra.mxu0 %v2906
    %3133 = vmatprep.subr.bf16.mxu0 0
    %3134 = vmatpush2.bf16.msra.mxu0 %v2905
    %3135 = vmatprep.subr.bf16.mxu0 0
    %3136 = vmatpush2.bf16.msra.mxu0 %v2904
    %3137 = vmatprep.mubr.bf16.mxu0 %v2623
    %3138 = vmatmul.mubr.bf16.gmra.mxu0 %v2622
    %v3139 = vpop.f32.mrf.mxu0
    %v3140 = vadd.f32 %v2979, %v3139
    %v3141 = vpop.f32.mrf.mxu0
    %v3142 = vpop.f32.mrf.mxu0
    %v3143 = vadd.f32 %v2982, %v3142
    %v3144 = vpop.f32.mrf.mxu0
    %3145 = vmatprep.mubr.bf16.mxu0 %v2627
    %3146 = vmatmul.mubr.bf16.gmra.mxu0 %v2626
    %v3147 = vpop.f32.mrf.mxu0
    %v3148 = vadd.f32 %v2987, %v3147
    %v3149 = vpop.f32.mrf.mxu0
    %v3150 = vpop.f32.mrf.mxu0
    %v3151 = vadd.f32 %v2990, %v3150
    %v3152 = vpop.f32.mrf.mxu0
    %3153 = vmatprep.mubr.bf16.mxu0 %v2631
    %3154 = vmatmul.mubr.bf16.gmra.mxu0 %v2630
    %v3155 = vpop.f32.mrf.mxu0
    %v3156 = vadd.f32 %v2995, %v3155
    %v3157 = vpop.f32.mrf.mxu0
    %v3158 = vpop.f32.mrf.mxu0
    %v3159 = vadd.f32 %v2998, %v3158
    %v3160 = vpop.f32.mrf.mxu0
    %3161 = vmatprep.mubr.bf16.mxu0 %v2635
    %3162 = vmatmul.mubr.bf16.gmra.mxu0 %v2634
    %v3163 = vpop.f32.mrf.mxu0
    %v3164 = vadd.f32 %v3003, %v3163
    %v3165 = vpop.f32.mrf.mxu0
    %v3166 = vpop.f32.mrf.mxu0
    %v3167 = vadd.f32 %v3006, %v3166
    %v3168 = vpop.f32.mrf.mxu0
    %3169 = vmatprep.mubr.bf16.mxu0 %v2639
    %3170 = vmatmul.mubr.bf16.gmra.mxu0 %v2638
    %v3171 = vpop.f32.mrf.mxu0
    %v3172 = vadd.f32 %v3011, %v3171
    %v3173 = vpop.f32.mrf.mxu0
    %v3174 = vpop.f32.mrf.mxu0
    %v3175 = vadd.f32 %v3014, %v3174
    %v3176 = vpop.f32.mrf.mxu0
    %3177 = vmatprep.mubr.bf16.mxu0 %v2643
    %3178 = vmatmul.mubr.bf16.gmra.mxu0 %v2642
    %v3179 = vpop.f32.mrf.mxu0
    %v3180 = vadd.f32 %v3019, %v3179
    %v3181 = vpop.f32.mrf.mxu0
    %v3182 = vpop.f32.mrf.mxu0
    %v3183 = vadd.f32 %v3022, %v3182
    %v3184 = vpop.f32.mrf.mxu0
    %3185 = vmatprep.mubr.bf16.mxu0 %v2647
    %3186 = vmatmul.mubr.bf16.gmra.mxu0 %v2646
    %v3187 = vpop.f32.mrf.mxu0
    %v3188 = vadd.f32 %v3027, %v3187
    %v3189 = vpop.f32.mrf.mxu0
    %v3190 = vpop.f32.mrf.mxu0
    %v3191 = vadd.f32 %v3030, %v3190
    %v3192 = vpop.f32.mrf.mxu0
    %3193 = vmatprep.mubr.bf16.mxu0 %v2651
    %3194 = vmatmul.mubr.bf16.gmra.mxu0 %v2650
    %v3195 = vpop.f32.mrf.mxu0
    %v3196 = vadd.f32 %v3035, %v3195
    %v3197 = vpop.f32.mrf.mxu0
    %v3198 = vpop.f32.mrf.mxu0
    %v3199 = vadd.f32 %v3038, %v3198
    %v3200 = vpop.f32.mrf.mxu0
    %3201 = vmatprep.mubr.bf16.mxu0 %v2655
    %3202 = vmatmul.mubr.bf16.gmra.mxu0 %v2654
    %v3203 = vpop.f32.mrf.mxu0
    %v3204 = vadd.f32 %v3043, %v3203
    %v3205 = vpop.f32.mrf.mxu0
    %v3206 = vpop.f32.mrf.mxu0
    %v3207 = vadd.f32 %v3046, %v3206
    %v3208 = vpop.f32.mrf.mxu0
    %3209 = vmatprep.mubr.bf16.mxu0 %v2659
    %3210 = vmatmul.mubr.bf16.gmra.mxu0 %v2658
    %v3211 = vpop.f32.mrf.mxu0
    %v3212 = vadd.f32 %v3051, %v3211
    %v3213 = vpop.f32.mrf.mxu0
    %v3214 = vpop.f32.mrf.mxu0
    %v3215 = vadd.f32 %v3054, %v3214
    %v3216 = vpop.f32.mrf.mxu0
    %3217 = vmatprep.mubr.bf16.mxu0 %v2663
    %3218 = vmatmul.mubr.bf16.gmra.mxu0 %v2662
    %v3219 = vpop.f32.mrf.mxu0
    %v3220 = vadd.f32 %v3059, %v3219
    %v3221 = vpop.f32.mrf.mxu0
    %v3222 = vpop.f32.mrf.mxu0
    %v3223 = vadd.f32 %v3062, %v3222
    %v3224 = vpop.f32.mrf.mxu0
    %3225 = vmatprep.mubr.bf16.mxu0 %v2667
    %3226 = vmatmul.mubr.bf16.gmra.mxu0 %v2666
    %v3227 = vpop.f32.mrf.mxu0
    %v3228 = vadd.f32 %v3067, %v3227
    %v3229 = vpop.f32.mrf.mxu0
    %v3230 = vpop.f32.mrf.mxu0
    %v3231 = vadd.f32 %v3070, %v3230
    %v3232 = vpop.f32.mrf.mxu0
    %3233 = vmatprep.mubr.bf16.mxu0 %v2671
    %3234 = vmatmul.mubr.bf16.gmra.mxu0 %v2670
    %v3235 = vpop.f32.mrf.mxu0
    %v3236 = vadd.f32 %v3075, %v3235
    %v3237 = vpop.f32.mrf.mxu0
    %v3238 = vpop.f32.mrf.mxu0
    %v3239 = vadd.f32 %v3078, %v3238
    %v3240 = vpop.f32.mrf.mxu0
    %3241 = vmatprep.mubr.bf16.mxu0 %v2675
    %3242 = vmatmul.mubr.bf16.gmra.mxu0 %v2674
    %v3243 = vpop.f32.mrf.mxu0
    %v3244 = vadd.f32 %v3083, %v3243
    %v3245 = vpop.f32.mrf.mxu0
    %v3246 = vpop.f32.mrf.mxu0
    %v3247 = vadd.f32 %v3086, %v3246
    %v3248 = vpop.f32.mrf.mxu0
    %3249 = vmatprep.mubr.bf16.mxu0 %v2679
    %3250 = vmatmul.mubr.bf16.gmra.mxu0 %v2678
    %v3251 = vpop.f32.mrf.mxu0
    %v3252 = vadd.f32 %v3091, %v3251
    %v3253 = vpop.f32.mrf.mxu0
    %v3254 = vpop.f32.mrf.mxu0
    %v3255 = vadd.f32 %v3094, %v3254
    %v3256 = vpop.f32.mrf.mxu0
    %3257 = vmatprep.mubr.bf16.mxu0 %v2683
    %3258 = vmatmul.mubr.bf16.gmra.mxu0 %v2682
    %v3259 = vpop.f32.mrf.mxu0
    %v3260 = vadd.f32 %v3099, %v3259
    %v3261 = vpop.f32.mrf.mxu0
    %v3262 = vpop.f32.mrf.mxu0
    %v3263 = vadd.f32 %v3102, %v3262
    %v3264 = vpop.f32.mrf.mxu0
    %3265 = vdwg.mxu0
    %v3266 = vtanh.pop %v3140
    %v3267 = vtanh.pop %v3143
    %v3268 = vtanh.pop %v3148
    %v3269 = vtanh.pop %v3151
    %v3270 = vtanh.pop %v3156
    %v3271 = vtanh.pop %v3159
    %v3272 = vtanh.pop %v3164
    %v3273 = vtanh.pop %v3167
    %v3274 = vtanh.pop %v3172
    %v3275 = vtanh.pop %v3175
    %v3276 = vtanh.pop %v3180
    %v3277 = vtanh.pop %v3183
    %v3278 = vtanh.pop %v3188
    %v3279 = vtanh.pop %v3191
    %v3280 = vtanh.pop %v3196
    %v3281 = vtanh.pop %v3199
    %v3282 = vtanh.pop %v3204
    %v3283 = vtanh.pop %v3207
    %v3284 = vtanh.pop %v3212
    %v3285 = vtanh.pop %v3215
    %v3286 = vtanh.pop %v3220
    %v3287 = vtanh.pop %v3223
    %v3288 = vtanh.pop %v3228
    %v3289 = vtanh.pop %v3231
    %v3290 = vtanh.pop %v3236
    %v3291 = vtanh.pop %v3239
    %v3292 = vtanh.pop %v3244
    %v3293 = vtanh.pop %v3247
    %v3294 = vtanh.pop %v3252
    %v3295 = vtanh.pop %v3255
    %v3296 = vtanh.pop %v3260
    %v3297 = vtanh.pop %v3263
    %v3298 = vmul.f32 %v3266, 2.0
    %v3299 = vmul.f32 %v3267, 2.0
    %v3300 = vmul.f32 %v3268, 2.0
    %v3301 = vmul.f32 %v3269, 2.0
    %v3302 = vmul.f32 %v3270, 2.0
    %v3303 = vmul.f32 %v3271, 2.0
    %v3304 = vmul.f32 %v3272, 2.0
    %v3305 = vmul.f32 %v3273, 2.0
    %v3306 = vmul.f32 %v3274, 2.0
    %v3307 = vmul.f32 %v3275, 2.0
    %v3308 = vmul.f32 %v3276, 2.0
    %v3309 = vmul.f32 %v3277, 2.0
    %v3310 = vmul.f32 %v3278, 2.0
    %v3311 = vmul.f32 %v3279, 2.0
    %v3312 = vmul.f32 %v3280, 2.0
    %v3313 = vmul.f32 %v3281, 2.0
    %v3314 = vmul.f32 %v3282, 2.0
    %v3315 = vmul.f32 %v3283, 2.0
    %v3316 = vmul.f32 %v3284, 2.0
    %v3317 = vmul.f32 %v3285, 2.0
    %v3318 = vmul.f32 %v3286, 2.0
    %v3319 = vmul.f32 %v3287, 2.0
    %v3320 = vmul.f32 %v3288, 2.0
    %v3321 = vmul.f32 %v3289, 2.0
    %v3322 = vmul.f32 %v3290, 2.0
    %v3323 = vmul.f32 %v3291, 2.0
    %v3324 = vmul.f32 %v3292, 2.0
    %v3325 = vmul.f32 %v3293, 2.0
    %v3326 = vmul.f32 %v3294, 2.0
    %v3327 = vmul.f32 %v3295, 2.0
    %v3328 = vmul.f32 %v3296, 2.0
    %v3329 = vmul.f32 %v3297, 2.0
    %3330 = vst [vmem:[#allocation11] sm:$0xff] %v3298
    %3331 = vst [vmem:[#allocation11 + $0x8] sm:$0xff] %v3299
    %3332 = vst [vmem:[#allocation11 + $0x10] sm:$0xff] %v3300
    %3333 = vst [vmem:[#allocation11 + $0x18] sm:$0xff] %v3301
    %3334 = vst [vmem:[#allocation11 + $0x20] sm:$0xff] %v3302
    %3335 = vst [vmem:[#allocation11 + $0x28] sm:$0xff] %v3303
    %3336 = vst [vmem:[#allocation11 + $0x30] sm:$0xff] %v3304
    %3337 = vst [vmem:[#allocation11 + $0x38] sm:$0xff] %v3305
    %3338 = vst [vmem:[#allocation11 + $0x40] sm:$0xff] %v3306
    %3339 = vst [vmem:[#allocation11 + $0x48] sm:$0xff] %v3307
    %3340 = vst [vmem:[#allocation11 + $0x50] sm:$0xff] %v3308
    %3341 = vst [vmem:[#allocation11 + $0x58] sm:$0xff] %v3309
    %3342 = vst [vmem:[#allocation11 + $0x60] sm:$0xff] %v3310
    %3343 = vst [vmem:[#allocation11 + $0x68] sm:$0xff] %v3311
    %3344 = vst [vmem:[#allocation11 + $0x70] sm:$0xff] %v3312
    %3345 = vst [vmem:[#allocation11 + $0x78] sm:$0xff] %v3313
    %3346 = vst [vmem:[#allocation11 + $0x80] sm:$0xff] %v3314
    %3347 = vst [vmem:[#allocation11 + $0x88] sm:$0xff] %v3315
    %3348 = vst [vmem:[#allocation11 + $0x90] sm:$0xff] %v3316
    %3349 = vst [vmem:[#allocation11 + $0x98] sm:$0xff] %v3317
    %3350 = vst [vmem:[#allocation11 + $0xa0] sm:$0xff] %v3318
    %3351 = vst [vmem:[#allocation11 + $0xa8] sm:$0xff] %v3319
    %3352 = vst [vmem:[#allocation11 + $0xb0] sm:$0xff] %v3320
    %3353 = vst [vmem:[#allocation11 + $0xb8] sm:$0xff] %v3321
    %3354 = vst [vmem:[#allocation11 + $0xc0] sm:$0xff] %v3322
    %3355 = vst [vmem:[#allocation11 + $0xc8] sm:$0xff] %v3323
    %3356 = vst [vmem:[#allocation11 + $0xd0] sm:$0xff] %v3324
    %3357 = vst [vmem:[#allocation11 + $0xd8] sm:$0xff] %v3325
    %3358 = vst [vmem:[#allocation11 + $0xe0] sm:$0xff] %v3326
    %3359 = vst [vmem:[#allocation11 + $0xe8] sm:$0xff] %v3327
    %3360 = vst [vmem:[#allocation11 + $0xf0] sm:$0xff] %v3328
    %3361 = vst [vmem:[#allocation11 + $0xf8] sm:$0xff] %v3329
    // Predicated region
    $region42: #{tpu_custom_call.1} parent=1 // pred_check
      _
    $region43: #{tpu_custom_call.1} parent=1 // pred_check_branch
      %3363 = sbr.rel (0) target = $region45
    $region44: #{tpu_custom_call.1} parent=1 // pred_region
      %s3365 = ssub.s32 4096, 4096
      %3366 = vsyncadd [#allocation4], %s3365
      %s3367 = sshll.u32 [#allocation11], 4
      %s3368 = int_to_ptr.vmem [resolvable:$true] %s3367
      %3373 = dma.vmem_to_hbm [thread:$0]  %s3368, 4096, %s5, [#allocation4], 128, 128, 8
    $region45: #{tpu_custom_call.1} parent=1 // pred_fallthru
      _
    // Predicated region
    $region46: #{tpu_custom_call.1} parent=1 // pred_check
      _
    $region47: #{tpu_custom_call.1} parent=1 // pred_check_branch
      %3375 = sbr.rel (0) target = $region49
    $region48: #{tpu_custom_call.1} parent=1 // pred_region
      %3376 = dma.done [#allocation4], 4096
    $region49: #{tpu_custom_call.1} parent=1 // pred_fallthru
      _
    %3377 = vsyncpa [#allocation3], 1
    %3378 = vsyncpa [#allocation6], 1
    %3379 = vsyncpa [#allocation9], 1
    %3380 = vsyncpa [#allocation4], 1

</llo_original>
